<compile_context>
chip_gen: v5e
topology: v5e:2x2
jax: 0.10.0
libtpu: 0.0.40
codegen_flags: <defaults>
</compile_context>

<pallas_src>
import functools

import jax
import jax.numpy as jnp
from jax import lax
from jax.experimental import pallas as pl
from jax.experimental.pallas import tpu as pltpu

HIDDEN_SIZE = 128
INPUT_SIZE = 28
NUM_CLASSES = 10
NUM_LAYERS = 2  # hard-coded as two explicit layers inside the kernel


def _choose_batch_tile(b, max_tile=128):
    """Batch tile: <=128 rows (one MXU pass), and when the (8-padded) batch is
    big enough, split into >=2 tiles so the 'parallel' batch axis can be
    sharded across both TensorCores on v7x megacore. Tiles >8 are multiples of
    16 so bf16 gate blocks stay sublane-tile aligned."""
    bp8 = ((b + 7) // 8) * 8
    if bp8 <= 16:
        return bp8                                   # single tile = full batch
    if bp8 <= 2 * max_tile:
        # two tiles: ceil(bp8 / 2) rounded up to a multiple of 16
        return min(max_tile, ((bp8 + 31) // 32) * 16)
    return max_tile


def _choose_t_chunk(t, batch_tile, hidden_size, max_chunk=128):
    """Largest time chunk whose double-buffered bf16 gates slab stays under a
    ~16 MiB VMEM budget (safe on v5e/v6e/v7x with vmem_limit_bytes=48 MiB)."""
    budget = 16 * 1024 * 1024
    per_step = 2 * batch_tile * 4 * hidden_size * 2  # 2 buffers * BT * 4H * bf16
    chunk = max(8, budget // per_step)
    return min(t, min(chunk, max_chunk))


def _lstm_kernel(gx_ref, whh0_ref, w1_ref, b1_ref,
                 out_ref,
                 hcat_ref, c0_ref, c1_ref,
                 *, hidden_size, t_chunk, batch_tile, t_total):
    H = hidden_size
    tc = pl.program_id(1)
    needs_mask = (t_total % t_chunk) != 0  # static

    # Reset recurrent state at the first time-chunk of each batch tile.
    @pl.when(tc == 0)
    def _():
        hcat_ref[...] = jnp.zeros_like(hcat_ref)   # bf16 [h0 | h1] staging
        c0_ref[...] = jnp.zeros_like(c0_ref)
        c1_ref[...] = jnp.zeros_like(c1_ref)

    # Loop-invariant loads / broadcasts hoisted out of the time loop.
    whh0 = whh0_ref[...]                                        # (H, 4H) bf16
    w1 = w1_ref[...]                                            # (2H, 4H) bf16
    b1 = jnp.broadcast_to(b1_ref[...], (batch_tile, 4 * H))     # (BT, 4H) f32

    def gate_math(g, c):
        # gate column order (i, f, o, g): one sigmoid slab + one tanh slab.
        s = jax.nn.sigmoid(g[:, :3 * H])
        g_cell = jnp.tanh(g[:, 3 * H:])
        i_g = s[:, :H]
        f_g = s[:, H:2 * H]
        o_g = s[:, 2 * H:3 * H]
        c_new = f_g * c + i_g * g_cell
        h_new = o_g * jnp.tanh(c_new)
        return h_new, c_new

    def step(t, carry):
        c0, c1 = carry
        if needs_mask:
            take = (tc * t_chunk + t) < t_total

        # layer 0: input projection precomputed outside the kernel; only the
        # recurrent matmul remains (bf16 x bf16 -> f32 accumulate).
        h0_bf = hcat_ref[:, :H]
        g0 = gx_ref[t].astype(jnp.float32) + jnp.dot(
            h0_bf, whh0, preferred_element_type=jnp.float32)
        h0n, c0n = gate_math(g0, c0)
        h0n_bf = h0n.astype(jnp.bfloat16)
        if needs_mask:
            h0n_bf = jnp.where(take, h0n_bf, h0_bf)
            c0n = jnp.where(take, c0n, c0)
        hcat_ref[:, :H] = h0n_bf

        # layer 1: single fused matmul with K = 2H = 256 fed straight from the
        # [h0 | h1] bf16 staging scratch (no per-step concat / extra casts).
        hcat = hcat_ref[...]
        g1 = jnp.dot(hcat, w1, preferred_element_type=jnp.float32) + b1
        h1n, c1n = gate_math(g1, c1)
        h1n_bf = h1n.astype(jnp.bfloat16)
        if needs_mask:
            h1n_bf = jnp.where(take, h1n_bf, hcat[:, H:])
            c1n = jnp.where(take, c1n, c1)
        hcat_ref[:, H:] = h1n_bf
        return (c0n, c1n)

    c0, c1 = lax.fori_loop(0, t_chunk, step, (c0_ref[...], c1_ref[...]),
                           unroll=min(8, t_chunk))

    # Persist cell state across time-chunks (h persists via hcat_ref).
    c0_ref[...] = c0
    c1_ref[...] = c1

    @pl.when(tc == pl.num_programs(1) - 1)
    def _():
        out_ref[...] = hcat_ref[:, H:].astype(out_ref.dtype)  # final h1


def rnn_forward(x, params, *, hidden_size=HIDDEN_SIZE, num_classes=NUM_CLASSES):
    """x: (B, T, input_size) float32. Returns (B, num_classes)."""
    (wih0, whh0, b0, wih1, whh1, b1, wfc, bfc) = params
    B, T, D = x.shape
    H = hidden_size

    # Batch tiling / padding.
    BT = _choose_batch_tile(B)
    n_bt = pl.cdiv(B, BT)
    Bp = n_bt * BT
    if Bp != B:
        x = jnp.pad(x, ((0, Bp - B), (0, 0), (0, 0)))

    # Hoist the non-recurrent layer-0 input projection out of the kernel.
    # Transpose x (only 28 lanes) *before* the matmul so the 512-lane result
    # is produced directly in (T, Bp, 4H) order — no transpose of the big
    # gates tensor. Store bf16: halves the per-timestep HBM stream.
    xt = jnp.transpose(x, (1, 0, 2))                       # (T, Bp, D)
    gates_x = (xt.reshape(T * Bp, D) @ wih0 + b0).reshape(T, Bp, 4 * H)
    gates_x = gates_x.astype(jnp.bfloat16)

    # Time chunking: grid = cdiv(T, t_chunk); pad gates along T with zeros and
    # mask the tail steps inside the kernel (handles non-divisor T).
    t_chunk = _choose_t_chunk(T, BT, H)
    n_tc = pl.cdiv(T, t_chunk)
    Tp = n_tc * t_chunk
    if Tp != T:
        gates_x = jnp.pad(gates_x, ((0, Tp - T), (0, 0), (0, 0)))

    # Fuse layer 1's input + recurrent weights into one K=2H matrix; bf16 for
    # the MXU (accumulation stays f32 inside the kernel).
    w1 = jnp.concatenate([wih1, whh1], axis=0).astype(jnp.bfloat16)  # (2H, 4H)
    whh0_bf = whh0.astype(jnp.bfloat16)                              # (H, 4H)

    kernel = functools.partial(_lstm_kernel, hidden_size=H, t_chunk=t_chunk,
                               batch_tile=BT, t_total=T)

    h_last = pl.pallas_call(
        kernel,
        out_shape=jax.ShapeDtypeStruct((Bp, H), jnp.float32),
        grid_spec=pltpu.PrefetchScalarGridSpec(
            num_scalar_prefetch=0,
            grid=(n_bt, n_tc),
            in_specs=[
                # one (t_chunk, BT, 4H) bf16 slab of precomputed layer-0 gates
                pl.BlockSpec((t_chunk, BT, 4 * H), lambda b, t: (t, b, 0)),
                pl.BlockSpec((H, 4 * H), lambda b, t: (0, 0)),       # whh0
                pl.BlockSpec((2 * H, 4 * H), lambda b, t: (0, 0)),   # fused w1
                pl.BlockSpec((1, 4 * H), lambda b, t: (0, 0)),       # b1
            ],
            out_specs=pl.BlockSpec((BT, H), lambda b, t: (b, 0)),
            scratch_shapes=[
                pltpu.VMEM((BT, 2 * H), jnp.bfloat16),  # [h0 | h1] bf16 staging
                pltpu.VMEM((BT, H), jnp.float32),       # c layer 0
                pltpu.VMEM((BT, H), jnp.float32),       # c layer 1
            ],
        ),
        compiler_params=pltpu.CompilerParams(
            dimension_semantics=("parallel", "arbitrary"),
            vmem_limit_bytes=48 * 1024 * 1024),
    )(gates_x, whh0_bf, w1, b1)

    # Tiny FC head (H -> num_classes=10, lane-sparse) done in XLA; strip the
    # batch padding.
    return h_last[:B] @ wfc + bfc


def init_params(key, input_size, hidden_size, num_classes):
    """Parameters in kernel-friendly layout: weights pre-transposed so the
    kernel does `x @ W`; b_ih + b_hh merged; gate column order (i, f, o, g)."""
    H = hidden_size
    k = 1.0 / jnp.sqrt(H)
    keys = jax.random.split(key, 10)
    u = lambda kk, shape: jax.random.uniform(kk, shape, jnp.float32, -k, k)

    # layer 0
    wih0 = u(keys[0], (input_size, 4 * H))
    whh0 = u(keys[1], (H, 4 * H))
    b0 = u(keys[2], (1, 4 * H)) + u(keys[3], (1, 4 * H))  # b_ih + b_hh
    # layer 1 (input is H)
    wih1 = u(keys[4], (H, 4 * H))
    whh1 = u(keys[5], (H, 4 * H))
    b1 = u(keys[6], (1, 4 * H)) + u(keys[7], (1, 4 * H))
    # fc head
    kf = 1.0 / jnp.sqrt(H)
    wfc = jax.random.uniform(keys[8], (H, num_classes), jnp.float32, -kf, kf)
    bfc = jax.random.uniform(keys[9], (1, num_classes), jnp.float32, -kf, kf)
    return (wih0, whh0, b0, wih1, whh1, b1, wfc, bfc)


def rnn_forward_ref(x, params, hidden_size=HIDDEN_SIZE):
    """Pure-JAX f32 reference of the same forward pass (gate order i,f,o,g)."""
    (wih0, whh0, b0, wih1, whh1, b1, wfc, bfc) = params
    B, T, D = x.shape
    H = hidden_size

    def cell(inp, h, c, wih, whh, b):
        g = inp @ wih + h @ whh + b
        i = jax.nn.sigmoid(g[:, 0 * H:1 * H])
        f = jax.nn.sigmoid(g[:, 1 * H:2 * H])
        o = jax.nn.sigmoid(g[:, 2 * H:3 * H])
        gg = jnp.tanh(g[:, 3 * H:4 * H])
        c = f * c + i * gg
        h = o * jnp.tanh(c)
        return h, c

    h0 = jnp.zeros((B, H), jnp.float32)
    c0 = jnp.zeros((B, H), jnp.float32)
    h1 = jnp.zeros((B, H), jnp.float32)
    c1 = jnp.zeros((B, H), jnp.float32)
    for t in range(T):
        h0, c0 = cell(x[:, t, :], h0, c0, wih0, whh0, b0)
        h1, c1 = cell(h0, h1, c1, wih1, whh1, b1)
    return h1 @ wfc + bfc


if __name__ == "__main__":
    key = jax.random.PRNGKey(0)
    kx, kp = jax.random.split(key)

    B, T = 2, 8  # small batch / sequence length
    x = jax.random.normal(kx, (B, T, INPUT_SIZE), jnp.float32)
    params = init_params(kp, INPUT_SIZE, HIDDEN_SIZE, NUM_CLASSES)

    out = jax.jit(rnn_forward)(x, params)
    out = jax.block_until_ready(out)

    ref = rnn_forward_ref(x, params)
    assert out.shape == (B, NUM_CLASSES)
    # tolerance loosened slightly for bf16 recurrent weights / bf16 gate stream
    assert jnp.allclose(out, ref, atol=2e-2, rtol=2e-2), "mismatch vs reference"

    print("KERNEL_OK")
</pallas_src>

<mosaic_0001>
module attributes {stable_mosaic.version = 11 : i64} {
  func.func @_lstm_kernel(%arg0: i32, %arg1: i32, %arg2: memref<8x8x512xbf16, #tpu.memory_space<vmem>>, %arg3: memref<128x512xbf16, #tpu.memory_space<vmem>>, %arg4: memref<256x512xbf16, #tpu.memory_space<vmem>>, %arg5: memref<1x512xf32, #tpu.memory_space<vmem>>, %arg6: memref<8x128xf32, #tpu.memory_space<vmem>>, %arg7: memref<8x256xbf16, #tpu.memory_space<vmem>>, %arg8: memref<8x128xf32, #tpu.memory_space<vmem>>, %arg9: memref<8x128xf32, #tpu.memory_space<vmem>>) attributes {dimension_semantics = [#tpu.dimension_semantics<parallel>, #tpu.dimension_semantics<arbitrary>], iteration_bounds = array<i64: 1, 1>, scalar_prefetch = 0 : i64, scratch_operands = 3 : i64, tpu.core_type = #tpu.core_type<tc>, window_params = [{transform_indices = @transform_0, window_bounds = array<i64: 8, 8, 512>}, {pipeline_mode = #tpu.pipeline_mode<synchronous>, transform_indices = @transform_1, window_bounds = array<i64: 128, 512>}, {pipeline_mode = #tpu.pipeline_mode<synchronous>, transform_indices = @transform_2, window_bounds = array<i64: 256, 512>}, {pipeline_mode = #tpu.pipeline_mode<synchronous>, transform_indices = @transform_3, window_bounds = array<i64: 1, 512>}, {transform_indices = @transform_4, window_bounds = array<i64: 8, 128>}]} {
    %c0_i32 = arith.constant 0 : i32
    %0 = arith.cmpi eq, %arg1, %c0_i32 : i32
    %1 = arith.extui %0 : i1 to i32
    %c0_i32_0 = arith.constant 0 : i32
    %2 = arith.cmpi ne, %1, %c0_i32_0 : i32
    scf.if %2 {
      %cst_127 = arith.constant 0.000000e+00 : bf16
      %383 = vector.broadcast %cst_127 : bf16 to vector<8x256xbf16>
      %c0_128 = arith.constant 0 : index
      %c0_129 = arith.constant 0 : index
      %384 = vector.load %arg7[%c0_128, %c0_129] : memref<8x256xbf16, #tpu.memory_space<vmem>>, vector<8x256xbf16>
      tpu.vector_store %arg7[%c0_128, %c0_129], %383 {strides = array<i32>} : memref<8x256xbf16, #tpu.memory_space<vmem>>, vector<8x256xbf16>,
      %cst_130 = arith.constant 0.000000e+00 : f32
      %385 = vector.broadcast %cst_130 : f32 to vector<8x128xf32>
      %c0_131 = arith.constant 0 : index
      %c0_132 = arith.constant 0 : index
      %386 = vector.load %arg8[%c0_131, %c0_132] : memref<8x128xf32, #tpu.memory_space<vmem>>, vector<8x128xf32>
      tpu.vector_store %arg8[%c0_131, %c0_132], %385 {strides = array<i32>} : memref<8x128xf32, #tpu.memory_space<vmem>>, vector<8x128xf32>,
      %cst_133 = arith.constant 0.000000e+00 : f32
      %387 = vector.broadcast %cst_133 : f32 to vector<8x128xf32>
      %c0_134 = arith.constant 0 : index
      %c0_135 = arith.constant 0 : index
      %388 = vector.load %arg9[%c0_134, %c0_135] : memref<8x128xf32, #tpu.memory_space<vmem>>, vector<8x128xf32>
      tpu.vector_store %arg9[%c0_134, %c0_135], %387 {strides = array<i32>} : memref<8x128xf32, #tpu.memory_space<vmem>>, vector<8x128xf32>,
    } else {
    }
    %c0 = arith.constant 0 : index
    %c0_1 = arith.constant 0 : index
    %3 = vector.load %arg3[%c0, %c0_1] : memref<128x512xbf16, #tpu.memory_space<vmem>>, vector<128x512xbf16>
    %c0_2 = arith.constant 0 : index
    %c0_3 = arith.constant 0 : index
    %4 = vector.load %arg4[%c0_2, %c0_3] : memref<256x512xbf16, #tpu.memory_space<vmem>>, vector<256x512xbf16>
    %c0_4 = arith.constant 0 : index
    %c0_5 = arith.constant 0 : index
    %5 = vector.load %arg5[%c0_4, %c0_5] : memref<1x512xf32, #tpu.memory_space<vmem>>, vector<1x512xf32>
    %6 = vector.shape_cast %5 : vector<1x512xf32> to vector<1x512xf32>
    %7 = vector.broadcast %6 : vector<1x512xf32> to vector<8x512xf32>
    %c0_6 = arith.constant 0 : index
    %c0_7 = arith.constant 0 : index
    %8 = vector.load %arg8[%c0_6, %c0_7] : memref<8x128xf32, #tpu.memory_space<vmem>>, vector<8x128xf32>
    %c0_8 = arith.constant 0 : index
    %c0_9 = arith.constant 0 : index
    %9 = vector.load %arg9[%c0_8, %c0_9] : memref<8x128xf32, #tpu.memory_space<vmem>>, vector<8x128xf32>
    %c0_i32_10 = arith.constant 0 : i32
    %c0_11 = arith.constant 0 : index
    %c0_12 = arith.constant 0 : index
    %10 = vector.load %arg7[%c0_11, %c0_12] : memref<8x256xbf16, #tpu.memory_space<vmem>>, vector<8x128xbf16>
    %11 = arith.index_cast %c0_i32_10 : i32 to index
    %c0_13 = arith.constant 0 : index
    %c0_14 = arith.constant 0 : index
    %12 = vector.load %arg2[%11, %c0_13, %c0_14] : memref<8x8x512xbf16, #tpu.memory_space<vmem>>, vector<1x8x512xbf16>
    %13 = vector.shape_cast %12 : vector<1x8x512xbf16> to vector<8x512xbf16>
    %14 = arith.extf %13 : vector<8x512xbf16> to vector<8x512xf32>
    %cst = arith.constant dense<0.000000e+00> : vector<8x512xf32>
    %15 = tpu.matmul %10, %3, %cst {dimension_numbers = #tpu.dot_dimension_numbers<[1], [0], [0], [1], [0, 0, 1, 1], [], []>} : vector<8x128xbf16>, vector<128x512xbf16>, vector<8x512xf32> -> vector<8x512xf32>
    %16 = arith.addf %14, %15 : vector<8x512xf32>
    %17 = vector.extract_strided_slice %16 {offsets = [0, 0], sizes = [8, 384], strides = [1, 1]} : vector<8x512xf32> to vector<8x384xf32>
    %18 = arith.negf %17 : vector<8x384xf32>
    %19 = math.exp %18 : vector<8x384xf32>
    %cst_15 = arith.constant 1.000000e+00 : f32
    %20 = vector.broadcast %cst_15 : f32 to vector<8x384xf32>
    %21 = arith.addf %20, %19 : vector<8x384xf32>
    %22 = arith.divf %20, %21 : vector<8x384xf32>
    %23 = vector.extract_strided_slice %16 {offsets = [0, 384], sizes = [8, 128], strides = [1, 1]} : vector<8x512xf32> to vector<8x128xf32>
    %24 = math.tanh %23 : vector<8x128xf32>
    %25 = vector.extract_strided_slice %22 {offsets = [0, 0], sizes = [8, 128], strides = [1, 1]} : vector<8x384xf32> to vector<8x128xf32>
    %26 = vector.extract_strided_slice %22 {offsets = [0, 128], sizes = [8, 128], strides = [1, 1]} : vector<8x384xf32> to vector<8x128xf32>
    %27 = vector.extract_strided_slice %22 {offsets = [0, 256], sizes = [8, 128], strides = [1, 1]} : vector<8x384xf32> to vector<8x128xf32>
    %28 = arith.mulf %26, %8 : vector<8x128xf32>
    %29 = arith.mulf %25, %24 : vector<8x128xf32>
    %30 = arith.addf %28, %29 : vector<8x128xf32>
    %31 = math.tanh %30 : vector<8x128xf32>
    %32 = arith.mulf %27, %31 : vector<8x128xf32>
    %33 = arith.truncf %32 : vector<8x128xf32> to vector<8x128xbf16>
    %c0_16 = arith.constant 0 : index
    %c0_17 = arith.constant 0 : index
    %34 = vector.load %arg7[%c0_16, %c0_17] : memref<8x256xbf16, #tpu.memory_space<vmem>>, vector<8x128xbf16>
    tpu.vector_store %arg7[%c0_16, %c0_17], %33 {strides = array<i32>} : memref<8x256xbf16, #tpu.memory_space<vmem>>, vector<8x128xbf16>,
    %c0_18 = arith.constant 0 : index
    %c0_19 = arith.constant 0 : index
    %35 = vector.load %arg7[%c0_18, %c0_19] : memref<8x256xbf16, #tpu.memory_space<vmem>>, vector<8x256xbf16>
    %cst_20 = arith.constant dense<0.000000e+00> : vector<8x512xf32>
    %36 = tpu.matmul %35, %4, %cst_20 {dimension_numbers = #tpu.dot_dimension_numbers<[1], [0], [0], [1], [0, 0, 1, 1], [], []>} : vector<8x256xbf16>, vector<256x512xbf16>, vector<8x512xf32> -> vector<8x512xf32>
    %37 = arith.addf %36, %7 : vector<8x512xf32>
    %38 = vector.extract_strided_slice %37 {offsets = [0, 0], sizes = [8, 384], strides = [1, 1]} : vector<8x512xf32> to vector<8x384xf32>
    %39 = arith.negf %38 : vector<8x384xf32>
    %40 = math.exp %39 : vector<8x384xf32>
    %cst_21 = arith.constant 1.000000e+00 : f32
    %41 = vector.broadcast %cst_21 : f32 to vector<8x384xf32>
    %42 = arith.addf %41, %40 : vector<8x384xf32>
    %43 = arith.divf %41, %42 : vector<8x384xf32>
    %44 = vector.extract_strided_slice %37 {offsets = [0, 384], sizes = [8, 128], strides = [1, 1]} : vector<8x512xf32> to vector<8x128xf32>
    %45 = math.tanh %44 : vector<8x128xf32>
    %46 = vector.extract_strided_slice %43 {offsets = [0, 0], sizes = [8, 128], strides = [1, 1]} : vector<8x384xf32> to vector<8x128xf32>
    %47 = vector.extract_strided_slice %43 {offsets = [0, 128], sizes = [8, 128], strides = [1, 1]} : vector<8x384xf32> to vector<8x128xf32>
    %48 = vector.extract_strided_slice %43 {offsets = [0, 256], sizes = [8, 128], strides = [1, 1]} : vector<8x384xf32> to vector<8x128xf32>
    %49 = arith.mulf %47, %9 : vector<8x128xf32>
    %50 = arith.mulf %46, %45 : vector<8x128xf32>
    %51 = arith.addf %49, %50 : vector<8x128xf32>
    %52 = math.tanh %51 : vector<8x128xf32>
    %53 = arith.mulf %48, %52 : vector<8x128xf32>
    %54 = arith.truncf %53 : vector<8x128xf32> to vector<8x128xbf16>
    %c0_22 = arith.constant 0 : index
    %c128 = arith.constant 128 : index
    %55 = vector.load %arg7[%c0_22, %c128] : memref<8x256xbf16, #tpu.memory_space<vmem>>, vector<8x128xbf16>
    tpu.vector_store %arg7[%c0_22, %c128], %54 {strides = array<i32>} : memref<8x256xbf16, #tpu.memory_space<vmem>>, vector<8x128xbf16>,
    %c1_i32 = arith.constant 1 : i32
    %c0_23 = arith.constant 0 : index
    %c0_24 = arith.constant 0 : index
    %56 = vector.load %arg7[%c0_23, %c0_24] : memref<8x256xbf16, #tpu.memory_space<vmem>>, vector<8x128xbf16>
    %57 = arith.index_cast %c1_i32 : i32 to index
    %c0_25 = arith.constant 0 : index
    %c0_26 = arith.constant 0 : index
    %58 = vector.load %arg2[%57, %c0_25, %c0_26] : memref<8x8x512xbf16, #tpu.memory_space<vmem>>, vector<1x8x512xbf16>
    %59 = vector.shape_cast %58 : vector<1x8x512xbf16> to vector<8x512xbf16>
    %60 = arith.extf %59 : vector<8x512xbf16> to vector<8x512xf32>
    %cst_27 = arith.constant dense<0.000000e+00> : vector<8x512xf32>
    %61 = tpu.matmul %56, %3, %cst_27 {dimension_numbers = #tpu.dot_dimension_numbers<[1], [0], [0], [1], [0, 0, 1, 1], [], []>} : vector<8x128xbf16>, vector<128x512xbf16>, vector<8x512xf32> -> vector<8x512xf32>
    %62 = arith.addf %60, %61 : vector<8x512xf32>
    %63 = vector.extract_strided_slice %62 {offsets = [0, 0], sizes = [8, 384], strides = [1, 1]} : vector<8x512xf32> to vector<8x384xf32>
    %64 = arith.negf %63 : vector<8x384xf32>
    %65 = math.exp %64 : vector<8x384xf32>
    %cst_28 = arith.constant 1.000000e+00 : f32
    %66 = vector.broadcast %cst_28 : f32 to vector<8x384xf32>
    %67 = arith.addf %66, %65 : vector<8x384xf32>
    %68 = arith.divf %66, %67 : vector<8x384xf32>
    %69 = vector.extract_strided_slice %62 {offsets = [0, 384], sizes = [8, 128], strides = [1, 1]} : vector<8x512xf32> to vector<8x128xf32>
    %70 = math.tanh %69 : vector<8x128xf32>
    %71 = vector.extract_strided_slice %68 {offsets = [0, 0], sizes = [8, 128], strides = [1, 1]} : vector<8x384xf32> to vector<8x128xf32>
    %72 = vector.extract_strided_slice %68 {offsets = [0, 128], sizes = [8, 128], strides = [1, 1]} : vector<8x384xf32> to vector<8x128xf32>
    %73 = vector.extract_strided_slice %68 {offsets = [0, 256], sizes = [8, 128], strides = [1, 1]} : vector<8x384xf32> to vector<8x128xf32>
    %74 = arith.mulf %72, %30 : vector<8x128xf32>
    %75 = arith.mulf %71, %70 : vector<8x128xf32>
    %76 = arith.addf %74, %75 : vector<8x128xf32>
    %77 = math.tanh %76 : vector<8x128xf32>
    %78 = arith.mulf %73, %77 : vector<8x128xf32>
    %79 = arith.truncf %78 : vector<8x128xf32> to vector<8x128xbf16>
    %c0_29 = arith.constant 0 : index
    %c0_30 = arith.constant 0 : index
    %80 = vector.load %arg7[%c0_29, %c0_30] : memref<8x256xbf16, #tpu.memory_space<vmem>>, vector<8x128xbf16>
    tpu.vector_store %arg7[%c0_29, %c0_30], %79 {strides = array<i32>} : memref<8x256xbf16, #tpu.memory_space<vmem>>, vector<8x128xbf16>,
    %c0_31 = arith.constant 0 : index
    %c0_32 = arith.constant 0 : index
    %81 = vector.load %arg7[%c0_31, %c0_32] : memref<8x256xbf16, #tpu.memory_space<vmem>>, vector<8x256xbf16>
    %cst_33 = arith.constant dense<0.000000e+00> : vector<8x512xf32>
    %82 = tpu.matmul %81, %4, %cst_33 {dimension_numbers = #tpu.dot_dimension_numbers<[1], [0], [0], [1], [0, 0, 1, 1], [], []>} : vector<8x256xbf16>, vector<256x512xbf16>, vector<8x512xf32> -> vector<8x512xf32>
    %83 = arith.addf %82, %7 : vector<8x512xf32>
    %84 = vector.extract_strided_slice %83 {offsets = [0, 0], sizes = [8, 384], strides = [1, 1]} : vector<8x512xf32> to vector<8x384xf32>
    %85 = arith.negf %84 : vector<8x384xf32>
    %86 = math.exp %85 : vector<8x384xf32>
    %cst_34 = arith.constant 1.000000e+00 : f32
    %87 = vector.broadcast %cst_34 : f32 to vector<8x384xf32>
    %88 = arith.addf %87, %86 : vector<8x384xf32>
    %89 = arith.divf %87, %88 : vector<8x384xf32>
    %90 = vector.extract_strided_slice %83 {offsets = [0, 384], sizes = [8, 128], strides = [1, 1]} : vector<8x512xf32> to vector<8x128xf32>
    %91 = math.tanh %90 : vector<8x128xf32>
    %92 = vector.extract_strided_slice %89 {offsets = [0, 0], sizes = [8, 128], strides = [1, 1]} : vector<8x384xf32> to vector<8x128xf32>
    %93 = vector.extract_strided_slice %89 {offsets = [0, 128], sizes = [8, 128], strides = [1, 1]} : vector<8x384xf32> to vector<8x128xf32>
    %94 = vector.extract_strided_slice %89 {offsets = [0, 256], sizes = [8, 128], strides = [1, 1]} : vector<8x384xf32> to vector<8x128xf32>
    %95 = arith.mulf %93, %51 : vector<8x128xf32>
    %96 = arith.mulf %92, %91 : vector<8x128xf32>
    %97 = arith.addf %95, %96 : vector<8x128xf32>
    %98 = math.tanh %97 : vector<8x128xf32>
    %99 = arith.mulf %94, %98 : vector<8x128xf32>
    %100 = arith.truncf %99 : vector<8x128xf32> to vector<8x128xbf16>
    %c0_35 = arith.constant 0 : index
    %c128_36 = arith.constant 128 : index
    %101 = vector.load %arg7[%c0_35, %c128_36] : memref<8x256xbf16, #tpu.memory_space<vmem>>, vector<8x128xbf16>
    tpu.vector_store %arg7[%c0_35, %c128_36], %100 {strides = array<i32>} : memref<8x256xbf16, #tpu.memory_space<vmem>>, vector<8x128xbf16>,
    %c2_i32 = arith.constant 2 : i32
    %c0_37 = arith.constant 0 : index
    %c0_38 = arith.constant 0 : index
    %102 = vector.load %arg7[%c0_37, %c0_38] : memref<8x256xbf16, #tpu.memory_space<vmem>>, vector<8x128xbf16>
    %103 = arith.index_cast %c2_i32 : i32 to index
    %c0_39 = arith.constant 0 : index
    %c0_40 = arith.constant 0 : index
    %104 = vector.load %arg2[%103, %c0_39, %c0_40] : memref<8x8x512xbf16, #tpu.memory_space<vmem>>, vector<1x8x512xbf16>
    %105 = vector.shape_cast %104 : vector<1x8x512xbf16> to vector<8x512xbf16>
    %106 = arith.extf %105 : vector<8x512xbf16> to vector<8x512xf32>
    %cst_41 = arith.constant dense<0.000000e+00> : vector<8x512xf32>
    %107 = tpu.matmul %102, %3, %cst_41 {dimension_numbers = #tpu.dot_dimension_numbers<[1], [0], [0], [1], [0, 0, 1, 1], [], []>} : vector<8x128xbf16>, vector<128x512xbf16>, vector<8x512xf32> -> vector<8x512xf32>
    %108 = arith.addf %106, %107 : vector<8x512xf32>
    %109 = vector.extract_strided_slice %108 {offsets = [0, 0], sizes = [8, 384], strides = [1, 1]} : vector<8x512xf32> to vector<8x384xf32>
    %110 = arith.negf %109 : vector<8x384xf32>
    %111 = math.exp %110 : vector<8x384xf32>
    %cst_42 = arith.constant 1.000000e+00 : f32
    %112 = vector.broadcast %cst_42 : f32 to vector<8x384xf32>
    %113 = arith.addf %112, %111 : vector<8x384xf32>
    %114 = arith.divf %112, %113 : vector<8x384xf32>
    %115 = vector.extract_strided_slice %108 {offsets = [0, 384], sizes = [8, 128], strides = [1, 1]} : vector<8x512xf32> to vector<8x128xf32>
    %116 = math.tanh %115 : vector<8x128xf32>
    %117 = vector.extract_strided_slice %114 {offsets = [0, 0], sizes = [8, 128], strides = [1, 1]} : vector<8x384xf32> to vector<8x128xf32>
    %118 = vector.extract_strided_slice %114 {offsets = [0, 128], sizes = [8, 128], strides = [1, 1]} : vector<8x384xf32> to vector<8x128xf32>
    %119 = vector.extract_strided_slice %114 {offsets = [0, 256], sizes = [8, 128], strides = [1, 1]} : vector<8x384xf32> to vector<8x128xf32>
    %120 = arith.mulf %118, %76 : vector<8x128xf32>
    %121 = arith.mulf %117, %116 : vector<8x128xf32>
    %122 = arith.addf %120, %121 : vector<8x128xf32>
    %123 = math.tanh %122 : vector<8x128xf32>
    %124 = arith.mulf %119, %123 : vector<8x128xf32>
    %125 = arith.truncf %124 : vector<8x128xf32> to vector<8x128xbf16>
    %c0_43 = arith.constant 0 : index
    %c0_44 = arith.constant 0 : index
    %126 = vector.load %arg7[%c0_43, %c0_44] : memref<8x256xbf16, #tpu.memory_space<vmem>>, vector<8x128xbf16>
    tpu.vector_store %arg7[%c0_43, %c0_44], %125 {strides = array<i32>} : memref<8x256xbf16, #tpu.memory_space<vmem>>, vector<8x128xbf16>,
    %c0_45 = arith.constant 0 : index
    %c0_46 = arith.constant 0 : index
    %127 = vector.load %arg7[%c0_45, %c0_46] : memref<8x256xbf16, #tpu.memory_space<vmem>>, vector<8x256xbf16>
    %cst_47 = arith.constant dense<0.000000e+00> : vector<8x512xf32>
    %128 = tpu.matmul %127, %4, %cst_47 {dimension_numbers = #tpu.dot_dimension_numbers<[1], [0], [0], [1], [0, 0, 1, 1], [], []>} : vector<8x256xbf16>, vector<256x512xbf16>, vector<8x512xf32> -> vector<8x512xf32>
    %129 = arith.addf %128, %7 : vector<8x512xf32>
    %130 = vector.extract_strided_slice %129 {offsets = [0, 0], sizes = [8, 384], strides = [1, 1]} : vector<8x512xf32> to vector<8x384xf32>
    %131 = arith.negf %130 : vector<8x384xf32>
    %132 = math.exp %131 : vector<8x384xf32>
    %cst_48 = arith.constant 1.000000e+00 : f32
    %133 = vector.broadcast %cst_48 : f32 to vector<8x384xf32>
    %134 = arith.addf %133, %132 : vector<8x384xf32>
    %135 = arith.divf %133, %134 : vector<8x384xf32>
    %136 = vector.extract_strided_slice %129 {offsets = [0, 384], sizes = [8, 128], strides = [1, 1]} : vector<8x512xf32> to vector<8x128xf32>
    %137 = math.tanh %136 : vector<8x128xf32>
    %138 = vector.extract_strided_slice %135 {offsets = [0, 0], sizes = [8, 128], strides = [1, 1]} : vector<8x384xf32> to vector<8x128xf32>
    %139 = vector.extract_strided_slice %135 {offsets = [0, 128], sizes = [8, 128], strides = [1, 1]} : vector<8x384xf32> to vector<8x128xf32>
    %140 = vector.extract_strided_slice %135 {offsets = [0, 256], sizes = [8, 128], strides = [1, 1]} : vector<8x384xf32> to vector<8x128xf32>
    %141 = arith.mulf %139, %97 : vector<8x128xf32>
    %142 = arith.mulf %138, %137 : vector<8x128xf32>
    %143 = arith.addf %141, %142 : vector<8x128xf32>
    %144 = math.tanh %143 : vector<8x128xf32>
    %145 = arith.mulf %140, %144 : vector<8x128xf32>
    %146 = arith.truncf %145 : vector<8x128xf32> to vector<8x128xbf16>
    %c0_49 = arith.constant 0 : index
    %c128_50 = arith.constant 128 : index
    %147 = vector.load %arg7[%c0_49, %c128_50] : memref<8x256xbf16, #tpu.memory_space<vmem>>, vector<8x128xbf16>
    tpu.vector_store %arg7[%c0_49, %c128_50], %146 {strides = array<i32>} : memref<8x256xbf16, #tpu.memory_space<vmem>>, vector<8x128xbf16>,
    %c3_i32 = arith.constant 3 : i32
    %c0_51 = arith.constant 0 : index
    %c0_52 = arith.constant 0 : index
    %148 = vector.load %arg7[%c0_51, %c0_52] : memref<8x256xbf16, #tpu.memory_space<vmem>>, vector<8x128xbf16>
    %149 = arith.index_cast %c3_i32 : i32 to index
    %c0_53 = arith.constant 0 : index
    %c0_54 = arith.constant 0 : index
    %150 = vector.load %arg2[%149, %c0_53, %c0_54] : memref<8x8x512xbf16, #tpu.memory_space<vmem>>, vector<1x8x512xbf16>
    %151 = vector.shape_cast %150 : vector<1x8x512xbf16> to vector<8x512xbf16>
    %152 = arith.extf %151 : vector<8x512xbf16> to vector<8x512xf32>
    %cst_55 = arith.constant dense<0.000000e+00> : vector<8x512xf32>
    %153 = tpu.matmul %148, %3, %cst_55 {dimension_numbers = #tpu.dot_dimension_numbers<[1], [0], [0], [1], [0, 0, 1, 1], [], []>} : vector<8x128xbf16>, vector<128x512xbf16>, vector<8x512xf32> -> vector<8x512xf32>
    %154 = arith.addf %152, %153 : vector<8x512xf32>
    %155 = vector.extract_strided_slice %154 {offsets = [0, 0], sizes = [8, 384], strides = [1, 1]} : vector<8x512xf32> to vector<8x384xf32>
    %156 = arith.negf %155 : vector<8x384xf32>
    %157 = math.exp %156 : vector<8x384xf32>
    %cst_56 = arith.constant 1.000000e+00 : f32
    %158 = vector.broadcast %cst_56 : f32 to vector<8x384xf32>
    %159 = arith.addf %158, %157 : vector<8x384xf32>
    %160 = arith.divf %158, %159 : vector<8x384xf32>
    %161 = vector.extract_strided_slice %154 {offsets = [0, 384], sizes = [8, 128], strides = [1, 1]} : vector<8x512xf32> to vector<8x128xf32>
    %162 = math.tanh %161 : vector<8x128xf32>
    %163 = vector.extract_strided_slice %160 {offsets = [0, 0], sizes = [8, 128], strides = [1, 1]} : vector<8x384xf32> to vector<8x128xf32>
    %164 = vector.extract_strided_slice %160 {offsets = [0, 128], sizes = [8, 128], strides = [1, 1]} : vector<8x384xf32> to vector<8x128xf32>
    %165 = vector.extract_strided_slice %160 {offsets = [0, 256], sizes = [8, 128], strides = [1, 1]} : vector<8x384xf32> to vector<8x128xf32>
    %166 = arith.mulf %164, %122 : vector<8x128xf32>
    %167 = arith.mulf %163, %162 : vector<8x128xf32>
    %168 = arith.addf %166, %167 : vector<8x128xf32>
    %169 = math.tanh %168 : vector<8x128xf32>
    %170 = arith.mulf %165, %169 : vector<8x128xf32>
    %171 = arith.truncf %170 : vector<8x128xf32> to vector<8x128xbf16>
    %c0_57 = arith.constant 0 : index
    %c0_58 = arith.constant 0 : index
    %172 = vector.load %arg7[%c0_57, %c0_58] : memref<8x256xbf16, #tpu.memory_space<vmem>>, vector<8x128xbf16>
    tpu.vector_store %arg7[%c0_57, %c0_58], %171 {strides = array<i32>} : memref<8x256xbf16, #tpu.memory_space<vmem>>, vector<8x128xbf16>,
    %c0_59 = arith.constant 0 : index
    %c0_60 = arith.constant 0 : index
    %173 = vector.load %arg7[%c0_59, %c0_60] : memref<8x256xbf16, #tpu.memory_space<vmem>>, vector<8x256xbf16>
    %cst_61 = arith.constant dense<0.000000e+00> : vector<8x512xf32>
    %174 = tpu.matmul %173, %4, %cst_61 {dimension_numbers = #tpu.dot_dimension_numbers<[1], [0], [0], [1], [0, 0, 1, 1], [], []>} : vector<8x256xbf16>, vector<256x512xbf16>, vector<8x512xf32> -> vector<8x512xf32>
    %175 = arith.addf %174, %7 : vector<8x512xf32>
    %176 = vector.extract_strided_slice %175 {offsets = [0, 0], sizes = [8, 384], strides = [1, 1]} : vector<8x512xf32> to vector<8x384xf32>
    %177 = arith.negf %176 : vector<8x384xf32>
    %178 = math.exp %177 : vector<8x384xf32>
    %cst_62 = arith.constant 1.000000e+00 : f32
    %179 = vector.broadcast %cst_62 : f32 to vector<8x384xf32>
    %180 = arith.addf %179, %178 : vector<8x384xf32>
    %181 = arith.divf %179, %180 : vector<8x384xf32>
    %182 = vector.extract_strided_slice %175 {offsets = [0, 384], sizes = [8, 128], strides = [1, 1]} : vector<8x512xf32> to vector<8x128xf32>
    %183 = math.tanh %182 : vector<8x128xf32>
    %184 = vector.extract_strided_slice %181 {offsets = [0, 0], sizes = [8, 128], strides = [1, 1]} : vector<8x384xf32> to vector<8x128xf32>
    %185 = vector.extract_strided_slice %181 {offsets = [0, 128], sizes = [8, 128], strides = [1, 1]} : vector<8x384xf32> to vector<8x128xf32>
    %186 = vector.extract_strided_slice %181 {offsets = [0, 256], sizes = [8, 128], strides = [1, 1]} : vector<8x384xf32> to vector<8x128xf32>
    %187 = arith.mulf %185, %143 : vector<8x128xf32>
    %188 = arith.mulf %184, %183 : vector<8x128xf32>
    %189 = arith.addf %187, %188 : vector<8x128xf32>
    %190 = math.tanh %189 : vector<8x128xf32>
    %191 = arith.mulf %186, %190 : vector<8x128xf32>
    %192 = arith.truncf %191 : vector<8x128xf32> to vector<8x128xbf16>
    %c0_63 = arith.constant 0 : index
    %c128_64 = arith.constant 128 : index
    %193 = vector.load %arg7[%c0_63, %c128_64] : memref<8x256xbf16, #tpu.memory_space<vmem>>, vector<8x128xbf16>
    tpu.vector_store %arg7[%c0_63, %c128_64], %192 {strides = array<i32>} : memref<8x256xbf16, #tpu.memory_space<vmem>>, vector<8x128xbf16>,
    %c4_i32 = arith.constant 4 : i32
    %c0_65 = arith.constant 0 : index
    %c0_66 = arith.constant 0 : index
    %194 = vector.load %arg7[%c0_65, %c0_66] : memref<8x256xbf16, #tpu.memory_space<vmem>>, vector<8x128xbf16>
    %195 = arith.index_cast %c4_i32 : i32 to index
    %c0_67 = arith.constant 0 : index
    %c0_68 = arith.constant 0 : index
    %196 = vector.load %arg2[%195, %c0_67, %c0_68] : memref<8x8x512xbf16, #tpu.memory_space<vmem>>, vector<1x8x512xbf16>
    %197 = vector.shape_cast %196 : vector<1x8x512xbf16> to vector<8x512xbf16>
    %198 = arith.extf %197 : vector<8x512xbf16> to vector<8x512xf32>
    %cst_69 = arith.constant dense<0.000000e+00> : vector<8x512xf32>
    %199 = tpu.matmul %194, %3, %cst_69 {dimension_numbers = #tpu.dot_dimension_numbers<[1], [0], [0], [1], [0, 0, 1, 1], [], []>} : vector<8x128xbf16>, vector<128x512xbf16>, vector<8x512xf32> -> vector<8x512xf32>
    %200 = arith.addf %198, %199 : vector<8x512xf32>
    %201 = vector.extract_strided_slice %200 {offsets = [0, 0], sizes = [8, 384], strides = [1, 1]} : vector<8x512xf32> to vector<8x384xf32>
    %202 = arith.negf %201 : vector<8x384xf32>
    %203 = math.exp %202 : vector<8x384xf32>
    %cst_70 = arith.constant 1.000000e+00 : f32
    %204 = vector.broadcast %cst_70 : f32 to vector<8x384xf32>
    %205 = arith.addf %204, %203 : vector<8x384xf32>
    %206 = arith.divf %204, %205 : vector<8x384xf32>
    %207 = vector.extract_strided_slice %200 {offsets = [0, 384], sizes = [8, 128], strides = [1, 1]} : vector<8x512xf32> to vector<8x128xf32>
    %208 = math.tanh %207 : vector<8x128xf32>
    %209 = vector.extract_strided_slice %206 {offsets = [0, 0], sizes = [8, 128], strides = [1, 1]} : vector<8x384xf32> to vector<8x128xf32>
    %210 = vector.extract_strided_slice %206 {offsets = [0, 128], sizes = [8, 128], strides = [1, 1]} : vector<8x384xf32> to vector<8x128xf32>
    %211 = vector.extract_strided_slice %206 {offsets = [0, 256], sizes = [8, 128], strides = [1, 1]} : vector<8x384xf32> to vector<8x128xf32>
    %212 = arith.mulf %210, %168 : vector<8x128xf32>
    %213 = arith.mulf %209, %208 : vector<8x128xf32>
    %214 = arith.addf %212, %213 : vector<8x128xf32>
    %215 = math.tanh %214 : vector<8x128xf32>
    %216 = arith.mulf %211, %215 : vector<8x128xf32>
    %217 = arith.truncf %216 : vector<8x128xf32> to vector<8x128xbf16>
    %c0_71 = arith.constant 0 : index
    %c0_72 = arith.constant 0 : index
    %218 = vector.load %arg7[%c0_71, %c0_72] : memref<8x256xbf16, #tpu.memory_space<vmem>>, vector<8x128xbf16>
    tpu.vector_store %arg7[%c0_71, %c0_72], %217 {strides = array<i32>} : memref<8x256xbf16, #tpu.memory_space<vmem>>, vector<8x128xbf16>,
    %c0_73 = arith.constant 0 : index
    %c0_74 = arith.constant 0 : index
    %219 = vector.load %arg7[%c0_73, %c0_74] : memref<8x256xbf16, #tpu.memory_space<vmem>>, vector<8x256xbf16>
    %cst_75 = arith.constant dense<0.000000e+00> : vector<8x512xf32>
    %220 = tpu.matmul %219, %4, %cst_75 {dimension_numbers = #tpu.dot_dimension_numbers<[1], [0], [0], [1], [0, 0, 1, 1], [], []>} : vector<8x256xbf16>, vector<256x512xbf16>, vector<8x512xf32> -> vector<8x512xf32>
    %221 = arith.addf %220, %7 : vector<8x512xf32>
    %222 = vector.extract_strided_slice %221 {offsets = [0, 0], sizes = [8, 384], strides = [1, 1]} : vector<8x512xf32> to vector<8x384xf32>
    %223 = arith.negf %222 : vector<8x384xf32>
    %224 = math.exp %223 : vector<8x384xf32>
    %cst_76 = arith.constant 1.000000e+00 : f32
    %225 = vector.broadcast %cst_76 : f32 to vector<8x384xf32>
    %226 = arith.addf %225, %224 : vector<8x384xf32>
    %227 = arith.divf %225, %226 : vector<8x384xf32>
    %228 = vector.extract_strided_slice %221 {offsets = [0, 384], sizes = [8, 128], strides = [1, 1]} : vector<8x512xf32> to vector<8x128xf32>
    %229 = math.tanh %228 : vector<8x128xf32>
    %230 = vector.extract_strided_slice %227 {offsets = [0, 0], sizes = [8, 128], strides = [1, 1]} : vector<8x384xf32> to vector<8x128xf32>
    %231 = vector.extract_strided_slice %227 {offsets = [0, 128], sizes = [8, 128], strides = [1, 1]} : vector<8x384xf32> to vector<8x128xf32>
    %232 = vector.extract_strided_slice %227 {offsets = [0, 256], sizes = [8, 128], strides = [1, 1]} : vector<8x384xf32> to vector<8x128xf32>
    %233 = arith.mulf %231, %189 : vector<8x128xf32>
    %234 = arith.mulf %230, %229 : vector<8x128xf32>
    %235 = arith.addf %233, %234 : vector<8x128xf32>
    %236 = math.tanh %235 : vector<8x128xf32>
    %237 = arith.mulf %232, %236 : vector<8x128xf32>
    %238 = arith.truncf %237 : vector<8x128xf32> to vector<8x128xbf16>
    %c0_77 = arith.constant 0 : index
    %c128_78 = arith.constant 128 : index
    %239 = vector.load %arg7[%c0_77, %c128_78] : memref<8x256xbf16, #tpu.memory_space<vmem>>, vector<8x128xbf16>
    tpu.vector_store %arg7[%c0_77, %c128_78], %238 {strides = array<i32>} : memref<8x256xbf16, #tpu.memory_space<vmem>>, vector<8x128xbf16>,
    %c5_i32 = arith.constant 5 : i32
    %c0_79 = arith.constant 0 : index
    %c0_80 = arith.constant 0 : index
    %240 = vector.load %arg7[%c0_79, %c0_80] : memref<8x256xbf16, #tpu.memory_space<vmem>>, vector<8x128xbf16>
    %241 = arith.index_cast %c5_i32 : i32 to index
    %c0_81 = arith.constant 0 : index
    %c0_82 = arith.constant 0 : index
    %242 = vector.load %arg2[%241, %c0_81, %c0_82] : memref<8x8x512xbf16, #tpu.memory_space<vmem>>, vector<1x8x512xbf16>
    %243 = vector.shape_cast %242 : vector<1x8x512xbf16> to vector<8x512xbf16>
    %244 = arith.extf %243 : vector<8x512xbf16> to vector<8x512xf32>
    %cst_83 = arith.constant dense<0.000000e+00> : vector<8x512xf32>
    %245 = tpu.matmul %240, %3, %cst_83 {dimension_numbers = #tpu.dot_dimension_numbers<[1], [0], [0], [1], [0, 0, 1, 1], [], []>} : vector<8x128xbf16>, vector<128x512xbf16>, vector<8x512xf32> -> vector<8x512xf32>
    %246 = arith.addf %244, %245 : vector<8x512xf32>
    %247 = vector.extract_strided_slice %246 {offsets = [0, 0], sizes = [8, 384], strides = [1, 1]} : vector<8x512xf32> to vector<8x384xf32>
    %248 = arith.negf %247 : vector<8x384xf32>
    %249 = math.exp %248 : vector<8x384xf32>
    %cst_84 = arith.constant 1.000000e+00 : f32
    %250 = vector.broadcast %cst_84 : f32 to vector<8x384xf32>
    %251 = arith.addf %250, %249 : vector<8x384xf32>
    %252 = arith.divf %250, %251 : vector<8x384xf32>
    %253 = vector.extract_strided_slice %246 {offsets = [0, 384], sizes = [8, 128], strides = [1, 1]} : vector<8x512xf32> to vector<8x128xf32>
    %254 = math.tanh %253 : vector<8x128xf32>
    %255 = vector.extract_strided_slice %252 {offsets = [0, 0], sizes = [8, 128], strides = [1, 1]} : vector<8x384xf32> to vector<8x128xf32>
    %256 = vector.extract_strided_slice %252 {offsets = [0, 128], sizes = [8, 128], strides = [1, 1]} : vector<8x384xf32> to vector<8x128xf32>
    %257 = vector.extract_strided_slice %252 {offsets = [0, 256], sizes = [8, 128], strides = [1, 1]} : vector<8x384xf32> to vector<8x128xf32>
    %258 = arith.mulf %256, %214 : vector<8x128xf32>
    %259 = arith.mulf %255, %254 : vector<8x128xf32>
    %260 = arith.addf %258, %259 : vector<8x128xf32>
    %261 = math.tanh %260 : vector<8x128xf32>
    %262 = arith.mulf %257, %261 : vector<8x128xf32>
    %263 = arith.truncf %262 : vector<8x128xf32> to vector<8x128xbf16>
    %c0_85 = arith.constant 0 : index
    %c0_86 = arith.constant 0 : index
    %264 = vector.load %arg7[%c0_85, %c0_86] : memref<8x256xbf16, #tpu.memory_space<vmem>>, vector<8x128xbf16>
    tpu.vector_store %arg7[%c0_85, %c0_86], %263 {strides = array<i32>} : memref<8x256xbf16, #tpu.memory_space<vmem>>, vector<8x128xbf16>,
    %c0_87 = arith.constant 0 : index
    %c0_88 = arith.constant 0 : index
    %265 = vector.load %arg7[%c0_87, %c0_88] : memref<8x256xbf16, #tpu.memory_space<vmem>>, vector<8x256xbf16>
    %cst_89 = arith.constant dense<0.000000e+00> : vector<8x512xf32>
    %266 = tpu.matmul %265, %4, %cst_89 {dimension_numbers = #tpu.dot_dimension_numbers<[1], [0], [0], [1], [0, 0, 1, 1], [], []>} : vector<8x256xbf16>, vector<256x512xbf16>, vector<8x512xf32> -> vector<8x512xf32>
    %267 = arith.addf %266, %7 : vector<8x512xf32>
    %268 = vector.extract_strided_slice %267 {offsets = [0, 0], sizes = [8, 384], strides = [1, 1]} : vector<8x512xf32> to vector<8x384xf32>
    %269 = arith.negf %268 : vector<8x384xf32>
    %270 = math.exp %269 : vector<8x384xf32>
    %cst_90 = arith.constant 1.000000e+00 : f32
    %271 = vector.broadcast %cst_90 : f32 to vector<8x384xf32>
    %272 = arith.addf %271, %270 : vector<8x384xf32>
    %273 = arith.divf %271, %272 : vector<8x384xf32>
    %274 = vector.extract_strided_slice %267 {offsets = [0, 384], sizes = [8, 128], strides = [1, 1]} : vector<8x512xf32> to vector<8x128xf32>
    %275 = math.tanh %274 : vector<8x128xf32>
    %276 = vector.extract_strided_slice %273 {offsets = [0, 0], sizes = [8, 128], strides = [1, 1]} : vector<8x384xf32> to vector<8x128xf32>
    %277 = vector.extract_strided_slice %273 {offsets = [0, 128], sizes = [8, 128], strides = [1, 1]} : vector<8x384xf32> to vector<8x128xf32>
    %278 = vector.extract_strided_slice %273 {offsets = [0, 256], sizes = [8, 128], strides = [1, 1]} : vector<8x384xf32> to vector<8x128xf32>
    %279 = arith.mulf %277, %235 : vector<8x128xf32>
    %280 = arith.mulf %276, %275 : vector<8x128xf32>
    %281 = arith.addf %279, %280 : vector<8x128xf32>
    %282 = math.tanh %281 : vector<8x128xf32>
    %283 = arith.mulf %278, %282 : vector<8x128xf32>
    %284 = arith.truncf %283 : vector<8x128xf32> to vector<8x128xbf16>
    %c0_91 = arith.constant 0 : index
    %c128_92 = arith.constant 128 : index
    %285 = vector.load %arg7[%c0_91, %c128_92] : memref<8x256xbf16, #tpu.memory_space<vmem>>, vector<8x128xbf16>
    tpu.vector_store %arg7[%c0_91, %c128_92], %284 {strides = array<i32>} : memref<8x256xbf16, #tpu.memory_space<vmem>>, vector<8x128xbf16>,
    %c6_i32 = arith.constant 6 : i32
    %c0_93 = arith.constant 0 : index
    %c0_94 = arith.constant 0 : index
    %286 = vector.load %arg7[%c0_93, %c0_94] : memref<8x256xbf16, #tpu.memory_space<vmem>>, vector<8x128xbf16>
    %287 = arith.index_cast %c6_i32 : i32 to index
    %c0_95 = arith.constant 0 : index
    %c0_96 = arith.constant 0 : index
    %288 = vector.load %arg2[%287, %c0_95, %c0_96] : memref<8x8x512xbf16, #tpu.memory_space<vmem>>, vector<1x8x512xbf16>
    %289 = vector.shape_cast %288 : vector<1x8x512xbf16> to vector<8x512xbf16>
    %290 = arith.extf %289 : vector<8x512xbf16> to vector<8x512xf32>
    %cst_97 = arith.constant dense<0.000000e+00> : vector<8x512xf32>
    %291 = tpu.matmul %286, %3, %cst_97 {dimension_numbers = #tpu.dot_dimension_numbers<[1], [0], [0], [1], [0, 0, 1, 1], [], []>} : vector<8x128xbf16>, vector<128x512xbf16>, vector<8x512xf32> -> vector<8x512xf32>
    %292 = arith.addf %290, %291 : vector<8x512xf32>
    %293 = vector.extract_strided_slice %292 {offsets = [0, 0], sizes = [8, 384], strides = [1, 1]} : vector<8x512xf32> to vector<8x384xf32>
    %294 = arith.negf %293 : vector<8x384xf32>
    %295 = math.exp %294 : vector<8x384xf32>
    %cst_98 = arith.constant 1.000000e+00 : f32
    %296 = vector.broadcast %cst_98 : f32 to vector<8x384xf32>
    %297 = arith.addf %296, %295 : vector<8x384xf32>
    %298 = arith.divf %296, %297 : vector<8x384xf32>
    %299 = vector.extract_strided_slice %292 {offsets = [0, 384], sizes = [8, 128], strides = [1, 1]} : vector<8x512xf32> to vector<8x128xf32>
    %300 = math.tanh %299 : vector<8x128xf32>
    %301 = vector.extract_strided_slice %298 {offsets = [0, 0], sizes = [8, 128], strides = [1, 1]} : vector<8x384xf32> to vector<8x128xf32>
    %302 = vector.extract_strided_slice %298 {offsets = [0, 128], sizes = [8, 128], strides = [1, 1]} : vector<8x384xf32> to vector<8x128xf32>
    %303 = vector.extract_strided_slice %298 {offsets = [0, 256], sizes = [8, 128], strides = [1, 1]} : vector<8x384xf32> to vector<8x128xf32>
    %304 = arith.mulf %302, %260 : vector<8x128xf32>
    %305 = arith.mulf %301, %300 : vector<8x128xf32>
    %306 = arith.addf %304, %305 : vector<8x128xf32>
    %307 = math.tanh %306 : vector<8x128xf32>
    %308 = arith.mulf %303, %307 : vector<8x128xf32>
    %309 = arith.truncf %308 : vector<8x128xf32> to vector<8x128xbf16>
    %c0_99 = arith.constant 0 : index
    %c0_100 = arith.constant 0 : index
    %310 = vector.load %arg7[%c0_99, %c0_100] : memref<8x256xbf16, #tpu.memory_space<vmem>>, vector<8x128xbf16>
    tpu.vector_store %arg7[%c0_99, %c0_100], %309 {strides = array<i32>} : memref<8x256xbf16, #tpu.memory_space<vmem>>, vector<8x128xbf16>,
    %c0_101 = arith.constant 0 : index
    %c0_102 = arith.constant 0 : index
    %311 = vector.load %arg7[%c0_101, %c0_102] : memref<8x256xbf16, #tpu.memory_space<vmem>>, vector<8x256xbf16>
    %cst_103 = arith.constant dense<0.000000e+00> : vector<8x512xf32>
    %312 = tpu.matmul %311, %4, %cst_103 {dimension_numbers = #tpu.dot_dimension_numbers<[1], [0], [0], [1], [0, 0, 1, 1], [], []>} : vector<8x256xbf16>, vector<256x512xbf16>, vector<8x512xf32> -> vector<8x512xf32>
    %313 = arith.addf %312, %7 : vector<8x512xf32>
    %314 = vector.extract_strided_slice %313 {offsets = [0, 0], sizes = [8, 384], strides = [1, 1]} : vector<8x512xf32> to vector<8x384xf32>
    %315 = arith.negf %314 : vector<8x384xf32>
    %316 = math.exp %315 : vector<8x384xf32>
    %cst_104 = arith.constant 1.000000e+00 : f32
    %317 = vector.broadcast %cst_104 : f32 to vector<8x384xf32>
    %318 = arith.addf %317, %316 : vector<8x384xf32>
    %319 = arith.divf %317, %318 : vector<8x384xf32>
    %320 = vector.extract_strided_slice %313 {offsets = [0, 384], sizes = [8, 128], strides = [1, 1]} : vector<8x512xf32> to vector<8x128xf32>
    %321 = math.tanh %320 : vector<8x128xf32>
    %322 = vector.extract_strided_slice %319 {offsets = [0, 0], sizes = [8, 128], strides = [1, 1]} : vector<8x384xf32> to vector<8x128xf32>
    %323 = vector.extract_strided_slice %319 {offsets = [0, 128], sizes = [8, 128], strides = [1, 1]} : vector<8x384xf32> to vector<8x128xf32>
    %324 = vector.extract_strided_slice %319 {offsets = [0, 256], sizes = [8, 128], strides = [1, 1]} : vector<8x384xf32> to vector<8x128xf32>
    %325 = arith.mulf %323, %281 : vector<8x128xf32>
    %326 = arith.mulf %322, %321 : vector<8x128xf32>
    %327 = arith.addf %325, %326 : vector<8x128xf32>
    %328 = math.tanh %327 : vector<8x128xf32>
    %329 = arith.mulf %324, %328 : vector<8x128xf32>
    %330 = arith.truncf %329 : vector<8x128xf32> to vector<8x128xbf16>
    %c0_105 = arith.constant 0 : index
    %c128_106 = arith.constant 128 : index
    %331 = vector.load %arg7[%c0_105, %c128_106] : memref<8x256xbf16, #tpu.memory_space<vmem>>, vector<8x128xbf16>
    tpu.vector_store %arg7[%c0_105, %c128_106], %330 {strides = array<i32>} : memref<8x256xbf16, #tpu.memory_space<vmem>>, vector<8x128xbf16>,
    %c7_i32 = arith.constant 7 : i32
    %c0_107 = arith.constant 0 : index
    %c0_108 = arith.constant 0 : index
    %332 = vector.load %arg7[%c0_107, %c0_108] : memref<8x256xbf16, #tpu.memory_space<vmem>>, vector<8x128xbf16>
    %333 = arith.index_cast %c7_i32 : i32 to index
    %c0_109 = arith.constant 0 : index
    %c0_110 = arith.constant 0 : index
    %334 = vector.load %arg2[%333, %c0_109, %c0_110] : memref<8x8x512xbf16, #tpu.memory_space<vmem>>, vector<1x8x512xbf16>
    %335 = vector.shape_cast %334 : vector<1x8x512xbf16> to vector<8x512xbf16>
    %336 = arith.extf %335 : vector<8x512xbf16> to vector<8x512xf32>
    %cst_111 = arith.constant dense<0.000000e+00> : vector<8x512xf32>
    %337 = tpu.matmul %332, %3, %cst_111 {dimension_numbers = #tpu.dot_dimension_numbers<[1], [0], [0], [1], [0, 0, 1, 1], [], []>} : vector<8x128xbf16>, vector<128x512xbf16>, vector<8x512xf32> -> vector<8x512xf32>
    %338 = arith.addf %336, %337 : vector<8x512xf32>
    %339 = vector.extract_strided_slice %338 {offsets = [0, 0], sizes = [8, 384], strides = [1, 1]} : vector<8x512xf32> to vector<8x384xf32>
    %340 = arith.negf %339 : vector<8x384xf32>
    %341 = math.exp %340 : vector<8x384xf32>
    %cst_112 = arith.constant 1.000000e+00 : f32
    %342 = vector.broadcast %cst_112 : f32 to vector<8x384xf32>
    %343 = arith.addf %342, %341 : vector<8x384xf32>
    %344 = arith.divf %342, %343 : vector<8x384xf32>
    %345 = vector.extract_strided_slice %338 {offsets = [0, 384], sizes = [8, 128], strides = [1, 1]} : vector<8x512xf32> to vector<8x128xf32>
    %346 = math.tanh %345 : vector<8x128xf32>
    %347 = vector.extract_strided_slice %344 {offsets = [0, 0], sizes = [8, 128], strides = [1, 1]} : vector<8x384xf32> to vector<8x128xf32>
    %348 = vector.extract_strided_slice %344 {offsets = [0, 128], sizes = [8, 128], strides = [1, 1]} : vector<8x384xf32> to vector<8x128xf32>
    %349 = vector.extract_strided_slice %344 {offsets = [0, 256], sizes = [8, 128], strides = [1, 1]} : vector<8x384xf32> to vector<8x128xf32>
    %350 = arith.mulf %348, %306 : vector<8x128xf32>
    %351 = arith.mulf %347, %346 : vector<8x128xf32>
    %352 = arith.addf %350, %351 : vector<8x128xf32>
    %353 = math.tanh %352 : vector<8x128xf32>
    %354 = arith.mulf %349, %353 : vector<8x128xf32>
    %355 = arith.truncf %354 : vector<8x128xf32> to vector<8x128xbf16>
    %c0_113 = arith.constant 0 : index
    %c0_114 = arith.constant 0 : index
    %356 = vector.load %arg7[%c0_113, %c0_114] : memref<8x256xbf16, #tpu.memory_space<vmem>>, vector<8x128xbf16>
    tpu.vector_store %arg7[%c0_113, %c0_114], %355 {strides = array<i32>} : memref<8x256xbf16, #tpu.memory_space<vmem>>, vector<8x128xbf16>,
    %c0_115 = arith.constant 0 : index
    %c0_116 = arith.constant 0 : index
    %357 = vector.load %arg7[%c0_115, %c0_116] : memref<8x256xbf16, #tpu.memory_space<vmem>>, vector<8x256xbf16>
    %cst_117 = arith.constant dense<0.000000e+00> : vector<8x512xf32>
    %358 = tpu.matmul %357, %4, %cst_117 {dimension_numbers = #tpu.dot_dimension_numbers<[1], [0], [0], [1], [0, 0, 1, 1], [], []>} : vector<8x256xbf16>, vector<256x512xbf16>, vector<8x512xf32> -> vector<8x512xf32>
    %359 = arith.addf %358, %7 : vector<8x512xf32>
    %360 = vector.extract_strided_slice %359 {offsets = [0, 0], sizes = [8, 384], strides = [1, 1]} : vector<8x512xf32> to vector<8x384xf32>
    %361 = arith.negf %360 : vector<8x384xf32>
    %362 = math.exp %361 : vector<8x384xf32>
    %cst_118 = arith.constant 1.000000e+00 : f32
    %363 = vector.broadcast %cst_118 : f32 to vector<8x384xf32>
    %364 = arith.addf %363, %362 : vector<8x384xf32>
    %365 = arith.divf %363, %364 : vector<8x384xf32>
    %366 = vector.extract_strided_slice %359 {offsets = [0, 384], sizes = [8, 128], strides = [1, 1]} : vector<8x512xf32> to vector<8x128xf32>
    %367 = math.tanh %366 : vector<8x128xf32>
    %368 = vector.extract_strided_slice %365 {offsets = [0, 0], sizes = [8, 128], strides = [1, 1]} : vector<8x384xf32> to vector<8x128xf32>
    %369 = vector.extract_strided_slice %365 {offsets = [0, 128], sizes = [8, 128], strides = [1, 1]} : vector<8x384xf32> to vector<8x128xf32>
    %370 = vector.extract_strided_slice %365 {offsets = [0, 256], sizes = [8, 128], strides = [1, 1]} : vector<8x384xf32> to vector<8x128xf32>
    %371 = arith.mulf %369, %327 : vector<8x128xf32>
    %372 = arith.mulf %368, %367 : vector<8x128xf32>
    %373 = arith.addf %371, %372 : vector<8x128xf32>
    %374 = math.tanh %373 : vector<8x128xf32>
    %375 = arith.mulf %370, %374 : vector<8x128xf32>
    %376 = arith.truncf %375 : vector<8x128xf32> to vector<8x128xbf16>
    %c0_119 = arith.constant 0 : index
    %c128_120 = arith.constant 128 : index
    %377 = vector.load %arg7[%c0_119, %c128_120] : memref<8x256xbf16, #tpu.memory_space<vmem>>, vector<8x128xbf16>
    tpu.vector_store %arg7[%c0_119, %c128_120], %376 {strides = array<i32>} : memref<8x256xbf16, #tpu.memory_space<vmem>>, vector<8x128xbf16>,
    %c8_i32 = arith.constant 8 : i32
    %c0_121 = arith.constant 0 : index
    %c0_122 = arith.constant 0 : index
    %378 = vector.load %arg8[%c0_121, %c0_122] : memref<8x128xf32, #tpu.memory_space<vmem>>, vector<8x128xf32>
    tpu.vector_store %arg8[%c0_121, %c0_122], %352 {strides = array<i32>} : memref<8x128xf32, #tpu.memory_space<vmem>>, vector<8x128xf32>,
    %c0_123 = arith.constant 0 : index
    %c0_124 = arith.constant 0 : index
    %379 = vector.load %arg9[%c0_123, %c0_124] : memref<8x128xf32, #tpu.memory_space<vmem>>, vector<8x128xf32>
    tpu.vector_store %arg9[%c0_123, %c0_124], %373 {strides = array<i32>} : memref<8x128xf32, #tpu.memory_space<vmem>>, vector<8x128xf32>,
    %c0_i32_125 = arith.constant 0 : i32
    %380 = arith.cmpi eq, %arg1, %c0_i32_125 : i32
    %381 = arith.extui %380 : i1 to i32
    %c0_i32_126 = arith.constant 0 : i32
    %382 = arith.cmpi ne, %381, %c0_i32_126 : i32
    scf.if %382 {
      %c0_127 = arith.constant 0 : index
      %c128_128 = arith.constant 128 : index
      %383 = vector.load %arg7[%c0_127, %c128_128] : memref<8x256xbf16, #tpu.memory_space<vmem>>, vector<8x128xbf16>
      %384 = arith.extf %383 : vector<8x128xbf16> to vector<8x128xf32>
      %c0_129 = arith.constant 0 : index
      %c0_130 = arith.constant 0 : index
      %385 = vector.load %arg6[%c0_129, %c0_130] : memref<8x128xf32, #tpu.memory_space<vmem>>, vector<8x128xf32>
      tpu.vector_store %arg6[%c0_129, %c0_130], %384 {strides = array<i32>} : memref<8x128xf32, #tpu.memory_space<vmem>>, vector<8x128xf32>,
    } else {
    }
    return
  }
  func.func @transform_0(%arg0: i32, %arg1: i32) -> (i32, i32, i32) {
    %c0_i32 = arith.constant 0 : i32
    %c0_i32_0 = arith.constant 0 : i32
    return %arg1, %arg0, %c0_i32 : i32, i32, i32
  }
  func.func @transform_1(%arg0: i32, %arg1: i32) -> (i32, i32) {
    %c0_i32 = arith.constant 0 : i32
    %c0_i32_0 = arith.constant 0 : i32
    %c0_i32_1 = arith.constant 0 : i32
    return %c0_i32, %c0_i32_0 : i32, i32
  }
  func.func @transform_2(%arg0: i32, %arg1: i32) -> (i32, i32) {
    %c0_i32 = arith.constant 0 : i32
    %c0_i32_0 = arith.constant 0 : i32
    %c0_i32_1 = arith.constant 0 : i32
    return %c0_i32, %c0_i32_0 : i32, i32
  }
  func.func @transform_3(%arg0: i32, %arg1: i32) -> (i32, i32) {
    %c0_i32 = arith.constant 0 : i32
    %c0_i32_0 = arith.constant 0 : i32
    %c0_i32_1 = arith.constant 0 : i32
    return %c0_i32, %c0_i32_0 : i32, i32
  }
  func.func @transform_4(%arg0: i32, %arg1: i32) -> (i32, i32) {
    %c0_i32 = arith.constant 0 : i32
    %c0_i32_0 = arith.constant 0 : i32
    return %arg0, %c0_i32 : i32, i32
  }
}

</mosaic_0001>

<llo_original>
// kernel: rnn_forward.1
$region0: #{rnn_forward.1}
  #allocation0 [shape = 'u32[]', space=smem, size = 0x4, offset = 0x4, fixed_abs, tag = 'smem constant byte address 0x4 - core index']
  #allocation1 [shape = 'u32[72,128]{1,0:T(1,128)}', space=vmem, size = 0x9000, scoped, tag = 'internal scratch']
  #allocation2 [shape = 'bf16[8,256]{1,0:T(8,128)(2,1)}', space=vmem, size = 0x1000, scoped, tag = 'scratch operand']
  #allocation3 [shape = 'f32[8,128]{1,0:T(8,128)}', space=vmem, size = 0x1000, scoped, tag = 'scratch operand']
  #allocation4 [shape = 'f32[8,128]{1,0:T(8,128)}', space=vmem, size = 0x1000, scoped, tag = 'scratch operand']
  %s0 = inlined_call_operand.vmem [shape: bf16[8,8,512], index: 0, kind: input, shape index: {}]
  %s1 = inlined_call_operand.vmem [shape: bf16[128,512], index: 1, kind: input, shape index: {}]
  %s2 = inlined_call_operand.vmem [shape: bf16[256,512], index: 2, kind: input, shape index: {}]
  %s3 = inlined_call_operand.vmem [shape: f32[1,512], index: 3, kind: input, shape index: {}]
  %s4 = inlined_call_operand.vmem [shape: f32[8,128], index: 4, kind: output, shape index: {}]
  %s5 = sld [smem:[#allocation0]]
  $region34: #{rnn_forward.1} parent=0
    _
  %s7 = ssub.s32 1, %s5
  %s8 = scalar_select 0, %s7, %s5
  // Predicated region
  $region2: #{rnn_forward.1} parent=0 // pred_check
    _
  $region3: #{rnn_forward.1} parent=0 // pred_check_branch
    %10 = sbr.rel (0) target = $region5
  $region4: #{rnn_forward.1} parent=0 // pred_region
    _
  $region5: #{rnn_forward.1} parent=0 // pred_fallthru
    _
  // Predicated region
  $region6: #{rnn_forward.1} parent=0 // pred_check
    _
  $region7: #{rnn_forward.1} parent=0 // pred_check_branch
    %12 = sbr.rel (0) target = $region9
  $region8: #{rnn_forward.1} parent=0 // pred_region
    _
  $region9: #{rnn_forward.1} parent=0 // pred_fallthru
    _
  // Predicated region
  $region10: #{rnn_forward.1} parent=0 // pred_check
    _
  $region11: #{rnn_forward.1} parent=0 // pred_check_branch
    %14 = sbr.rel (0) target = $region13
  $region12: #{rnn_forward.1} parent=0 // pred_region
    _
  $region13: #{rnn_forward.1} parent=0 // pred_fallthru
    _
  // Predicated region
  $region14: #{rnn_forward.1} parent=0 // pred_check
    _
  $region15: #{rnn_forward.1} parent=0 // pred_check_branch
    %16 = sbr.rel (0) target = $region17
  $region16: #{rnn_forward.1} parent=0 // pred_region
    _
  $region17: #{rnn_forward.1} parent=0 // pred_fallthru
    _
  %p18 = scmp.eq.s32.totalorder 0, 0
  // Predicated region
  $region18: #{rnn_forward.1} parent=0 // pred_check
    %p19 = pneg %p18
  $region19: #{rnn_forward.1} parent=0 // pred_check_branch
    %21 = sbr.rel (%p19) target = $region21
  $region20: #{rnn_forward.1} parent=0 // pred_region
    %22 = vst [vmem:[#allocation2] sm:$0xff] 0
    %23 = vst [vmem:[#allocation3] sm:$0xff] 0.0
    %24 = vst [vmem:[#allocation4] sm:$0xff] 0.0
  $region21: #{rnn_forward.1} parent=0 // pred_fallthru
    _
  %v25 = vld [vmem:[%s1] sm:$0xff]
  %v26 = vld [vmem:[%s1 + $0x8] sm:$0xff]
  %v27 = vld [vmem:[%s1 + $0x10] sm:$0xff]
  %v28 = vld [vmem:[%s1 + $0x18] sm:$0xff]
  %v29 = vld [vmem:[%s1 + $0x20] sm:$0xff]
  %v30 = vld [vmem:[%s1 + $0x28] sm:$0xff]
  %v31 = vld [vmem:[%s1 + $0x30] sm:$0xff]
  %v32 = vld [vmem:[%s1 + $0x38] sm:$0xff]
  %v33 = vld [vmem:[%s1 + $0x40] sm:$0xff]
  %v34 = vld [vmem:[%s1 + $0x48] sm:$0xff]
  %v35 = vld [vmem:[%s1 + $0x50] sm:$0xff]
  %v36 = vld [vmem:[%s1 + $0x58] sm:$0xff]
  %v37 = vld [vmem:[%s1 + $0x60] sm:$0xff]
  %v38 = vld [vmem:[%s1 + $0x68] sm:$0xff]
  %v39 = vld [vmem:[%s1 + $0x70] sm:$0xff]
  %v40 = vld [vmem:[%s1 + $0x78] sm:$0xff]
  %v41 = vld [vmem:[%s1 + $0x80] sm:$0xff]
  %v42 = vld [vmem:[%s1 + $0x88] sm:$0xff]
  %v43 = vld [vmem:[%s1 + $0x90] sm:$0xff]
  %v44 = vld [vmem:[%s1 + $0x98] sm:$0xff]
  %v45 = vld [vmem:[%s1 + $0xa0] sm:$0xff]
  %v46 = vld [vmem:[%s1 + $0xa8] sm:$0xff]
  %v47 = vld [vmem:[%s1 + $0xb0] sm:$0xff]
  %v48 = vld [vmem:[%s1 + $0xb8] sm:$0xff]
  %v49 = vld [vmem:[%s1 + $0xc0] sm:$0xff]
  %v50 = vld [vmem:[%s1 + $0xc8] sm:$0xff]
  %v51 = vld [vmem:[%s1 + $0xd0] sm:$0xff]
  %v52 = vld [vmem:[%s1 + $0xd8] sm:$0xff]
  %v53 = vld [vmem:[%s1 + $0xe0] sm:$0xff]
  %v54 = vld [vmem:[%s1 + $0xe8] sm:$0xff]
  %v55 = vld [vmem:[%s1 + $0xf0] sm:$0xff]
  %v56 = vld [vmem:[%s1 + $0xf8] sm:$0xff]
  %v57 = vld [vmem:[%s2] sm:$0xff]
  %v58 = vld [vmem:[%s2 + $0x8] sm:$0xff]
  %v59 = vld [vmem:[%s2 + $0x10] sm:$0xff]
  %v60 = vld [vmem:[%s2 + $0x18] sm:$0xff]
  %v61 = vld [vmem:[%s2 + $0x20] sm:$0xff]
  %v62 = vld [vmem:[%s2 + $0x28] sm:$0xff]
  %v63 = vld [vmem:[%s2 + $0x30] sm:$0xff]
  %v64 = vld [vmem:[%s2 + $0x38] sm:$0xff]
  %v65 = vld [vmem:[%s2 + $0x40] sm:$0xff]
  %v66 = vld [vmem:[%s2 + $0x48] sm:$0xff]
  %v67 = vld [vmem:[%s2 + $0x50] sm:$0xff]
  %v68 = vld [vmem:[%s2 + $0x58] sm:$0xff]
  %v69 = vld [vmem:[%s2 + $0x60] sm:$0xff]
  %v70 = vld [vmem:[%s2 + $0x68] sm:$0xff]
  %v71 = vld [vmem:[%s2 + $0x70] sm:$0xff]
  %v72 = vld [vmem:[%s2 + $0x78] sm:$0xff]
  %v73 = vld [vmem:[%s2 + $0x80] sm:$0xff]
  %v74 = vld [vmem:[%s2 + $0x88] sm:$0xff]
  %v75 = vld [vmem:[%s2 + $0x90] sm:$0xff]
  %v76 = vld [vmem:[%s2 + $0x98] sm:$0xff]
  %v77 = vld [vmem:[%s2 + $0xa0] sm:$0xff]
  %v78 = vld [vmem:[%s2 + $0xa8] sm:$0xff]
  %v79 = vld [vmem:[%s2 + $0xb0] sm:$0xff]
  %v80 = vld [vmem:[%s2 + $0xb8] sm:$0xff]
  %v81 = vld [vmem:[%s2 + $0xc0] sm:$0xff]
  %v82 = vld [vmem:[%s2 + $0xc8] sm:$0xff]
  %v83 = vld [vmem:[%s2 + $0xd0] sm:$0xff]
  %v84 = vld [vmem:[%s2 + $0xd8] sm:$0xff]
  %v85 = vld [vmem:[%s2 + $0xe0] sm:$0xff]
  %v86 = vld [vmem:[%s2 + $0xe8] sm:$0xff]
  %v87 = vld [vmem:[%s2 + $0xf0] sm:$0xff]
  %v88 = vld [vmem:[%s2 + $0xf8] sm:$0xff]
  %v89 = vld [vmem:[%s2 + $0x100] sm:$0xff]
  %v90 = vld [vmem:[%s2 + $0x108] sm:$0xff]
  %v91 = vld [vmem:[%s2 + $0x110] sm:$0xff]
  %v92 = vld [vmem:[%s2 + $0x118] sm:$0xff]
  %v93 = vld [vmem:[%s2 + $0x120] sm:$0xff]
  %v94 = vld [vmem:[%s2 + $0x128] sm:$0xff]
  %v95 = vld [vmem:[%s2 + $0x130] sm:$0xff]
  %v96 = vld [vmem:[%s2 + $0x138] sm:$0xff]
  %v97 = vld [vmem:[%s2 + $0x140] sm:$0xff]
  %v98 = vld [vmem:[%s2 + $0x148] sm:$0xff]
  %v99 = vld [vmem:[%s2 + $0x150] sm:$0xff]
  %v100 = vld [vmem:[%s2 + $0x158] sm:$0xff]
  %v101 = vld [vmem:[%s2 + $0x160] sm:$0xff]
  %v102 = vld [vmem:[%s2 + $0x168] sm:$0xff]
  %v103 = vld [vmem:[%s2 + $0x170] sm:$0xff]
  %v104 = vld [vmem:[%s2 + $0x178] sm:$0xff]
  %v105 = vld [vmem:[%s2 + $0x180] sm:$0xff]
  %v106 = vld [vmem:[%s2 + $0x188] sm:$0xff]
  %v107 = vld [vmem:[%s2 + $0x190] sm:$0xff]
  %v108 = vld [vmem:[%s2 + $0x198] sm:$0xff]
  %v109 = vld [vmem:[%s2 + $0x1a0] sm:$0xff]
  %v110 = vld [vmem:[%s2 + $0x1a8] sm:$0xff]
  %v111 = vld [vmem:[%s2 + $0x1b0] sm:$0xff]
  %v112 = vld [vmem:[%s2 + $0x1b8] sm:$0xff]
  %v113 = vld [vmem:[%s2 + $0x1c0] sm:$0xff]
  %v114 = vld [vmem:[%s2 + $0x1c8] sm:$0xff]
  %v115 = vld [vmem:[%s2 + $0x1d0] sm:$0xff]
  %v116 = vld [vmem:[%s2 + $0x1d8] sm:$0xff]
  %v117 = vld [vmem:[%s2 + $0x1e0] sm:$0xff]
  %v118 = vld [vmem:[%s2 + $0x1e8] sm:$0xff]
  %v119 = vld [vmem:[%s2 + $0x1f0] sm:$0xff]
  %v120 = vld [vmem:[%s2 + $0x1f8] sm:$0xff]
  %v121 = vld [vmem:[%s3] sm:$0xf]
  %v123 = vperm.slane %v121, 0
  %v124 = vperm.slane %v121, 1
  %v125 = vperm.slane %v121, 2
  %v126 = vperm.slane %v121, 3
  %v131 = vld [vmem:[#allocation3] sm:$0xff]
  %v132 = vld [vmem:[#allocation4] sm:$0xff]
  %v133 = vld [vmem:[#allocation2] sm:$0xf]
  %v134 = vld [vmem:[%s0] sm:$0xff]
  %v135 = vld [vmem:[%s0 + $0x8] sm:$0xff]
  %v136 = vunpack.c.l.bf16 %v134
  %v137 = vunpack.c.h.bf16 %v134
  %v138 = vunpack.c.l.bf16 %v135
  %v139 = vunpack.c.h.bf16 %v135
  %v172 = vunpack.c.l.b16 %v25
  %v173 = vunpack.c.h.b16 %v25
  %v174 = vunpack.c.l.b16 %v26
  %v175 = vunpack.c.h.b16 %v26
  %v176 = vunpack.c.l.b16 %v27
  %v177 = vunpack.c.h.b16 %v27
  %v178 = vunpack.c.l.b16 %v28
  %v179 = vunpack.c.h.b16 %v28
  %v180 = vunpack.c.l.b16 %v29
  %v181 = vunpack.c.h.b16 %v29
  %v182 = vunpack.c.l.b16 %v30
  %v183 = vunpack.c.h.b16 %v30
  %v184 = vunpack.c.l.b16 %v31
  %v185 = vunpack.c.h.b16 %v31
  %v186 = vunpack.c.l.b16 %v32
  %v187 = vunpack.c.h.b16 %v32
  %v188 = vunpack.c.l.b16 %v33
  %v189 = vunpack.c.h.b16 %v33
  %v190 = vunpack.c.l.b16 %v34
  %v191 = vunpack.c.h.b16 %v34
  %v192 = vunpack.c.l.b16 %v35
  %v193 = vunpack.c.h.b16 %v35
  %v194 = vunpack.c.l.b16 %v36
  %v195 = vunpack.c.h.b16 %v36
  %v196 = vunpack.c.l.b16 %v37
  %v197 = vunpack.c.h.b16 %v37
  %v198 = vunpack.c.l.b16 %v38
  %v199 = vunpack.c.h.b16 %v38
  %v200 = vunpack.c.l.b16 %v39
  %v201 = vunpack.c.h.b16 %v39
  %v202 = vunpack.c.l.b16 %v40
  %v203 = vunpack.c.h.b16 %v40
  %v204 = vunpack.c.l.b16 %v41
  %v205 = vunpack.c.h.b16 %v41
  %v206 = vunpack.c.l.b16 %v42
  %v207 = vunpack.c.h.b16 %v42
  %v208 = vunpack.c.l.b16 %v43
  %v209 = vunpack.c.h.b16 %v43
  %v210 = vunpack.c.l.b16 %v44
  %v211 = vunpack.c.h.b16 %v44
  %v212 = vunpack.c.l.b16 %v45
  %v213 = vunpack.c.h.b16 %v45
  %v214 = vunpack.c.l.b16 %v46
  %v215 = vunpack.c.h.b16 %v46
  %v216 = vunpack.c.l.b16 %v47
  %v217 = vunpack.c.h.b16 %v47
  %v218 = vunpack.c.l.b16 %v48
  %v219 = vunpack.c.h.b16 %v48
  %v220 = vunpack.c.l.b16 %v49
  %v221 = vunpack.c.h.b16 %v49
  %v222 = vunpack.c.l.b16 %v50
  %v223 = vunpack.c.h.b16 %v50
  %v224 = vunpack.c.l.b16 %v51
  %v225 = vunpack.c.h.b16 %v51
  %v226 = vunpack.c.l.b16 %v52
  %v227 = vunpack.c.h.b16 %v52
  %v228 = vunpack.c.l.b16 %v53
  %v229 = vunpack.c.h.b16 %v53
  %v230 = vunpack.c.l.b16 %v54
  %v231 = vunpack.c.h.b16 %v54
  %v232 = vunpack.c.l.b16 %v55
  %v233 = vunpack.c.h.b16 %v55
  %v234 = vunpack.c.l.b16 %v56
  %v235 = vunpack.c.h.b16 %v56
  %v236 = vpack.c.b16 %v176, %v172
  %v237 = vpack.c.b16 %v177, %v173
  %v238 = vpack.c.b16 %v178, %v174
  %v239 = vpack.c.b16 %v179, %v175
  %v240 = vpack.c.b16 %v184, %v180
  %v241 = vpack.c.b16 %v185, %v181
  %v242 = vpack.c.b16 %v186, %v182
  %v243 = vpack.c.b16 %v187, %v183
  %v244 = vpack.c.b16 %v192, %v188
  %v245 = vpack.c.b16 %v193, %v189
  %v246 = vpack.c.b16 %v194, %v190
  %v247 = vpack.c.b16 %v195, %v191
  %v248 = vpack.c.b16 %v200, %v196
  %v249 = vpack.c.b16 %v201, %v197
  %v250 = vpack.c.b16 %v202, %v198
  %v251 = vpack.c.b16 %v203, %v199
  %v252 = vpack.c.b16 %v208, %v204
  %v253 = vpack.c.b16 %v209, %v205
  %v254 = vpack.c.b16 %v210, %v206
  %v255 = vpack.c.b16 %v211, %v207
  %v256 = vpack.c.b16 %v216, %v212
  %v257 = vpack.c.b16 %v217, %v213
  %v258 = vpack.c.b16 %v218, %v214
  %v259 = vpack.c.b16 %v219, %v215
  %v260 = vpack.c.b16 %v224, %v220
  %v261 = vpack.c.b16 %v225, %v221
  %v262 = vpack.c.b16 %v226, %v222
  %v263 = vpack.c.b16 %v227, %v223
  %v264 = vpack.c.b16 %v232, %v228
  %v265 = vpack.c.b16 %v233, %v229
  %v266 = vpack.c.b16 %v234, %v230
  %v267 = vpack.c.b16 %v235, %v231
  %300 = vmatpush.bf16.msra.mxu0 %v264
  %301 = vmatpush.bf16.msra.mxu0 %v260
  %302 = vmatpush.bf16.msra.mxu0 %v256
  %303 = vmatpush.bf16.msra.mxu0 %v252
  %304 = vmatpush.bf16.msra.mxu0 %v248
  %305 = vmatpush.bf16.msra.mxu0 %v244
  %306 = vmatpush.bf16.msra.mxu0 %v240
  %307 = vmatpush.bf16.msra.mxu0 %v236
  %308 = vmatmul.bf16.gmra.mxu0 %v133
  %v309 = vpop.f32.mrf.mxu0
  %v310 = vadd.f32 0.0, %v309
  %v311 = vpop.f32.mrf.mxu0
  %312 = vdwg.mxu0
  %313 = vmatpush.bf16.msra.mxu0 %v265
  %314 = vmatpush.bf16.msra.mxu0 %v261
  %315 = vmatpush.bf16.msra.mxu0 %v257
  %316 = vmatpush.bf16.msra.mxu0 %v253
  %317 = vmatpush.bf16.msra.mxu0 %v249
  %318 = vmatpush.bf16.msra.mxu0 %v245
  %319 = vmatpush.bf16.msra.mxu0 %v241
  %320 = vmatpush.bf16.msra.mxu0 %v237
  %321 = vmatmul.bf16.gmra.mxu0 %v133
  %v322 = vpop.f32.mrf.mxu0
  %v323 = vadd.f32 0.0, %v322
  %v324 = vpop.f32.mrf.mxu0
  %325 = vdwg.mxu0
  %326 = vmatpush.bf16.msra.mxu0 %v266
  %327 = vmatpush.bf16.msra.mxu0 %v262
  %328 = vmatpush.bf16.msra.mxu0 %v258
  %329 = vmatpush.bf16.msra.mxu0 %v254
  %330 = vmatpush.bf16.msra.mxu0 %v250
  %331 = vmatpush.bf16.msra.mxu0 %v246
  %332 = vmatpush.bf16.msra.mxu0 %v242
  %333 = vmatpush.bf16.msra.mxu0 %v238
  %334 = vmatmul.bf16.gmra.mxu0 %v133
  %v335 = vpop.f32.mrf.mxu0
  %v336 = vadd.f32 0.0, %v335
  %v337 = vpop.f32.mrf.mxu0
  %338 = vdwg.mxu0
  %339 = vmatpush.bf16.msra.mxu0 %v267
  %340 = vmatpush.bf16.msra.mxu0 %v263
  %341 = vmatpush.bf16.msra.mxu0 %v259
  %342 = vmatpush.bf16.msra.mxu0 %v255
  %343 = vmatpush.bf16.msra.mxu0 %v251
  %344 = vmatpush.bf16.msra.mxu0 %v247
  %345 = vmatpush.bf16.msra.mxu0 %v243
  %346 = vmatpush.bf16.msra.mxu0 %v239
  %347 = vmatmul.bf16.gmra.mxu0 %v133
  %v348 = vpop.f32.mrf.mxu0
  %v349 = vadd.f32 0.0, %v348
  %v350 = vpop.f32.mrf.mxu0
  %351 = vdwg.mxu0
  %v352 = vadd.f32 %v136, %v310
  %v353 = vadd.f32 %v137, %v323
  %v354 = vadd.f32 %v138, %v336
  %v355 = vadd.f32 %v139, %v349
  %v356 = vxor.u32 %v352, 2147483648
  %v357 = vxor.u32 %v353, 2147483648
  %v358 = vxor.u32 %v354, 2147483648
  %v359 = vmul.f32 %v356, 1.442695
  %v360 = vpow.pop %v359
  %v361 = vmul.f32 %v357, 1.442695
  %v362 = vpow.pop %v361
  %v363 = vmul.f32 %v358, 1.442695
  %v364 = vpow.pop %v363
  %v365 = vadd.f32 %v360, 1.0
  %v366 = vadd.f32 %v362, 1.0
  %v367 = vadd.f32 %v364, 1.0
  %v368 = vrcp.pop %v365
  %v369 = vmul.f32 %v365, %v368
  %v370 = vsub.f32 1.0, %v369
  %v371 = vmul.f32 %v368, %v370
  %v372 = vadd.f32 %v368, %v371
  %vm373 = vweird.f32 %v365
  %vm374 = vweird.f32 %v368
  %vm375 = vmor %vm373, %vm374
  %v376 = vsel %vm375, %v368, %v372
  %v377 = vand.u32 2147483647, %v365
  %vm378 = vcmp.eq.f32.partialorder %v377, 8.507059e+37
  %v379 = vand.u32 %v365, 2147483648
  %v380 = vor.u32 1.1754944e-38, %v379
  %v381 = vsel %vm378, %v380, %v376
  %v382 = vmul.f32 1.0, %v381
  %v383 = vrcp.pop %v366
  %v384 = vmul.f32 %v366, %v383
  %v385 = vsub.f32 1.0, %v384
  %v386 = vmul.f32 %v383, %v385
  %v387 = vadd.f32 %v383, %v386
  %vm388 = vweird.f32 %v366
  %vm389 = vweird.f32 %v383
  %vm390 = vmor %vm388, %vm389
  %v391 = vsel %vm390, %v383, %v387
  %v392 = vand.u32 2147483647, %v366
  %vm393 = vcmp.eq.f32.partialorder %v392, 8.507059e+37
  %v394 = vand.u32 %v366, 2147483648
  %v395 = vor.u32 1.1754944e-38, %v394
  %v396 = vsel %vm393, %v395, %v391
  %v397 = vmul.f32 1.0, %v396
  %v398 = vrcp.pop %v367
  %v399 = vmul.f32 %v367, %v398
  %v400 = vsub.f32 1.0, %v399
  %v401 = vmul.f32 %v398, %v400
  %v402 = vadd.f32 %v398, %v401
  %vm403 = vweird.f32 %v367
  %vm404 = vweird.f32 %v398
  %vm405 = vmor %vm403, %vm404
  %v406 = vsel %vm405, %v398, %v402
  %v407 = vand.u32 2147483647, %v367
  %vm408 = vcmp.eq.f32.partialorder %v407, 8.507059e+37
  %v409 = vand.u32 %v367, 2147483648
  %v410 = vor.u32 1.1754944e-38, %v409
  %v411 = vsel %vm408, %v410, %v406
  %v412 = vmul.f32 1.0, %v411
  %v413 = vtanh.pop %v355
  %v414 = vmul.f32 %v397, %v131
  %v415 = vmul.f32 %v382, %v413
  %v416 = vadd.f32 %v414, %v415
  %v417 = vtanh.pop %v416
  %v418 = vmul.f32 %v412, %v417
  %v419 = vpack.c.bf16 %v418, %v418
  %420 = vst [vmem:[#allocation2] sm:$0xf] %v419
  %v421 = vld [vmem:[#allocation2] sm:$0xff]
  %v423 = vunpack.c.l.b16 %v421
  %v424 = vunpack.c.h.b16 %v421
  %v425 = vpack.c.b16 %v423, %v423
  %v426 = vpack.c.b16 %v424, %v424
  %v493 = vunpack.c.l.b16 %v57
  %v494 = vunpack.c.h.b16 %v57
  %v495 = vunpack.c.l.b16 %v58
  %v496 = vunpack.c.h.b16 %v58
  %v497 = vunpack.c.l.b16 %v59
  %v498 = vunpack.c.h.b16 %v59
  %v499 = vunpack.c.l.b16 %v60
  %v500 = vunpack.c.h.b16 %v60
  %v501 = vunpack.c.l.b16 %v61
  %v502 = vunpack.c.h.b16 %v61
  %v503 = vunpack.c.l.b16 %v62
  %v504 = vunpack.c.h.b16 %v62
  %v505 = vunpack.c.l.b16 %v63
  %v506 = vunpack.c.h.b16 %v63
  %v507 = vunpack.c.l.b16 %v64
  %v508 = vunpack.c.h.b16 %v64
  %v509 = vunpack.c.l.b16 %v65
  %v510 = vunpack.c.h.b16 %v65
  %v511 = vunpack.c.l.b16 %v66
  %v512 = vunpack.c.h.b16 %v66
  %v513 = vunpack.c.l.b16 %v67
  %v514 = vunpack.c.h.b16 %v67
  %v515 = vunpack.c.l.b16 %v68
  %v516 = vunpack.c.h.b16 %v68
  %v517 = vunpack.c.l.b16 %v69
  %v518 = vunpack.c.h.b16 %v69
  %v519 = vunpack.c.l.b16 %v70
  %v520 = vunpack.c.h.b16 %v70
  %v521 = vunpack.c.l.b16 %v71
  %v522 = vunpack.c.h.b16 %v71
  %v523 = vunpack.c.l.b16 %v72
  %v524 = vunpack.c.h.b16 %v72
  %v525 = vunpack.c.l.b16 %v73
  %v526 = vunpack.c.h.b16 %v73
  %v527 = vunpack.c.l.b16 %v74
  %v528 = vunpack.c.h.b16 %v74
  %v529 = vunpack.c.l.b16 %v75
  %v530 = vunpack.c.h.b16 %v75
  %v531 = vunpack.c.l.b16 %v76
  %v532 = vunpack.c.h.b16 %v76
  %v533 = vunpack.c.l.b16 %v77
  %v534 = vunpack.c.h.b16 %v77
  %v535 = vunpack.c.l.b16 %v78
  %v536 = vunpack.c.h.b16 %v78
  %v537 = vunpack.c.l.b16 %v79
  %v538 = vunpack.c.h.b16 %v79
  %v539 = vunpack.c.l.b16 %v80
  %v540 = vunpack.c.h.b16 %v80
  %v541 = vunpack.c.l.b16 %v81
  %v542 = vunpack.c.h.b16 %v81
  %v543 = vunpack.c.l.b16 %v82
  %v544 = vunpack.c.h.b16 %v82
  %v545 = vunpack.c.l.b16 %v83
  %v546 = vunpack.c.h.b16 %v83
  %v547 = vunpack.c.l.b16 %v84
  %v548 = vunpack.c.h.b16 %v84
  %v549 = vunpack.c.l.b16 %v85
  %v550 = vunpack.c.h.b16 %v85
  %v551 = vunpack.c.l.b16 %v86
  %v552 = vunpack.c.h.b16 %v86
  %v553 = vunpack.c.l.b16 %v87
  %v554 = vunpack.c.h.b16 %v87
  %v555 = vunpack.c.l.b16 %v88
  %v556 = vunpack.c.h.b16 %v88
  %v557 = vunpack.c.l.b16 %v89
  %v558 = vunpack.c.h.b16 %v89
  %v559 = vunpack.c.l.b16 %v90
  %v560 = vunpack.c.h.b16 %v90
  %v561 = vunpack.c.l.b16 %v91
  %v562 = vunpack.c.h.b16 %v91
  %v563 = vunpack.c.l.b16 %v92
  %v564 = vunpack.c.h.b16 %v92
  %v565 = vunpack.c.l.b16 %v93
  %v566 = vunpack.c.h.b16 %v93
  %v567 = vunpack.c.l.b16 %v94
  %v568 = vunpack.c.h.b16 %v94
  %v569 = vunpack.c.l.b16 %v95
  %v570 = vunpack.c.h.b16 %v95
  %v571 = vunpack.c.l.b16 %v96
  %v572 = vunpack.c.h.b16 %v96
  %v573 = vunpack.c.l.b16 %v97
  %v574 = vunpack.c.h.b16 %v97
  %v575 = vunpack.c.l.b16 %v98
  %v576 = vunpack.c.h.b16 %v98
  %v577 = vunpack.c.l.b16 %v99
  %v578 = vunpack.c.h.b16 %v99
  %v579 = vunpack.c.l.b16 %v100
  %v580 = vunpack.c.h.b16 %v100
  %v581 = vunpack.c.l.b16 %v101
  %v582 = vunpack.c.h.b16 %v101
  %v583 = vunpack.c.l.b16 %v102
  %v584 = vunpack.c.h.b16 %v102
  %v585 = vunpack.c.l.b16 %v103
  %v586 = vunpack.c.h.b16 %v103
  %v587 = vunpack.c.l.b16 %v104
  %v588 = vunpack.c.h.b16 %v104
  %v589 = vunpack.c.l.b16 %v105
  %v590 = vunpack.c.h.b16 %v105
  %v591 = vunpack.c.l.b16 %v106
  %v592 = vunpack.c.h.b16 %v106
  %v593 = vunpack.c.l.b16 %v107
  %v594 = vunpack.c.h.b16 %v107
  %v595 = vunpack.c.l.b16 %v108
  %v596 = vunpack.c.h.b16 %v108
  %v597 = vunpack.c.l.b16 %v109
  %v598 = vunpack.c.h.b16 %v109
  %v599 = vunpack.c.l.b16 %v110
  %v600 = vunpack.c.h.b16 %v110
  %v601 = vunpack.c.l.b16 %v111
  %v602 = vunpack.c.h.b16 %v111
  %v603 = vunpack.c.l.b16 %v112
  %v604 = vunpack.c.h.b16 %v112
  %v605 = vunpack.c.l.b16 %v113
  %v606 = vunpack.c.h.b16 %v113
  %v607 = vunpack.c.l.b16 %v114
  %v608 = vunpack.c.h.b16 %v114
  %v609 = vunpack.c.l.b16 %v115
  %v610 = vunpack.c.h.b16 %v115
  %v611 = vunpack.c.l.b16 %v116
  %v612 = vunpack.c.h.b16 %v116
  %v613 = vunpack.c.l.b16 %v117
  %v614 = vunpack.c.h.b16 %v117
  %v615 = vunpack.c.l.b16 %v118
  %v616 = vunpack.c.h.b16 %v118
  %v617 = vunpack.c.l.b16 %v119
  %v618 = vunpack.c.h.b16 %v119
  %v619 = vunpack.c.l.b16 %v120
  %v620 = vunpack.c.h.b16 %v120
  %v621 = vpack.c.b16 %v497, %v493
  %v622 = vpack.c.b16 %v498, %v494
  %v623 = vpack.c.b16 %v499, %v495
  %v624 = vpack.c.b16 %v500, %v496
  %v625 = vpack.c.b16 %v505, %v501
  %v626 = vpack.c.b16 %v506, %v502
  %v627 = vpack.c.b16 %v507, %v503
  %v628 = vpack.c.b16 %v508, %v504
  %v629 = vpack.c.b16 %v513, %v509
  %v630 = vpack.c.b16 %v514, %v510
  %v631 = vpack.c.b16 %v515, %v511
  %v632 = vpack.c.b16 %v516, %v512
  %v633 = vpack.c.b16 %v521, %v517
  %v634 = vpack.c.b16 %v522, %v518
  %v635 = vpack.c.b16 %v523, %v519
  %v636 = vpack.c.b16 %v524, %v520
  %v637 = vpack.c.b16 %v529, %v525
  %v638 = vpack.c.b16 %v530, %v526
  %v639 = vpack.c.b16 %v531, %v527
  %v640 = vpack.c.b16 %v532, %v528
  %v641 = vpack.c.b16 %v537, %v533
  %v642 = vpack.c.b16 %v538, %v534
  %v643 = vpack.c.b16 %v539, %v535
  %v644 = vpack.c.b16 %v540, %v536
  %v645 = vpack.c.b16 %v545, %v541
  %v646 = vpack.c.b16 %v546, %v542
  %v647 = vpack.c.b16 %v547, %v543
  %v648 = vpack.c.b16 %v548, %v544
  %v649 = vpack.c.b16 %v553, %v549
  %v650 = vpack.c.b16 %v554, %v550
  %v651 = vpack.c.b16 %v555, %v551
  %v652 = vpack.c.b16 %v556, %v552
  %v653 = vpack.c.b16 %v561, %v557
  %v654 = vpack.c.b16 %v562, %v558
  %v655 = vpack.c.b16 %v563, %v559
  %v656 = vpack.c.b16 %v564, %v560
  %v657 = vpack.c.b16 %v569, %v565
  %v658 = vpack.c.b16 %v570, %v566
  %v659 = vpack.c.b16 %v571, %v567
  %v660 = vpack.c.b16 %v572, %v568
  %v661 = vpack.c.b16 %v577, %v573
  %v662 = vpack.c.b16 %v578, %v574
  %v663 = vpack.c.b16 %v579, %v575
  %v664 = vpack.c.b16 %v580, %v576
  %v665 = vpack.c.b16 %v585, %v581
  %v666 = vpack.c.b16 %v586, %v582
  %v667 = vpack.c.b16 %v587, %v583
  %v668 = vpack.c.b16 %v588, %v584
  %v669 = vpack.c.b16 %v593, %v589
  %v670 = vpack.c.b16 %v594, %v590
  %v671 = vpack.c.b16 %v595, %v591
  %v672 = vpack.c.b16 %v596, %v592
  %v673 = vpack.c.b16 %v601, %v597
  %v674 = vpack.c.b16 %v602, %v598
  %v675 = vpack.c.b16 %v603, %v599
  %v676 = vpack.c.b16 %v604, %v600
  %v677 = vpack.c.b16 %v609, %v605
  %v678 = vpack.c.b16 %v610, %v606
  %v679 = vpack.c.b16 %v611, %v607
  %v680 = vpack.c.b16 %v612, %v608
  %v681 = vpack.c.b16 %v617, %v613
  %v682 = vpack.c.b16 %v618, %v614
  %v683 = vpack.c.b16 %v619, %v615
  %v684 = vpack.c.b16 %v620, %v616
  %749 = vmatpush.bf16.msra.mxu0 %v649
  %750 = vmatpush.bf16.msra.mxu0 %v645
  %751 = vmatpush.bf16.msra.mxu0 %v641
  %752 = vmatpush.bf16.msra.mxu0 %v637
  %753 = vmatpush.bf16.msra.mxu0 %v633
  %754 = vmatpush.bf16.msra.mxu0 %v629
  %755 = vmatpush.bf16.msra.mxu0 %v625
  %756 = vmatpush.bf16.msra.mxu0 %v621
  %757 = vmatmul.bf16.gmra.mxu0 %v425
  %v758 = vpop.f32.mrf.mxu0
  %v759 = vadd.f32 %v123, %v758
  %v760 = vpop.f32.mrf.mxu0
  %761 = vdwg.mxu0
  %762 = vmatpush.bf16.msra.mxu0 %v681
  %763 = vmatpush.bf16.msra.mxu0 %v677
  %764 = vmatpush.bf16.msra.mxu0 %v673
  %765 = vmatpush.bf16.msra.mxu0 %v669
  %766 = vmatpush.bf16.msra.mxu0 %v665
  %767 = vmatpush.bf16.msra.mxu0 %v661
  %768 = vmatpush.bf16.msra.mxu0 %v657
  %769 = vmatpush.bf16.msra.mxu0 %v653
  %770 = vmatmul.bf16.gmra.mxu0 %v426
  %v771 = vpop.f32.mrf.mxu0
  %v772 = vadd.f32 %v759, %v771
  %v773 = vpop.f32.mrf.mxu0
  %774 = vdwg.mxu0
  %775 = vmatpush.bf16.msra.mxu0 %v650
  %776 = vmatpush.bf16.msra.mxu0 %v646
  %777 = vmatpush.bf16.msra.mxu0 %v642
  %778 = vmatpush.bf16.msra.mxu0 %v638
  %779 = vmatpush.bf16.msra.mxu0 %v634
  %780 = vmatpush.bf16.msra.mxu0 %v630
  %781 = vmatpush.bf16.msra.mxu0 %v626
  %782 = vmatpush.bf16.msra.mxu0 %v622
  %783 = vmatmul.bf16.gmra.mxu0 %v425
  %v784 = vpop.f32.mrf.mxu0
  %v785 = vadd.f32 %v124, %v784
  %v786 = vpop.f32.mrf.mxu0
  %787 = vdwg.mxu0
  %788 = vmatpush.bf16.msra.mxu0 %v682
  %789 = vmatpush.bf16.msra.mxu0 %v678
  %790 = vmatpush.bf16.msra.mxu0 %v674
  %791 = vmatpush.bf16.msra.mxu0 %v670
  %792 = vmatpush.bf16.msra.mxu0 %v666
  %793 = vmatpush.bf16.msra.mxu0 %v662
  %794 = vmatpush.bf16.msra.mxu0 %v658
  %795 = vmatpush.bf16.msra.mxu0 %v654
  %796 = vmatmul.bf16.gmra.mxu0 %v426
  %v797 = vpop.f32.mrf.mxu0
  %v798 = vadd.f32 %v785, %v797
  %v799 = vpop.f32.mrf.mxu0
  %800 = vdwg.mxu0
  %801 = vmatpush.bf16.msra.mxu0 %v651
  %802 = vmatpush.bf16.msra.mxu0 %v647
  %803 = vmatpush.bf16.msra.mxu0 %v643
  %804 = vmatpush.bf16.msra.mxu0 %v639
  %805 = vmatpush.bf16.msra.mxu0 %v635
  %806 = vmatpush.bf16.msra.mxu0 %v631
  %807 = vmatpush.bf16.msra.mxu0 %v627
  %808 = vmatpush.bf16.msra.mxu0 %v623
  %809 = vmatmul.bf16.gmra.mxu0 %v425
  %v810 = vpop.f32.mrf.mxu0
  %v811 = vadd.f32 %v125, %v810
  %v812 = vpop.f32.mrf.mxu0
  %813 = vdwg.mxu0
  %814 = vmatpush.bf16.msra.mxu0 %v683
  %815 = vmatpush.bf16.msra.mxu0 %v679
  %816 = vmatpush.bf16.msra.mxu0 %v675
  %817 = vmatpush.bf16.msra.mxu0 %v671
  %818 = vmatpush.bf16.msra.mxu0 %v667
  %819 = vmatpush.bf16.msra.mxu0 %v663
  %820 = vmatpush.bf16.msra.mxu0 %v659
  %821 = vmatpush.bf16.msra.mxu0 %v655
  %822 = vmatmul.bf16.gmra.mxu0 %v426
  %v823 = vpop.f32.mrf.mxu0
  %v824 = vadd.f32 %v811, %v823
  %v825 = vpop.f32.mrf.mxu0
  %826 = vdwg.mxu0
  %827 = vmatpush.bf16.msra.mxu0 %v652
  %828 = vmatpush.bf16.msra.mxu0 %v648
  %829 = vmatpush.bf16.msra.mxu0 %v644
  %830 = vmatpush.bf16.msra.mxu0 %v640
  %831 = vmatpush.bf16.msra.mxu0 %v636
  %832 = vmatpush.bf16.msra.mxu0 %v632
  %833 = vmatpush.bf16.msra.mxu0 %v628
  %834 = vmatpush.bf16.msra.mxu0 %v624
  %835 = vmatmul.bf16.gmra.mxu0 %v425
  %v836 = vpop.f32.mrf.mxu0
  %v837 = vadd.f32 %v126, %v836
  %v838 = vpop.f32.mrf.mxu0
  %839 = vdwg.mxu0
  %840 = vmatpush.bf16.msra.mxu0 %v684
  %841 = vmatpush.bf16.msra.mxu0 %v680
  %842 = vmatpush.bf16.msra.mxu0 %v676
  %843 = vmatpush.bf16.msra.mxu0 %v672
  %844 = vmatpush.bf16.msra.mxu0 %v668
  %845 = vmatpush.bf16.msra.mxu0 %v664
  %846 = vmatpush.bf16.msra.mxu0 %v660
  %847 = vmatpush.bf16.msra.mxu0 %v656
  %848 = vmatmul.bf16.gmra.mxu0 %v426
  %v849 = vpop.f32.mrf.mxu0
  %v850 = vadd.f32 %v837, %v849
  %v851 = vpop.f32.mrf.mxu0
  %852 = vdwg.mxu0
  %v853 = vxor.u32 %v772, 2147483648
  %v854 = vxor.u32 %v798, 2147483648
  %v855 = vxor.u32 %v824, 2147483648
  %v856 = vmul.f32 %v853, 1.442695
  %v857 = vpow.pop %v856
  %v858 = vmul.f32 %v854, 1.442695
  %v859 = vpow.pop %v858
  %v860 = vmul.f32 %v855, 1.442695
  %v861 = vpow.pop %v860
  %v862 = vadd.f32 %v857, 1.0
  %v863 = vadd.f32 %v859, 1.0
  %v864 = vadd.f32 %v861, 1.0
  %v865 = vrcp.pop %v862
  %v866 = vmul.f32 %v862, %v865
  %v867 = vsub.f32 1.0, %v866
  %v868 = vmul.f32 %v865, %v867
  %v869 = vadd.f32 %v865, %v868
  %vm870 = vweird.f32 %v862
  %vm871 = vweird.f32 %v865
  %vm872 = vmor %vm870, %vm871
  %v873 = vsel %vm872, %v865, %v869
  %v874 = vand.u32 2147483647, %v862
  %vm875 = vcmp.eq.f32.partialorder %v874, 8.507059e+37
  %v876 = vand.u32 %v862, 2147483648
  %v877 = vor.u32 1.1754944e-38, %v876
  %v878 = vsel %vm875, %v877, %v873
  %v879 = vmul.f32 1.0, %v878
  %v880 = vrcp.pop %v863
  %v881 = vmul.f32 %v863, %v880
  %v882 = vsub.f32 1.0, %v881
  %v883 = vmul.f32 %v880, %v882
  %v884 = vadd.f32 %v880, %v883
  %vm885 = vweird.f32 %v863
  %vm886 = vweird.f32 %v880
  %vm887 = vmor %vm885, %vm886
  %v888 = vsel %vm887, %v880, %v884
  %v889 = vand.u32 2147483647, %v863
  %vm890 = vcmp.eq.f32.partialorder %v889, 8.507059e+37
  %v891 = vand.u32 %v863, 2147483648
  %v892 = vor.u32 1.1754944e-38, %v891
  %v893 = vsel %vm890, %v892, %v888
  %v894 = vmul.f32 1.0, %v893
  %v895 = vrcp.pop %v864
  %v896 = vmul.f32 %v864, %v895
  %v897 = vsub.f32 1.0, %v896
  %v898 = vmul.f32 %v895, %v897
  %v899 = vadd.f32 %v895, %v898
  %vm900 = vweird.f32 %v864
  %vm901 = vweird.f32 %v895
  %vm902 = vmor %vm900, %vm901
  %v903 = vsel %vm902, %v895, %v899
  %v904 = vand.u32 2147483647, %v864
  %vm905 = vcmp.eq.f32.partialorder %v904, 8.507059e+37
  %v906 = vand.u32 %v864, 2147483648
  %v907 = vor.u32 1.1754944e-38, %v906
  %v908 = vsel %vm905, %v907, %v903
  %v909 = vmul.f32 1.0, %v908
  %v910 = vtanh.pop %v850
  %v911 = vmul.f32 %v894, %v132
  %v912 = vmul.f32 %v879, %v910
  %v913 = vadd.f32 %v911, %v912
  %v914 = vtanh.pop %v913
  %v915 = vmul.f32 %v909, %v914
  %v916 = vpack.c.bf16 %v915, %v915
  %917 = vst [vmem:[#allocation2 + $0x4] sm:$0xf] %v916
  %v918 = vld [vmem:[#allocation2] sm:$0xf]
  %s919 = scalar_lea.vmem %s0, 16
  %v920 = vld [vmem:[%s919] sm:$0xff]
  %v921 = vld [vmem:[%s919 + $0x8] sm:$0xff]
  %v922 = vunpack.c.l.bf16 %v920
  %v923 = vunpack.c.h.bf16 %v920
  %v924 = vunpack.c.l.bf16 %v921
  %v925 = vunpack.c.h.bf16 %v921
  %926 = vmatpush.bf16.msra.mxu0 %v264
  %927 = vmatpush.bf16.msra.mxu0 %v260
  %928 = vmatpush.bf16.msra.mxu0 %v256
  %929 = vmatpush.bf16.msra.mxu0 %v252
  %930 = vmatpush.bf16.msra.mxu0 %v248
  %931 = vmatpush.bf16.msra.mxu0 %v244
  %932 = vmatpush.bf16.msra.mxu0 %v240
  %933 = vmatpush.bf16.msra.mxu0 %v236
  %934 = vmatmul.bf16.gmra.mxu0 %v918
  %v935 = vpop.f32.mrf.mxu0
  %v936 = vadd.f32 0.0, %v935
  %v937 = vpop.f32.mrf.mxu0
  %938 = vdwg.mxu0
  %939 = vmatpush.bf16.msra.mxu0 %v265
  %940 = vmatpush.bf16.msra.mxu0 %v261
  %941 = vmatpush.bf16.msra.mxu0 %v257
  %942 = vmatpush.bf16.msra.mxu0 %v253
  %943 = vmatpush.bf16.msra.mxu0 %v249
  %944 = vmatpush.bf16.msra.mxu0 %v245
  %945 = vmatpush.bf16.msra.mxu0 %v241
  %946 = vmatpush.bf16.msra.mxu0 %v237
  %947 = vmatmul.bf16.gmra.mxu0 %v918
  %v948 = vpop.f32.mrf.mxu0
  %v949 = vadd.f32 0.0, %v948
  %v950 = vpop.f32.mrf.mxu0
  %951 = vdwg.mxu0
  %952 = vmatpush.bf16.msra.mxu0 %v266
  %953 = vmatpush.bf16.msra.mxu0 %v262
  %954 = vmatpush.bf16.msra.mxu0 %v258
  %955 = vmatpush.bf16.msra.mxu0 %v254
  %956 = vmatpush.bf16.msra.mxu0 %v250
  %957 = vmatpush.bf16.msra.mxu0 %v246
  %958 = vmatpush.bf16.msra.mxu0 %v242
  %959 = vmatpush.bf16.msra.mxu0 %v238
  %960 = vmatmul.bf16.gmra.mxu0 %v918
  %v961 = vpop.f32.mrf.mxu0
  %v962 = vadd.f32 0.0, %v961
  %v963 = vpop.f32.mrf.mxu0
  %964 = vdwg.mxu0
  %965 = vmatpush.bf16.msra.mxu0 %v267
  %966 = vmatpush.bf16.msra.mxu0 %v263
  %967 = vmatpush.bf16.msra.mxu0 %v259
  %968 = vmatpush.bf16.msra.mxu0 %v255
  %969 = vmatpush.bf16.msra.mxu0 %v251
  %970 = vmatpush.bf16.msra.mxu0 %v247
  %971 = vmatpush.bf16.msra.mxu0 %v243
  %972 = vmatpush.bf16.msra.mxu0 %v239
  %973 = vmatmul.bf16.gmra.mxu0 %v918
  %v974 = vpop.f32.mrf.mxu0
  %v975 = vadd.f32 0.0, %v974
  %v976 = vpop.f32.mrf.mxu0
  %977 = vdwg.mxu0
  %v978 = vadd.f32 %v922, %v936
  %v979 = vadd.f32 %v923, %v949
  %v980 = vadd.f32 %v924, %v962
  %v981 = vadd.f32 %v925, %v975
  %v982 = vxor.u32 %v978, 2147483648
  %v983 = vxor.u32 %v979, 2147483648
  %v984 = vxor.u32 %v980, 2147483648
  %v985 = vmul.f32 %v982, 1.442695
  %v986 = vpow.pop %v985
  %v987 = vmul.f32 %v983, 1.442695
  %v988 = vpow.pop %v987
  %v989 = vmul.f32 %v984, 1.442695
  %v990 = vpow.pop %v989
  %v991 = vadd.f32 %v986, 1.0
  %v992 = vadd.f32 %v988, 1.0
  %v993 = vadd.f32 %v990, 1.0
  %v994 = vrcp.pop %v991
  %v995 = vmul.f32 %v991, %v994
  %v996 = vsub.f32 1.0, %v995
  %v997 = vmul.f32 %v994, %v996
  %v998 = vadd.f32 %v994, %v997
  %vm999 = vweird.f32 %v991
  %vm1000 = vweird.f32 %v994
  %vm1001 = vmor %vm999, %vm1000
  %v1002 = vsel %vm1001, %v994, %v998
  %v1003 = vand.u32 2147483647, %v991
  %vm1004 = vcmp.eq.f32.partialorder %v1003, 8.507059e+37
  %v1005 = vand.u32 %v991, 2147483648
  %v1006 = vor.u32 1.1754944e-38, %v1005
  %v1007 = vsel %vm1004, %v1006, %v1002
  %v1008 = vmul.f32 1.0, %v1007
  %v1009 = vrcp.pop %v992
  %v1010 = vmul.f32 %v992, %v1009
  %v1011 = vsub.f32 1.0, %v1010
  %v1012 = vmul.f32 %v1009, %v1011
  %v1013 = vadd.f32 %v1009, %v1012
  %vm1014 = vweird.f32 %v992
  %vm1015 = vweird.f32 %v1009
  %vm1016 = vmor %vm1014, %vm1015
  %v1017 = vsel %vm1016, %v1009, %v1013
  %v1018 = vand.u32 2147483647, %v992
  %vm1019 = vcmp.eq.f32.partialorder %v1018, 8.507059e+37
  %v1020 = vand.u32 %v992, 2147483648
  %v1021 = vor.u32 1.1754944e-38, %v1020
  %v1022 = vsel %vm1019, %v1021, %v1017
  %v1023 = vmul.f32 1.0, %v1022
  %v1024 = vrcp.pop %v993
  %v1025 = vmul.f32 %v993, %v1024
  %v1026 = vsub.f32 1.0, %v1025
  %v1027 = vmul.f32 %v1024, %v1026
  %v1028 = vadd.f32 %v1024, %v1027
  %vm1029 = vweird.f32 %v993
  %vm1030 = vweird.f32 %v1024
  %vm1031 = vmor %vm1029, %vm1030
  %v1032 = vsel %vm1031, %v1024, %v1028
  %v1033 = vand.u32 2147483647, %v993
  %vm1034 = vcmp.eq.f32.partialorder %v1033, 8.507059e+37
  %v1035 = vand.u32 %v993, 2147483648
  %v1036 = vor.u32 1.1754944e-38, %v1035
  %v1037 = vsel %vm1034, %v1036, %v1032
  %v1038 = vmul.f32 1.0, %v1037
  %v1039 = vtanh.pop %v981
  %v1040 = vmul.f32 %v1023, %v416
  %v1041 = vmul.f32 %v1008, %v1039
  %v1042 = vadd.f32 %v1040, %v1041
  %v1043 = vtanh.pop %v1042
  %v1044 = vmul.f32 %v1038, %v1043
  %v1045 = vpack.c.bf16 %v1044, %v1044
  %1046 = vst [vmem:[#allocation2] sm:$0xf] %v1045
  %v1047 = vld [vmem:[#allocation2] sm:$0xff]
  %v1049 = vunpack.c.l.b16 %v1047
  %v1050 = vunpack.c.h.b16 %v1047
  %v1051 = vpack.c.b16 %v1049, %v1049
  %v1052 = vpack.c.b16 %v1050, %v1050
  %1055 = vmatpush.bf16.msra.mxu0 %v649
  %1056 = vmatpush.bf16.msra.mxu0 %v645
  %1057 = vmatpush.bf16.msra.mxu0 %v641
  %1058 = vmatpush.bf16.msra.mxu0 %v637
  %1059 = vmatpush.bf16.msra.mxu0 %v633
  %1060 = vmatpush.bf16.msra.mxu0 %v629
  %1061 = vmatpush.bf16.msra.mxu0 %v625
  %1062 = vmatpush.bf16.msra.mxu0 %v621
  %1063 = vmatmul.bf16.gmra.mxu0 %v1051
  %v1064 = vpop.f32.mrf.mxu0
  %v1065 = vadd.f32 %v123, %v1064
  %v1066 = vpop.f32.mrf.mxu0
  %1067 = vdwg.mxu0
  %1068 = vmatpush.bf16.msra.mxu0 %v681
  %1069 = vmatpush.bf16.msra.mxu0 %v677
  %1070 = vmatpush.bf16.msra.mxu0 %v673
  %1071 = vmatpush.bf16.msra.mxu0 %v669
  %1072 = vmatpush.bf16.msra.mxu0 %v665
  %1073 = vmatpush.bf16.msra.mxu0 %v661
  %1074 = vmatpush.bf16.msra.mxu0 %v657
  %1075 = vmatpush.bf16.msra.mxu0 %v653
  %1076 = vmatmul.bf16.gmra.mxu0 %v1052
  %v1077 = vpop.f32.mrf.mxu0
  %v1078 = vadd.f32 %v1065, %v1077
  %v1079 = vpop.f32.mrf.mxu0
  %1080 = vdwg.mxu0
  %1081 = vmatpush.bf16.msra.mxu0 %v650
  %1082 = vmatpush.bf16.msra.mxu0 %v646
  %1083 = vmatpush.bf16.msra.mxu0 %v642
  %1084 = vmatpush.bf16.msra.mxu0 %v638
  %1085 = vmatpush.bf16.msra.mxu0 %v634
  %1086 = vmatpush.bf16.msra.mxu0 %v630
  %1087 = vmatpush.bf16.msra.mxu0 %v626
  %1088 = vmatpush.bf16.msra.mxu0 %v622
  %1089 = vmatmul.bf16.gmra.mxu0 %v1051
  %v1090 = vpop.f32.mrf.mxu0
  %v1091 = vadd.f32 %v124, %v1090
  %v1092 = vpop.f32.mrf.mxu0
  %1093 = vdwg.mxu0
  %1094 = vmatpush.bf16.msra.mxu0 %v682
  %1095 = vmatpush.bf16.msra.mxu0 %v678
  %1096 = vmatpush.bf16.msra.mxu0 %v674
  %1097 = vmatpush.bf16.msra.mxu0 %v670
  %1098 = vmatpush.bf16.msra.mxu0 %v666
  %1099 = vmatpush.bf16.msra.mxu0 %v662
  %1100 = vmatpush.bf16.msra.mxu0 %v658
  %1101 = vmatpush.bf16.msra.mxu0 %v654
  %1102 = vmatmul.bf16.gmra.mxu0 %v1052
  %v1103 = vpop.f32.mrf.mxu0
  %v1104 = vadd.f32 %v1091, %v1103
  %v1105 = vpop.f32.mrf.mxu0
  %1106 = vdwg.mxu0
  %1107 = vmatpush.bf16.msra.mxu0 %v651
  %1108 = vmatpush.bf16.msra.mxu0 %v647
  %1109 = vmatpush.bf16.msra.mxu0 %v643
  %1110 = vmatpush.bf16.msra.mxu0 %v639
  %1111 = vmatpush.bf16.msra.mxu0 %v635
  %1112 = vmatpush.bf16.msra.mxu0 %v631
  %1113 = vmatpush.bf16.msra.mxu0 %v627
  %1114 = vmatpush.bf16.msra.mxu0 %v623
  %1115 = vmatmul.bf16.gmra.mxu0 %v1051
  %v1116 = vpop.f32.mrf.mxu0
  %v1117 = vadd.f32 %v125, %v1116
  %v1118 = vpop.f32.mrf.mxu0
  %1119 = vdwg.mxu0
  %1120 = vmatpush.bf16.msra.mxu0 %v683
  %1121 = vmatpush.bf16.msra.mxu0 %v679
  %1122 = vmatpush.bf16.msra.mxu0 %v675
  %1123 = vmatpush.bf16.msra.mxu0 %v671
  %1124 = vmatpush.bf16.msra.mxu0 %v667
  %1125 = vmatpush.bf16.msra.mxu0 %v663
  %1126 = vmatpush.bf16.msra.mxu0 %v659
  %1127 = vmatpush.bf16.msra.mxu0 %v655
  %1128 = vmatmul.bf16.gmra.mxu0 %v1052
  %v1129 = vpop.f32.mrf.mxu0
  %v1130 = vadd.f32 %v1117, %v1129
  %v1131 = vpop.f32.mrf.mxu0
  %1132 = vdwg.mxu0
  %1133 = vmatpush.bf16.msra.mxu0 %v652
  %1134 = vmatpush.bf16.msra.mxu0 %v648
  %1135 = vmatpush.bf16.msra.mxu0 %v644
  %1136 = vmatpush.bf16.msra.mxu0 %v640
  %1137 = vmatpush.bf16.msra.mxu0 %v636
  %1138 = vmatpush.bf16.msra.mxu0 %v632
  %1139 = vmatpush.bf16.msra.mxu0 %v628
  %1140 = vmatpush.bf16.msra.mxu0 %v624
  %1141 = vmatmul.bf16.gmra.mxu0 %v1051
  %v1142 = vpop.f32.mrf.mxu0
  %v1143 = vadd.f32 %v126, %v1142
  %v1144 = vpop.f32.mrf.mxu0
  %1145 = vdwg.mxu0
  %1146 = vmatpush.bf16.msra.mxu0 %v684
  %1147 = vmatpush.bf16.msra.mxu0 %v680
  %1148 = vmatpush.bf16.msra.mxu0 %v676
  %1149 = vmatpush.bf16.msra.mxu0 %v672
  %1150 = vmatpush.bf16.msra.mxu0 %v668
  %1151 = vmatpush.bf16.msra.mxu0 %v664
  %1152 = vmatpush.bf16.msra.mxu0 %v660
  %1153 = vmatpush.bf16.msra.mxu0 %v656
  %1154 = vmatmul.bf16.gmra.mxu0 %v1052
  %v1155 = vpop.f32.mrf.mxu0
  %v1156 = vadd.f32 %v1143, %v1155
  %v1157 = vpop.f32.mrf.mxu0
  %1158 = vdwg.mxu0
  %v1159 = vxor.u32 %v1078, 2147483648
  %v1160 = vxor.u32 %v1104, 2147483648
  %v1161 = vxor.u32 %v1130, 2147483648
  %v1162 = vmul.f32 %v1159, 1.442695
  %v1163 = vpow.pop %v1162
  %v1164 = vmul.f32 %v1160, 1.442695
  %v1165 = vpow.pop %v1164
  %v1166 = vmul.f32 %v1161, 1.442695
  %v1167 = vpow.pop %v1166
  %v1168 = vadd.f32 %v1163, 1.0
  %v1169 = vadd.f32 %v1165, 1.0
  %v1170 = vadd.f32 %v1167, 1.0
  %v1171 = vrcp.pop %v1168
  %v1172 = vmul.f32 %v1168, %v1171
  %v1173 = vsub.f32 1.0, %v1172
  %v1174 = vmul.f32 %v1171, %v1173
  %v1175 = vadd.f32 %v1171, %v1174
  %vm1176 = vweird.f32 %v1168
  %vm1177 = vweird.f32 %v1171
  %vm1178 = vmor %vm1176, %vm1177
  %v1179 = vsel %vm1178, %v1171, %v1175
  %v1180 = vand.u32 2147483647, %v1168
  %vm1181 = vcmp.eq.f32.partialorder %v1180, 8.507059e+37
  %v1182 = vand.u32 %v1168, 2147483648
  %v1183 = vor.u32 1.1754944e-38, %v1182
  %v1184 = vsel %vm1181, %v1183, %v1179
  %v1185 = vmul.f32 1.0, %v1184
  %v1186 = vrcp.pop %v1169
  %v1187 = vmul.f32 %v1169, %v1186
  %v1188 = vsub.f32 1.0, %v1187
  %v1189 = vmul.f32 %v1186, %v1188
  %v1190 = vadd.f32 %v1186, %v1189
  %vm1191 = vweird.f32 %v1169
  %vm1192 = vweird.f32 %v1186
  %vm1193 = vmor %vm1191, %vm1192
  %v1194 = vsel %vm1193, %v1186, %v1190
  %v1195 = vand.u32 2147483647, %v1169
  %vm1196 = vcmp.eq.f32.partialorder %v1195, 8.507059e+37
  %v1197 = vand.u32 %v1169, 2147483648
  %v1198 = vor.u32 1.1754944e-38, %v1197
  %v1199 = vsel %vm1196, %v1198, %v1194
  %v1200 = vmul.f32 1.0, %v1199
  %v1201 = vrcp.pop %v1170
  %v1202 = vmul.f32 %v1170, %v1201
  %v1203 = vsub.f32 1.0, %v1202
  %v1204 = vmul.f32 %v1201, %v1203
  %v1205 = vadd.f32 %v1201, %v1204
  %vm1206 = vweird.f32 %v1170
  %vm1207 = vweird.f32 %v1201
  %vm1208 = vmor %vm1206, %vm1207
  %v1209 = vsel %vm1208, %v1201, %v1205
  %v1210 = vand.u32 2147483647, %v1170
  %vm1211 = vcmp.eq.f32.partialorder %v1210, 8.507059e+37
  %v1212 = vand.u32 %v1170, 2147483648
  %v1213 = vor.u32 1.1754944e-38, %v1212
  %v1214 = vsel %vm1211, %v1213, %v1209
  %v1215 = vmul.f32 1.0, %v1214
  %v1216 = vtanh.pop %v1156
  %v1217 = vmul.f32 %v1200, %v913
  %v1218 = vmul.f32 %v1185, %v1216
  %v1219 = vadd.f32 %v1217, %v1218
  %v1220 = vtanh.pop %v1219
  %v1221 = vmul.f32 %v1215, %v1220
  %v1222 = vpack.c.bf16 %v1221, %v1221
  %1223 = vst [vmem:[#allocation2 + $0x4] sm:$0xf] %v1222
  %v1224 = vld [vmem:[#allocation2] sm:$0xf]
  %s1225 = scalar_lea.vmem %s0, 32
  %v1226 = vld [vmem:[%s1225] sm:$0xff]
  %v1227 = vld [vmem:[%s1225 + $0x8] sm:$0xff]
  %v1228 = vunpack.c.l.bf16 %v1226
  %v1229 = vunpack.c.h.bf16 %v1226
  %v1230 = vunpack.c.l.bf16 %v1227
  %v1231 = vunpack.c.h.bf16 %v1227
  %1232 = vmatpush.bf16.msra.mxu0 %v264
  %1233 = vmatpush.bf16.msra.mxu0 %v260
  %1234 = vmatpush.bf16.msra.mxu0 %v256
  %1235 = vmatpush.bf16.msra.mxu0 %v252
  %1236 = vmatpush.bf16.msra.mxu0 %v248
  %1237 = vmatpush.bf16.msra.mxu0 %v244
  %1238 = vmatpush.bf16.msra.mxu0 %v240
  %1239 = vmatpush.bf16.msra.mxu0 %v236
  %1240 = vmatmul.bf16.gmra.mxu0 %v1224
  %v1241 = vpop.f32.mrf.mxu0
  %v1242 = vadd.f32 0.0, %v1241
  %v1243 = vpop.f32.mrf.mxu0
  %1244 = vdwg.mxu0
  %1245 = vmatpush.bf16.msra.mxu0 %v265
  %1246 = vmatpush.bf16.msra.mxu0 %v261
  %1247 = vmatpush.bf16.msra.mxu0 %v257
  %1248 = vmatpush.bf16.msra.mxu0 %v253
  %1249 = vmatpush.bf16.msra.mxu0 %v249
  %1250 = vmatpush.bf16.msra.mxu0 %v245
  %1251 = vmatpush.bf16.msra.mxu0 %v241
  %1252 = vmatpush.bf16.msra.mxu0 %v237
  %1253 = vmatmul.bf16.gmra.mxu0 %v1224
  %v1254 = vpop.f32.mrf.mxu0
  %v1255 = vadd.f32 0.0, %v1254
  %v1256 = vpop.f32.mrf.mxu0
  %1257 = vdwg.mxu0
  %1258 = vmatpush.bf16.msra.mxu0 %v266
  %1259 = vmatpush.bf16.msra.mxu0 %v262
  %1260 = vmatpush.bf16.msra.mxu0 %v258
  %1261 = vmatpush.bf16.msra.mxu0 %v254
  %1262 = vmatpush.bf16.msra.mxu0 %v250
  %1263 = vmatpush.bf16.msra.mxu0 %v246
  %1264 = vmatpush.bf16.msra.mxu0 %v242
  %1265 = vmatpush.bf16.msra.mxu0 %v238
  %1266 = vmatmul.bf16.gmra.mxu0 %v1224
  %v1267 = vpop.f32.mrf.mxu0
  %v1268 = vadd.f32 0.0, %v1267
  %v1269 = vpop.f32.mrf.mxu0
  %1270 = vdwg.mxu0
  %1271 = vmatpush.bf16.msra.mxu0 %v267
  %1272 = vmatpush.bf16.msra.mxu0 %v263
  %1273 = vmatpush.bf16.msra.mxu0 %v259
  %1274 = vmatpush.bf16.msra.mxu0 %v255
  %1275 = vmatpush.bf16.msra.mxu0 %v251
  %1276 = vmatpush.bf16.msra.mxu0 %v247
  %1277 = vmatpush.bf16.msra.mxu0 %v243
  %1278 = vmatpush.bf16.msra.mxu0 %v239
  %1279 = vmatmul.bf16.gmra.mxu0 %v1224
  %v1280 = vpop.f32.mrf.mxu0
  %v1281 = vadd.f32 0.0, %v1280
  %v1282 = vpop.f32.mrf.mxu0
  %1283 = vdwg.mxu0
  %v1284 = vadd.f32 %v1228, %v1242
  %v1285 = vadd.f32 %v1229, %v1255
  %v1286 = vadd.f32 %v1230, %v1268
  %v1287 = vadd.f32 %v1231, %v1281
  %v1288 = vxor.u32 %v1284, 2147483648
  %v1289 = vxor.u32 %v1285, 2147483648
  %v1290 = vxor.u32 %v1286, 2147483648
  %v1291 = vmul.f32 %v1288, 1.442695
  %v1292 = vpow.pop %v1291
  %v1293 = vmul.f32 %v1289, 1.442695
  %v1294 = vpow.pop %v1293
  %v1295 = vmul.f32 %v1290, 1.442695
  %v1296 = vpow.pop %v1295
  %v1297 = vadd.f32 %v1292, 1.0
  %v1298 = vadd.f32 %v1294, 1.0
  %v1299 = vadd.f32 %v1296, 1.0
  %v1300 = vrcp.pop %v1297
  %v1301 = vmul.f32 %v1297, %v1300
  %v1302 = vsub.f32 1.0, %v1301
  %v1303 = vmul.f32 %v1300, %v1302
  %v1304 = vadd.f32 %v1300, %v1303
  %vm1305 = vweird.f32 %v1297
  %vm1306 = vweird.f32 %v1300
  %vm1307 = vmor %vm1305, %vm1306
  %v1308 = vsel %vm1307, %v1300, %v1304
  %v1309 = vand.u32 2147483647, %v1297
  %vm1310 = vcmp.eq.f32.partialorder %v1309, 8.507059e+37
  %v1311 = vand.u32 %v1297, 2147483648
  %v1312 = vor.u32 1.1754944e-38, %v1311
  %v1313 = vsel %vm1310, %v1312, %v1308
  %v1314 = vmul.f32 1.0, %v1313
  %v1315 = vrcp.pop %v1298
  %v1316 = vmul.f32 %v1298, %v1315
  %v1317 = vsub.f32 1.0, %v1316
  %v1318 = vmul.f32 %v1315, %v1317
  %v1319 = vadd.f32 %v1315, %v1318
  %vm1320 = vweird.f32 %v1298
  %vm1321 = vweird.f32 %v1315
  %vm1322 = vmor %vm1320, %vm1321
  %v1323 = vsel %vm1322, %v1315, %v1319
  %v1324 = vand.u32 2147483647, %v1298
  %vm1325 = vcmp.eq.f32.partialorder %v1324, 8.507059e+37
  %v1326 = vand.u32 %v1298, 2147483648
  %v1327 = vor.u32 1.1754944e-38, %v1326
  %v1328 = vsel %vm1325, %v1327, %v1323
  %v1329 = vmul.f32 1.0, %v1328
  %v1330 = vrcp.pop %v1299
  %v1331 = vmul.f32 %v1299, %v1330
  %v1332 = vsub.f32 1.0, %v1331
  %v1333 = vmul.f32 %v1330, %v1332
  %v1334 = vadd.f32 %v1330, %v1333
  %vm1335 = vweird.f32 %v1299
  %vm1336 = vweird.f32 %v1330
  %vm1337 = vmor %vm1335, %vm1336
  %v1338 = vsel %vm1337, %v1330, %v1334
  %v1339 = vand.u32 2147483647, %v1299
  %vm1340 = vcmp.eq.f32.partialorder %v1339, 8.507059e+37
  %v1341 = vand.u32 %v1299, 2147483648
  %v1342 = vor.u32 1.1754944e-38, %v1341
  %v1343 = vsel %vm1340, %v1342, %v1338
  %v1344 = vmul.f32 1.0, %v1343
  %v1345 = vtanh.pop %v1287
  %v1346 = vmul.f32 %v1329, %v1042
  %v1347 = vmul.f32 %v1314, %v1345
  %v1348 = vadd.f32 %v1346, %v1347
  %v1349 = vtanh.pop %v1348
  %v1350 = vmul.f32 %v1344, %v1349
  %v1351 = vpack.c.bf16 %v1350, %v1350
  %1352 = vst [vmem:[#allocation2] sm:$0xf] %v1351
  %v1353 = vld [vmem:[#allocation2] sm:$0xff]
  %v1355 = vunpack.c.l.b16 %v1353
  %v1356 = vunpack.c.h.b16 %v1353
  %v1357 = vpack.c.b16 %v1355, %v1355
  %v1358 = vpack.c.b16 %v1356, %v1356
  %1361 = vmatpush.bf16.msra.mxu0 %v649
  %1362 = vmatpush.bf16.msra.mxu0 %v645
  %1363 = vmatpush.bf16.msra.mxu0 %v641
  %1364 = vmatpush.bf16.msra.mxu0 %v637
  %1365 = vmatpush.bf16.msra.mxu0 %v633
  %1366 = vmatpush.bf16.msra.mxu0 %v629
  %1367 = vmatpush.bf16.msra.mxu0 %v625
  %1368 = vmatpush.bf16.msra.mxu0 %v621
  %1369 = vmatmul.bf16.gmra.mxu0 %v1357
  %v1370 = vpop.f32.mrf.mxu0
  %v1371 = vadd.f32 %v123, %v1370
  %v1372 = vpop.f32.mrf.mxu0
  %1373 = vdwg.mxu0
  %1374 = vmatpush.bf16.msra.mxu0 %v681
  %1375 = vmatpush.bf16.msra.mxu0 %v677
  %1376 = vmatpush.bf16.msra.mxu0 %v673
  %1377 = vmatpush.bf16.msra.mxu0 %v669
  %1378 = vmatpush.bf16.msra.mxu0 %v665
  %1379 = vmatpush.bf16.msra.mxu0 %v661
  %1380 = vmatpush.bf16.msra.mxu0 %v657
  %1381 = vmatpush.bf16.msra.mxu0 %v653
  %1382 = vmatmul.bf16.gmra.mxu0 %v1358
  %v1383 = vpop.f32.mrf.mxu0
  %v1384 = vadd.f32 %v1371, %v1383
  %v1385 = vpop.f32.mrf.mxu0
  %1386 = vdwg.mxu0
  %1387 = vmatpush.bf16.msra.mxu0 %v650
  %1388 = vmatpush.bf16.msra.mxu0 %v646
  %1389 = vmatpush.bf16.msra.mxu0 %v642
  %1390 = vmatpush.bf16.msra.mxu0 %v638
  %1391 = vmatpush.bf16.msra.mxu0 %v634
  %1392 = vmatpush.bf16.msra.mxu0 %v630
  %1393 = vmatpush.bf16.msra.mxu0 %v626
  %1394 = vmatpush.bf16.msra.mxu0 %v622
  %1395 = vmatmul.bf16.gmra.mxu0 %v1357
  %v1396 = vpop.f32.mrf.mxu0
  %v1397 = vadd.f32 %v124, %v1396
  %v1398 = vpop.f32.mrf.mxu0
  %1399 = vdwg.mxu0
  %1400 = vmatpush.bf16.msra.mxu0 %v682
  %1401 = vmatpush.bf16.msra.mxu0 %v678
  %1402 = vmatpush.bf16.msra.mxu0 %v674
  %1403 = vmatpush.bf16.msra.mxu0 %v670
  %1404 = vmatpush.bf16.msra.mxu0 %v666
  %1405 = vmatpush.bf16.msra.mxu0 %v662
  %1406 = vmatpush.bf16.msra.mxu0 %v658
  %1407 = vmatpush.bf16.msra.mxu0 %v654
  %1408 = vmatmul.bf16.gmra.mxu0 %v1358
  %v1409 = vpop.f32.mrf.mxu0
  %v1410 = vadd.f32 %v1397, %v1409
  %v1411 = vpop.f32.mrf.mxu0
  %1412 = vdwg.mxu0
  %1413 = vmatpush.bf16.msra.mxu0 %v651
  %1414 = vmatpush.bf16.msra.mxu0 %v647
  %1415 = vmatpush.bf16.msra.mxu0 %v643
  %1416 = vmatpush.bf16.msra.mxu0 %v639
  %1417 = vmatpush.bf16.msra.mxu0 %v635
  %1418 = vmatpush.bf16.msra.mxu0 %v631
  %1419 = vmatpush.bf16.msra.mxu0 %v627
  %1420 = vmatpush.bf16.msra.mxu0 %v623
  %1421 = vmatmul.bf16.gmra.mxu0 %v1357
  %v1422 = vpop.f32.mrf.mxu0
  %v1423 = vadd.f32 %v125, %v1422
  %v1424 = vpop.f32.mrf.mxu0
  %1425 = vdwg.mxu0
  %1426 = vmatpush.bf16.msra.mxu0 %v683
  %1427 = vmatpush.bf16.msra.mxu0 %v679
  %1428 = vmatpush.bf16.msra.mxu0 %v675
  %1429 = vmatpush.bf16.msra.mxu0 %v671
  %1430 = vmatpush.bf16.msra.mxu0 %v667
  %1431 = vmatpush.bf16.msra.mxu0 %v663
  %1432 = vmatpush.bf16.msra.mxu0 %v659
  %1433 = vmatpush.bf16.msra.mxu0 %v655
  %1434 = vmatmul.bf16.gmra.mxu0 %v1358
  %v1435 = vpop.f32.mrf.mxu0
  %v1436 = vadd.f32 %v1423, %v1435
  %v1437 = vpop.f32.mrf.mxu0
  %1438 = vdwg.mxu0
  %1439 = vmatpush.bf16.msra.mxu0 %v652
  %1440 = vmatpush.bf16.msra.mxu0 %v648
  %1441 = vmatpush.bf16.msra.mxu0 %v644
  %1442 = vmatpush.bf16.msra.mxu0 %v640
  %1443 = vmatpush.bf16.msra.mxu0 %v636
  %1444 = vmatpush.bf16.msra.mxu0 %v632
  %1445 = vmatpush.bf16.msra.mxu0 %v628
  %1446 = vmatpush.bf16.msra.mxu0 %v624
  %1447 = vmatmul.bf16.gmra.mxu0 %v1357
  %v1448 = vpop.f32.mrf.mxu0
  %v1449 = vadd.f32 %v126, %v1448
  %v1450 = vpop.f32.mrf.mxu0
  %1451 = vdwg.mxu0
  %1452 = vmatpush.bf16.msra.mxu0 %v684
  %1453 = vmatpush.bf16.msra.mxu0 %v680
  %1454 = vmatpush.bf16.msra.mxu0 %v676
  %1455 = vmatpush.bf16.msra.mxu0 %v672
  %1456 = vmatpush.bf16.msra.mxu0 %v668
  %1457 = vmatpush.bf16.msra.mxu0 %v664
  %1458 = vmatpush.bf16.msra.mxu0 %v660
  %1459 = vmatpush.bf16.msra.mxu0 %v656
  %1460 = vmatmul.bf16.gmra.mxu0 %v1358
  %v1461 = vpop.f32.mrf.mxu0
  %v1462 = vadd.f32 %v1449, %v1461
  %v1463 = vpop.f32.mrf.mxu0
  %1464 = vdwg.mxu0
  %v1465 = vxor.u32 %v1384, 2147483648
  %v1466 = vxor.u32 %v1410, 2147483648
  %v1467 = vxor.u32 %v1436, 2147483648
  %v1468 = vmul.f32 %v1465, 1.442695
  %v1469 = vpow.pop %v1468
  %v1470 = vmul.f32 %v1466, 1.442695
  %v1471 = vpow.pop %v1470
  %v1472 = vmul.f32 %v1467, 1.442695
  %v1473 = vpow.pop %v1472
  %v1474 = vadd.f32 %v1469, 1.0
  %v1475 = vadd.f32 %v1471, 1.0
  %v1476 = vadd.f32 %v1473, 1.0
  %v1477 = vrcp.pop %v1474
  %v1478 = vmul.f32 %v1474, %v1477
  %v1479 = vsub.f32 1.0, %v1478
  %v1480 = vmul.f32 %v1477, %v1479
  %v1481 = vadd.f32 %v1477, %v1480
  %vm1482 = vweird.f32 %v1474
  %vm1483 = vweird.f32 %v1477
  %vm1484 = vmor %vm1482, %vm1483
  %v1485 = vsel %vm1484, %v1477, %v1481
  %v1486 = vand.u32 2147483647, %v1474
  %vm1487 = vcmp.eq.f32.partialorder %v1486, 8.507059e+37
  %v1488 = vand.u32 %v1474, 2147483648
  %v1489 = vor.u32 1.1754944e-38, %v1488
  %v1490 = vsel %vm1487, %v1489, %v1485
  %v1491 = vmul.f32 1.0, %v1490
  %v1492 = vrcp.pop %v1475
  %v1493 = vmul.f32 %v1475, %v1492
  %v1494 = vsub.f32 1.0, %v1493
  %v1495 = vmul.f32 %v1492, %v1494
  %v1496 = vadd.f32 %v1492, %v1495
  %vm1497 = vweird.f32 %v1475
  %vm1498 = vweird.f32 %v1492
  %vm1499 = vmor %vm1497, %vm1498
  %v1500 = vsel %vm1499, %v1492, %v1496
  %v1501 = vand.u32 2147483647, %v1475
  %vm1502 = vcmp.eq.f32.partialorder %v1501, 8.507059e+37
  %v1503 = vand.u32 %v1475, 2147483648
  %v1504 = vor.u32 1.1754944e-38, %v1503
  %v1505 = vsel %vm1502, %v1504, %v1500
  %v1506 = vmul.f32 1.0, %v1505
  %v1507 = vrcp.pop %v1476
  %v1508 = vmul.f32 %v1476, %v1507
  %v1509 = vsub.f32 1.0, %v1508
  %v1510 = vmul.f32 %v1507, %v1509
  %v1511 = vadd.f32 %v1507, %v1510
  %vm1512 = vweird.f32 %v1476
  %vm1513 = vweird.f32 %v1507
  %vm1514 = vmor %vm1512, %vm1513
  %v1515 = vsel %vm1514, %v1507, %v1511
  %v1516 = vand.u32 2147483647, %v1476
  %vm1517 = vcmp.eq.f32.partialorder %v1516, 8.507059e+37
  %v1518 = vand.u32 %v1476, 2147483648
  %v1519 = vor.u32 1.1754944e-38, %v1518
  %v1520 = vsel %vm1517, %v1519, %v1515
  %v1521 = vmul.f32 1.0, %v1520
  %v1522 = vtanh.pop %v1462
  %v1523 = vmul.f32 %v1506, %v1219
  %v1524 = vmul.f32 %v1491, %v1522
  %v1525 = vadd.f32 %v1523, %v1524
  %v1526 = vtanh.pop %v1525
  %v1527 = vmul.f32 %v1521, %v1526
  %v1528 = vpack.c.bf16 %v1527, %v1527
  %1529 = vst [vmem:[#allocation2 + $0x4] sm:$0xf] %v1528
  %v1530 = vld [vmem:[#allocation2] sm:$0xf]
  %s1531 = scalar_lea.vmem %s0, 48
  %v1532 = vld [vmem:[%s1531] sm:$0xff]
  %v1533 = vld [vmem:[%s1531 + $0x8] sm:$0xff]
  %v1534 = vunpack.c.l.bf16 %v1532
  %v1535 = vunpack.c.h.bf16 %v1532
  %v1536 = vunpack.c.l.bf16 %v1533
  %v1537 = vunpack.c.h.bf16 %v1533
  %1538 = vmatpush.bf16.msra.mxu0 %v264
  %1539 = vmatpush.bf16.msra.mxu0 %v260
  %1540 = vmatpush.bf16.msra.mxu0 %v256
  %1541 = vmatpush.bf16.msra.mxu0 %v252
  %1542 = vmatpush.bf16.msra.mxu0 %v248
  %1543 = vmatpush.bf16.msra.mxu0 %v244
  %1544 = vmatpush.bf16.msra.mxu0 %v240
  %1545 = vmatpush.bf16.msra.mxu0 %v236
  %1546 = vmatmul.bf16.gmra.mxu0 %v1530
  %v1547 = vpop.f32.mrf.mxu0
  %v1548 = vadd.f32 0.0, %v1547
  %v1549 = vpop.f32.mrf.mxu0
  %1550 = vdwg.mxu0
  %1551 = vmatpush.bf16.msra.mxu0 %v265
  %1552 = vmatpush.bf16.msra.mxu0 %v261
  %1553 = vmatpush.bf16.msra.mxu0 %v257
  %1554 = vmatpush.bf16.msra.mxu0 %v253
  %1555 = vmatpush.bf16.msra.mxu0 %v249
  %1556 = vmatpush.bf16.msra.mxu0 %v245
  %1557 = vmatpush.bf16.msra.mxu0 %v241
  %1558 = vmatpush.bf16.msra.mxu0 %v237
  %1559 = vmatmul.bf16.gmra.mxu0 %v1530
  %v1560 = vpop.f32.mrf.mxu0
  %v1561 = vadd.f32 0.0, %v1560
  %v1562 = vpop.f32.mrf.mxu0
  %1563 = vdwg.mxu0
  %1564 = vmatpush.bf16.msra.mxu0 %v266
  %1565 = vmatpush.bf16.msra.mxu0 %v262
  %1566 = vmatpush.bf16.msra.mxu0 %v258
  %1567 = vmatpush.bf16.msra.mxu0 %v254
  %1568 = vmatpush.bf16.msra.mxu0 %v250
  %1569 = vmatpush.bf16.msra.mxu0 %v246
  %1570 = vmatpush.bf16.msra.mxu0 %v242
  %1571 = vmatpush.bf16.msra.mxu0 %v238
  %1572 = vmatmul.bf16.gmra.mxu0 %v1530
  %v1573 = vpop.f32.mrf.mxu0
  %v1574 = vadd.f32 0.0, %v1573
  %v1575 = vpop.f32.mrf.mxu0
  %1576 = vdwg.mxu0
  %1577 = vmatpush.bf16.msra.mxu0 %v267
  %1578 = vmatpush.bf16.msra.mxu0 %v263
  %1579 = vmatpush.bf16.msra.mxu0 %v259
  %1580 = vmatpush.bf16.msra.mxu0 %v255
  %1581 = vmatpush.bf16.msra.mxu0 %v251
  %1582 = vmatpush.bf16.msra.mxu0 %v247
  %1583 = vmatpush.bf16.msra.mxu0 %v243
  %1584 = vmatpush.bf16.msra.mxu0 %v239
  %1585 = vmatmul.bf16.gmra.mxu0 %v1530
  %v1586 = vpop.f32.mrf.mxu0
  %v1587 = vadd.f32 0.0, %v1586
  %v1588 = vpop.f32.mrf.mxu0
  %1589 = vdwg.mxu0
  %v1590 = vadd.f32 %v1534, %v1548
  %v1591 = vadd.f32 %v1535, %v1561
  %v1592 = vadd.f32 %v1536, %v1574
  %v1593 = vadd.f32 %v1537, %v1587
  %v1594 = vxor.u32 %v1590, 2147483648
  %v1595 = vxor.u32 %v1591, 2147483648
  %v1596 = vxor.u32 %v1592, 2147483648
  %v1597 = vmul.f32 %v1594, 1.442695
  %v1598 = vpow.pop %v1597
  %v1599 = vmul.f32 %v1595, 1.442695
  %v1600 = vpow.pop %v1599
  %v1601 = vmul.f32 %v1596, 1.442695
  %v1602 = vpow.pop %v1601
  %v1603 = vadd.f32 %v1598, 1.0
  %v1604 = vadd.f32 %v1600, 1.0
  %v1605 = vadd.f32 %v1602, 1.0
  %v1606 = vrcp.pop %v1603
  %v1607 = vmul.f32 %v1603, %v1606
  %v1608 = vsub.f32 1.0, %v1607
  %v1609 = vmul.f32 %v1606, %v1608
  %v1610 = vadd.f32 %v1606, %v1609
  %vm1611 = vweird.f32 %v1603
  %vm1612 = vweird.f32 %v1606
  %vm1613 = vmor %vm1611, %vm1612
  %v1614 = vsel %vm1613, %v1606, %v1610
  %v1615 = vand.u32 2147483647, %v1603
  %vm1616 = vcmp.eq.f32.partialorder %v1615, 8.507059e+37
  %v1617 = vand.u32 %v1603, 2147483648
  %v1618 = vor.u32 1.1754944e-38, %v1617
  %v1619 = vsel %vm1616, %v1618, %v1614
  %v1620 = vmul.f32 1.0, %v1619
  %v1621 = vrcp.pop %v1604
  %v1622 = vmul.f32 %v1604, %v1621
  %v1623 = vsub.f32 1.0, %v1622
  %v1624 = vmul.f32 %v1621, %v1623
  %v1625 = vadd.f32 %v1621, %v1624
  %vm1626 = vweird.f32 %v1604
  %vm1627 = vweird.f32 %v1621
  %vm1628 = vmor %vm1626, %vm1627
  %v1629 = vsel %vm1628, %v1621, %v1625
  %v1630 = vand.u32 2147483647, %v1604
  %vm1631 = vcmp.eq.f32.partialorder %v1630, 8.507059e+37
  %v1632 = vand.u32 %v1604, 2147483648
  %v1633 = vor.u32 1.1754944e-38, %v1632
  %v1634 = vsel %vm1631, %v1633, %v1629
  %v1635 = vmul.f32 1.0, %v1634
  %v1636 = vrcp.pop %v1605
  %v1637 = vmul.f32 %v1605, %v1636
  %v1638 = vsub.f32 1.0, %v1637
  %v1639 = vmul.f32 %v1636, %v1638
  %v1640 = vadd.f32 %v1636, %v1639
  %vm1641 = vweird.f32 %v1605
  %vm1642 = vweird.f32 %v1636
  %vm1643 = vmor %vm1641, %vm1642
  %v1644 = vsel %vm1643, %v1636, %v1640
  %v1645 = vand.u32 2147483647, %v1605
  %vm1646 = vcmp.eq.f32.partialorder %v1645, 8.507059e+37
  %v1647 = vand.u32 %v1605, 2147483648
  %v1648 = vor.u32 1.1754944e-38, %v1647
  %v1649 = vsel %vm1646, %v1648, %v1644
  %v1650 = vmul.f32 1.0, %v1649
  %v1651 = vtanh.pop %v1593
  %v1652 = vmul.f32 %v1635, %v1348
  %v1653 = vmul.f32 %v1620, %v1651
  %v1654 = vadd.f32 %v1652, %v1653
  %v1655 = vtanh.pop %v1654
  %v1656 = vmul.f32 %v1650, %v1655
  %v1657 = vpack.c.bf16 %v1656, %v1656
  %1658 = vst [vmem:[#allocation2] sm:$0xf] %v1657
  %v1659 = vld [vmem:[#allocation2] sm:$0xff]
  %v1661 = vunpack.c.l.b16 %v1659
  %v1662 = vunpack.c.h.b16 %v1659
  %v1663 = vpack.c.b16 %v1661, %v1661
  %v1664 = vpack.c.b16 %v1662, %v1662
  %1667 = vmatpush.bf16.msra.mxu0 %v649
  %1668 = vmatpush.bf16.msra.mxu0 %v645
  %1669 = vmatpush.bf16.msra.mxu0 %v641
  %1670 = vmatpush.bf16.msra.mxu0 %v637
  %1671 = vmatpush.bf16.msra.mxu0 %v633
  %1672 = vmatpush.bf16.msra.mxu0 %v629
  %1673 = vmatpush.bf16.msra.mxu0 %v625
  %1674 = vmatpush.bf16.msra.mxu0 %v621
  %1675 = vmatmul.bf16.gmra.mxu0 %v1663
  %v1676 = vpop.f32.mrf.mxu0
  %v1677 = vadd.f32 %v123, %v1676
  %v1678 = vpop.f32.mrf.mxu0
  %1679 = vdwg.mxu0
  %1680 = vmatpush.bf16.msra.mxu0 %v681
  %1681 = vmatpush.bf16.msra.mxu0 %v677
  %1682 = vmatpush.bf16.msra.mxu0 %v673
  %1683 = vmatpush.bf16.msra.mxu0 %v669
  %1684 = vmatpush.bf16.msra.mxu0 %v665
  %1685 = vmatpush.bf16.msra.mxu0 %v661
  %1686 = vmatpush.bf16.msra.mxu0 %v657
  %1687 = vmatpush.bf16.msra.mxu0 %v653
  %1688 = vmatmul.bf16.gmra.mxu0 %v1664
  %v1689 = vpop.f32.mrf.mxu0
  %v1690 = vadd.f32 %v1677, %v1689
  %v1691 = vpop.f32.mrf.mxu0
  %1692 = vdwg.mxu0
  %1693 = vmatpush.bf16.msra.mxu0 %v650
  %1694 = vmatpush.bf16.msra.mxu0 %v646
  %1695 = vmatpush.bf16.msra.mxu0 %v642
  %1696 = vmatpush.bf16.msra.mxu0 %v638
  %1697 = vmatpush.bf16.msra.mxu0 %v634
  %1698 = vmatpush.bf16.msra.mxu0 %v630
  %1699 = vmatpush.bf16.msra.mxu0 %v626
  %1700 = vmatpush.bf16.msra.mxu0 %v622
  %1701 = vmatmul.bf16.gmra.mxu0 %v1663
  %v1702 = vpop.f32.mrf.mxu0
  %v1703 = vadd.f32 %v124, %v1702
  %v1704 = vpop.f32.mrf.mxu0
  %1705 = vdwg.mxu0
  %1706 = vmatpush.bf16.msra.mxu0 %v682
  %1707 = vmatpush.bf16.msra.mxu0 %v678
  %1708 = vmatpush.bf16.msra.mxu0 %v674
  %1709 = vmatpush.bf16.msra.mxu0 %v670
  %1710 = vmatpush.bf16.msra.mxu0 %v666
  %1711 = vmatpush.bf16.msra.mxu0 %v662
  %1712 = vmatpush.bf16.msra.mxu0 %v658
  %1713 = vmatpush.bf16.msra.mxu0 %v654
  %1714 = vmatmul.bf16.gmra.mxu0 %v1664
  %v1715 = vpop.f32.mrf.mxu0
  %v1716 = vadd.f32 %v1703, %v1715
  %v1717 = vpop.f32.mrf.mxu0
  %1718 = vdwg.mxu0
  %1719 = vmatpush.bf16.msra.mxu0 %v651
  %1720 = vmatpush.bf16.msra.mxu0 %v647
  %1721 = vmatpush.bf16.msra.mxu0 %v643
  %1722 = vmatpush.bf16.msra.mxu0 %v639
  %1723 = vmatpush.bf16.msra.mxu0 %v635
  %1724 = vmatpush.bf16.msra.mxu0 %v631
  %1725 = vmatpush.bf16.msra.mxu0 %v627
  %1726 = vmatpush.bf16.msra.mxu0 %v623
  %1727 = vmatmul.bf16.gmra.mxu0 %v1663
  %v1728 = vpop.f32.mrf.mxu0
  %v1729 = vadd.f32 %v125, %v1728
  %v1730 = vpop.f32.mrf.mxu0
  %1731 = vdwg.mxu0
  %1732 = vmatpush.bf16.msra.mxu0 %v683
  %1733 = vmatpush.bf16.msra.mxu0 %v679
  %1734 = vmatpush.bf16.msra.mxu0 %v675
  %1735 = vmatpush.bf16.msra.mxu0 %v671
  %1736 = vmatpush.bf16.msra.mxu0 %v667
  %1737 = vmatpush.bf16.msra.mxu0 %v663
  %1738 = vmatpush.bf16.msra.mxu0 %v659
  %1739 = vmatpush.bf16.msra.mxu0 %v655
  %1740 = vmatmul.bf16.gmra.mxu0 %v1664
  %v1741 = vpop.f32.mrf.mxu0
  %v1742 = vadd.f32 %v1729, %v1741
  %v1743 = vpop.f32.mrf.mxu0
  %1744 = vdwg.mxu0
  %1745 = vmatpush.bf16.msra.mxu0 %v652
  %1746 = vmatpush.bf16.msra.mxu0 %v648
  %1747 = vmatpush.bf16.msra.mxu0 %v644
  %1748 = vmatpush.bf16.msra.mxu0 %v640
  %1749 = vmatpush.bf16.msra.mxu0 %v636
  %1750 = vmatpush.bf16.msra.mxu0 %v632
  %1751 = vmatpush.bf16.msra.mxu0 %v628
  %1752 = vmatpush.bf16.msra.mxu0 %v624
  %1753 = vmatmul.bf16.gmra.mxu0 %v1663
  %v1754 = vpop.f32.mrf.mxu0
  %v1755 = vadd.f32 %v126, %v1754
  %v1756 = vpop.f32.mrf.mxu0
  %1757 = vdwg.mxu0
  %1758 = vmatpush.bf16.msra.mxu0 %v684
  %1759 = vmatpush.bf16.msra.mxu0 %v680
  %1760 = vmatpush.bf16.msra.mxu0 %v676
  %1761 = vmatpush.bf16.msra.mxu0 %v672
  %1762 = vmatpush.bf16.msra.mxu0 %v668
  %1763 = vmatpush.bf16.msra.mxu0 %v664
  %1764 = vmatpush.bf16.msra.mxu0 %v660
  %1765 = vmatpush.bf16.msra.mxu0 %v656
  %1766 = vmatmul.bf16.gmra.mxu0 %v1664
  %v1767 = vpop.f32.mrf.mxu0
  %v1768 = vadd.f32 %v1755, %v1767
  %v1769 = vpop.f32.mrf.mxu0
  %1770 = vdwg.mxu0
  %v1771 = vxor.u32 %v1690, 2147483648
  %v1772 = vxor.u32 %v1716, 2147483648
  %v1773 = vxor.u32 %v1742, 2147483648
  %v1774 = vmul.f32 %v1771, 1.442695
  %v1775 = vpow.pop %v1774
  %v1776 = vmul.f32 %v1772, 1.442695
  %v1777 = vpow.pop %v1776
  %v1778 = vmul.f32 %v1773, 1.442695
  %v1779 = vpow.pop %v1778
  %v1780 = vadd.f32 %v1775, 1.0
  %v1781 = vadd.f32 %v1777, 1.0
  %v1782 = vadd.f32 %v1779, 1.0
  %v1783 = vrcp.pop %v1780
  %v1784 = vmul.f32 %v1780, %v1783
  %v1785 = vsub.f32 1.0, %v1784
  %v1786 = vmul.f32 %v1783, %v1785
  %v1787 = vadd.f32 %v1783, %v1786
  %vm1788 = vweird.f32 %v1780
  %vm1789 = vweird.f32 %v1783
  %vm1790 = vmor %vm1788, %vm1789
  %v1791 = vsel %vm1790, %v1783, %v1787
  %v1792 = vand.u32 2147483647, %v1780
  %vm1793 = vcmp.eq.f32.partialorder %v1792, 8.507059e+37
  %v1794 = vand.u32 %v1780, 2147483648
  %v1795 = vor.u32 1.1754944e-38, %v1794
  %v1796 = vsel %vm1793, %v1795, %v1791
  %v1797 = vmul.f32 1.0, %v1796
  %v1798 = vrcp.pop %v1781
  %v1799 = vmul.f32 %v1781, %v1798
  %v1800 = vsub.f32 1.0, %v1799
  %v1801 = vmul.f32 %v1798, %v1800
  %v1802 = vadd.f32 %v1798, %v1801
  %vm1803 = vweird.f32 %v1781
  %vm1804 = vweird.f32 %v1798
  %vm1805 = vmor %vm1803, %vm1804
  %v1806 = vsel %vm1805, %v1798, %v1802
  %v1807 = vand.u32 2147483647, %v1781
  %vm1808 = vcmp.eq.f32.partialorder %v1807, 8.507059e+37
  %v1809 = vand.u32 %v1781, 2147483648
  %v1810 = vor.u32 1.1754944e-38, %v1809
  %v1811 = vsel %vm1808, %v1810, %v1806
  %v1812 = vmul.f32 1.0, %v1811
  %v1813 = vrcp.pop %v1782
  %v1814 = vmul.f32 %v1782, %v1813
  %v1815 = vsub.f32 1.0, %v1814
  %v1816 = vmul.f32 %v1813, %v1815
  %v1817 = vadd.f32 %v1813, %v1816
  %vm1818 = vweird.f32 %v1782
  %vm1819 = vweird.f32 %v1813
  %vm1820 = vmor %vm1818, %vm1819
  %v1821 = vsel %vm1820, %v1813, %v1817
  %v1822 = vand.u32 2147483647, %v1782
  %vm1823 = vcmp.eq.f32.partialorder %v1822, 8.507059e+37
  %v1824 = vand.u32 %v1782, 2147483648
  %v1825 = vor.u32 1.1754944e-38, %v1824
  %v1826 = vsel %vm1823, %v1825, %v1821
  %v1827 = vmul.f32 1.0, %v1826
  %v1828 = vtanh.pop %v1768
  %v1829 = vmul.f32 %v1812, %v1525
  %v1830 = vmul.f32 %v1797, %v1828
  %v1831 = vadd.f32 %v1829, %v1830
  %v1832 = vtanh.pop %v1831
  %v1833 = vmul.f32 %v1827, %v1832
  %v1834 = vpack.c.bf16 %v1833, %v1833
  %1835 = vst [vmem:[#allocation2 + $0x4] sm:$0xf] %v1834
  %v1836 = vld [vmem:[#allocation2] sm:$0xf]
  %s1837 = scalar_lea.vmem %s0, 64
  %v1838 = vld [vmem:[%s1837] sm:$0xff]
  %v1839 = vld [vmem:[%s1837 + $0x8] sm:$0xff]
  %v1840 = vunpack.c.l.bf16 %v1838
  %v1841 = vunpack.c.h.bf16 %v1838
  %v1842 = vunpack.c.l.bf16 %v1839
  %v1843 = vunpack.c.h.bf16 %v1839
  %1844 = vmatpush.bf16.msra.mxu0 %v264
  %1845 = vmatpush.bf16.msra.mxu0 %v260
  %1846 = vmatpush.bf16.msra.mxu0 %v256
  %1847 = vmatpush.bf16.msra.mxu0 %v252
  %1848 = vmatpush.bf16.msra.mxu0 %v248
  %1849 = vmatpush.bf16.msra.mxu0 %v244
  %1850 = vmatpush.bf16.msra.mxu0 %v240
  %1851 = vmatpush.bf16.msra.mxu0 %v236
  %1852 = vmatmul.bf16.gmra.mxu0 %v1836
  %v1853 = vpop.f32.mrf.mxu0
  %v1854 = vadd.f32 0.0, %v1853
  %v1855 = vpop.f32.mrf.mxu0
  %1856 = vdwg.mxu0
  %1857 = vmatpush.bf16.msra.mxu0 %v265
  %1858 = vmatpush.bf16.msra.mxu0 %v261
  %1859 = vmatpush.bf16.msra.mxu0 %v257
  %1860 = vmatpush.bf16.msra.mxu0 %v253
  %1861 = vmatpush.bf16.msra.mxu0 %v249
  %1862 = vmatpush.bf16.msra.mxu0 %v245
  %1863 = vmatpush.bf16.msra.mxu0 %v241
  %1864 = vmatpush.bf16.msra.mxu0 %v237
  %1865 = vmatmul.bf16.gmra.mxu0 %v1836
  %v1866 = vpop.f32.mrf.mxu0
  %v1867 = vadd.f32 0.0, %v1866
  %v1868 = vpop.f32.mrf.mxu0
  %1869 = vdwg.mxu0
  %1870 = vmatpush.bf16.msra.mxu0 %v266
  %1871 = vmatpush.bf16.msra.mxu0 %v262
  %1872 = vmatpush.bf16.msra.mxu0 %v258
  %1873 = vmatpush.bf16.msra.mxu0 %v254
  %1874 = vmatpush.bf16.msra.mxu0 %v250
  %1875 = vmatpush.bf16.msra.mxu0 %v246
  %1876 = vmatpush.bf16.msra.mxu0 %v242
  %1877 = vmatpush.bf16.msra.mxu0 %v238
  %1878 = vmatmul.bf16.gmra.mxu0 %v1836
  %v1879 = vpop.f32.mrf.mxu0
  %v1880 = vadd.f32 0.0, %v1879
  %v1881 = vpop.f32.mrf.mxu0
  %1882 = vdwg.mxu0
  %1883 = vmatpush.bf16.msra.mxu0 %v267
  %1884 = vmatpush.bf16.msra.mxu0 %v263
  %1885 = vmatpush.bf16.msra.mxu0 %v259
  %1886 = vmatpush.bf16.msra.mxu0 %v255
  %1887 = vmatpush.bf16.msra.mxu0 %v251
  %1888 = vmatpush.bf16.msra.mxu0 %v247
  %1889 = vmatpush.bf16.msra.mxu0 %v243
  %1890 = vmatpush.bf16.msra.mxu0 %v239
  %1891 = vmatmul.bf16.gmra.mxu0 %v1836
  %v1892 = vpop.f32.mrf.mxu0
  %v1893 = vadd.f32 0.0, %v1892
  %v1894 = vpop.f32.mrf.mxu0
  %1895 = vdwg.mxu0
  %v1896 = vadd.f32 %v1840, %v1854
  %v1897 = vadd.f32 %v1841, %v1867
  %v1898 = vadd.f32 %v1842, %v1880
  %v1899 = vadd.f32 %v1843, %v1893
  %v1900 = vxor.u32 %v1896, 2147483648
  %v1901 = vxor.u32 %v1897, 2147483648
  %v1902 = vxor.u32 %v1898, 2147483648
  %v1903 = vmul.f32 %v1900, 1.442695
  %v1904 = vpow.pop %v1903
  %v1905 = vmul.f32 %v1901, 1.442695
  %v1906 = vpow.pop %v1905
  %v1907 = vmul.f32 %v1902, 1.442695
  %v1908 = vpow.pop %v1907
  %v1909 = vadd.f32 %v1904, 1.0
  %v1910 = vadd.f32 %v1906, 1.0
  %v1911 = vadd.f32 %v1908, 1.0
  %v1912 = vrcp.pop %v1909
  %v1913 = vmul.f32 %v1909, %v1912
  %v1914 = vsub.f32 1.0, %v1913
  %v1915 = vmul.f32 %v1912, %v1914
  %v1916 = vadd.f32 %v1912, %v1915
  %vm1917 = vweird.f32 %v1909
  %vm1918 = vweird.f32 %v1912
  %vm1919 = vmor %vm1917, %vm1918
  %v1920 = vsel %vm1919, %v1912, %v1916
  %v1921 = vand.u32 2147483647, %v1909
  %vm1922 = vcmp.eq.f32.partialorder %v1921, 8.507059e+37
  %v1923 = vand.u32 %v1909, 2147483648
  %v1924 = vor.u32 1.1754944e-38, %v1923
  %v1925 = vsel %vm1922, %v1924, %v1920
  %v1926 = vmul.f32 1.0, %v1925
  %v1927 = vrcp.pop %v1910
  %v1928 = vmul.f32 %v1910, %v1927
  %v1929 = vsub.f32 1.0, %v1928
  %v1930 = vmul.f32 %v1927, %v1929
  %v1931 = vadd.f32 %v1927, %v1930
  %vm1932 = vweird.f32 %v1910
  %vm1933 = vweird.f32 %v1927
  %vm1934 = vmor %vm1932, %vm1933
  %v1935 = vsel %vm1934, %v1927, %v1931
  %v1936 = vand.u32 2147483647, %v1910
  %vm1937 = vcmp.eq.f32.partialorder %v1936, 8.507059e+37
  %v1938 = vand.u32 %v1910, 2147483648
  %v1939 = vor.u32 1.1754944e-38, %v1938
  %v1940 = vsel %vm1937, %v1939, %v1935
  %v1941 = vmul.f32 1.0, %v1940
  %v1942 = vrcp.pop %v1911
  %v1943 = vmul.f32 %v1911, %v1942
  %v1944 = vsub.f32 1.0, %v1943
  %v1945 = vmul.f32 %v1942, %v1944
  %v1946 = vadd.f32 %v1942, %v1945
  %vm1947 = vweird.f32 %v1911
  %vm1948 = vweird.f32 %v1942
  %vm1949 = vmor %vm1947, %vm1948
  %v1950 = vsel %vm1949, %v1942, %v1946
  %v1951 = vand.u32 2147483647, %v1911
  %vm1952 = vcmp.eq.f32.partialorder %v1951, 8.507059e+37
  %v1953 = vand.u32 %v1911, 2147483648
  %v1954 = vor.u32 1.1754944e-38, %v1953
  %v1955 = vsel %vm1952, %v1954, %v1950
  %v1956 = vmul.f32 1.0, %v1955
  %v1957 = vtanh.pop %v1899
  %v1958 = vmul.f32 %v1941, %v1654
  %v1959 = vmul.f32 %v1926, %v1957
  %v1960 = vadd.f32 %v1958, %v1959
  %v1961 = vtanh.pop %v1960
  %v1962 = vmul.f32 %v1956, %v1961
  %v1963 = vpack.c.bf16 %v1962, %v1962
  %1964 = vst [vmem:[#allocation2] sm:$0xf] %v1963
  %v1965 = vld [vmem:[#allocation2] sm:$0xff]
  %v1967 = vunpack.c.l.b16 %v1965
  %v1968 = vunpack.c.h.b16 %v1965
  %v1969 = vpack.c.b16 %v1967, %v1967
  %v1970 = vpack.c.b16 %v1968, %v1968
  %1973 = vmatpush.bf16.msra.mxu0 %v649
  %1974 = vmatpush.bf16.msra.mxu0 %v645
  %1975 = vmatpush.bf16.msra.mxu0 %v641
  %1976 = vmatpush.bf16.msra.mxu0 %v637
  %1977 = vmatpush.bf16.msra.mxu0 %v633
  %1978 = vmatpush.bf16.msra.mxu0 %v629
  %1979 = vmatpush.bf16.msra.mxu0 %v625
  %1980 = vmatpush.bf16.msra.mxu0 %v621
  %1981 = vmatmul.bf16.gmra.mxu0 %v1969
  %v1982 = vpop.f32.mrf.mxu0
  %v1983 = vadd.f32 %v123, %v1982
  %v1984 = vpop.f32.mrf.mxu0
  %1985 = vdwg.mxu0
  %1986 = vmatpush.bf16.msra.mxu0 %v681
  %1987 = vmatpush.bf16.msra.mxu0 %v677
  %1988 = vmatpush.bf16.msra.mxu0 %v673
  %1989 = vmatpush.bf16.msra.mxu0 %v669
  %1990 = vmatpush.bf16.msra.mxu0 %v665
  %1991 = vmatpush.bf16.msra.mxu0 %v661
  %1992 = vmatpush.bf16.msra.mxu0 %v657
  %1993 = vmatpush.bf16.msra.mxu0 %v653
  %1994 = vmatmul.bf16.gmra.mxu0 %v1970
  %v1995 = vpop.f32.mrf.mxu0
  %v1996 = vadd.f32 %v1983, %v1995
  %v1997 = vpop.f32.mrf.mxu0
  %1998 = vdwg.mxu0
  %1999 = vmatpush.bf16.msra.mxu0 %v650
  %2000 = vmatpush.bf16.msra.mxu0 %v646
  %2001 = vmatpush.bf16.msra.mxu0 %v642
  %2002 = vmatpush.bf16.msra.mxu0 %v638
  %2003 = vmatpush.bf16.msra.mxu0 %v634
  %2004 = vmatpush.bf16.msra.mxu0 %v630
  %2005 = vmatpush.bf16.msra.mxu0 %v626
  %2006 = vmatpush.bf16.msra.mxu0 %v622
  %2007 = vmatmul.bf16.gmra.mxu0 %v1969
  %v2008 = vpop.f32.mrf.mxu0
  %v2009 = vadd.f32 %v124, %v2008
  %v2010 = vpop.f32.mrf.mxu0
  %2011 = vdwg.mxu0
  %2012 = vmatpush.bf16.msra.mxu0 %v682
  %2013 = vmatpush.bf16.msra.mxu0 %v678
  %2014 = vmatpush.bf16.msra.mxu0 %v674
  %2015 = vmatpush.bf16.msra.mxu0 %v670
  %2016 = vmatpush.bf16.msra.mxu0 %v666
  %2017 = vmatpush.bf16.msra.mxu0 %v662
  %2018 = vmatpush.bf16.msra.mxu0 %v658
  %2019 = vmatpush.bf16.msra.mxu0 %v654
  %2020 = vmatmul.bf16.gmra.mxu0 %v1970
  %v2021 = vpop.f32.mrf.mxu0
  %v2022 = vadd.f32 %v2009, %v2021
  %v2023 = vpop.f32.mrf.mxu0
  %2024 = vdwg.mxu0
  %2025 = vmatpush.bf16.msra.mxu0 %v651
  %2026 = vmatpush.bf16.msra.mxu0 %v647
  %2027 = vmatpush.bf16.msra.mxu0 %v643
  %2028 = vmatpush.bf16.msra.mxu0 %v639
  %2029 = vmatpush.bf16.msra.mxu0 %v635
  %2030 = vmatpush.bf16.msra.mxu0 %v631
  %2031 = vmatpush.bf16.msra.mxu0 %v627
  %2032 = vmatpush.bf16.msra.mxu0 %v623
  %2033 = vmatmul.bf16.gmra.mxu0 %v1969
  %v2034 = vpop.f32.mrf.mxu0
  %v2035 = vadd.f32 %v125, %v2034
  %v2036 = vpop.f32.mrf.mxu0
  %2037 = vdwg.mxu0
  %2038 = vmatpush.bf16.msra.mxu0 %v683
  %2039 = vmatpush.bf16.msra.mxu0 %v679
  %2040 = vmatpush.bf16.msra.mxu0 %v675
  %2041 = vmatpush.bf16.msra.mxu0 %v671
  %2042 = vmatpush.bf16.msra.mxu0 %v667
  %2043 = vmatpush.bf16.msra.mxu0 %v663
  %2044 = vmatpush.bf16.msra.mxu0 %v659
  %2045 = vmatpush.bf16.msra.mxu0 %v655
  %2046 = vmatmul.bf16.gmra.mxu0 %v1970
  %v2047 = vpop.f32.mrf.mxu0
  %v2048 = vadd.f32 %v2035, %v2047
  %v2049 = vpop.f32.mrf.mxu0
  %2050 = vdwg.mxu0
  %2051 = vmatpush.bf16.msra.mxu0 %v652
  %2052 = vmatpush.bf16.msra.mxu0 %v648
  %2053 = vmatpush.bf16.msra.mxu0 %v644
  %2054 = vmatpush.bf16.msra.mxu0 %v640
  %2055 = vmatpush.bf16.msra.mxu0 %v636
  %2056 = vmatpush.bf16.msra.mxu0 %v632
  %2057 = vmatpush.bf16.msra.mxu0 %v628
  %2058 = vmatpush.bf16.msra.mxu0 %v624
  %2059 = vmatmul.bf16.gmra.mxu0 %v1969
  %v2060 = vpop.f32.mrf.mxu0
  %v2061 = vadd.f32 %v126, %v2060
  %v2062 = vpop.f32.mrf.mxu0
  %2063 = vdwg.mxu0
  %2064 = vmatpush.bf16.msra.mxu0 %v684
  %2065 = vmatpush.bf16.msra.mxu0 %v680
  %2066 = vmatpush.bf16.msra.mxu0 %v676
  %2067 = vmatpush.bf16.msra.mxu0 %v672
  %2068 = vmatpush.bf16.msra.mxu0 %v668
  %2069 = vmatpush.bf16.msra.mxu0 %v664
  %2070 = vmatpush.bf16.msra.mxu0 %v660
  %2071 = vmatpush.bf16.msra.mxu0 %v656
  %2072 = vmatmul.bf16.gmra.mxu0 %v1970
  %v2073 = vpop.f32.mrf.mxu0
  %v2074 = vadd.f32 %v2061, %v2073
  %v2075 = vpop.f32.mrf.mxu0
  %2076 = vdwg.mxu0
  %v2077 = vxor.u32 %v1996, 2147483648
  %v2078 = vxor.u32 %v2022, 2147483648
  %v2079 = vxor.u32 %v2048, 2147483648
  %v2080 = vmul.f32 %v2077, 1.442695
  %v2081 = vpow.pop %v2080
  %v2082 = vmul.f32 %v2078, 1.442695
  %v2083 = vpow.pop %v2082
  %v2084 = vmul.f32 %v2079, 1.442695
  %v2085 = vpow.pop %v2084
  %v2086 = vadd.f32 %v2081, 1.0
  %v2087 = vadd.f32 %v2083, 1.0
  %v2088 = vadd.f32 %v2085, 1.0
  %v2089 = vrcp.pop %v2086
  %v2090 = vmul.f32 %v2086, %v2089
  %v2091 = vsub.f32 1.0, %v2090
  %v2092 = vmul.f32 %v2089, %v2091
  %v2093 = vadd.f32 %v2089, %v2092
  %vm2094 = vweird.f32 %v2086
  %vm2095 = vweird.f32 %v2089
  %vm2096 = vmor %vm2094, %vm2095
  %v2097 = vsel %vm2096, %v2089, %v2093
  %v2098 = vand.u32 2147483647, %v2086
  %vm2099 = vcmp.eq.f32.partialorder %v2098, 8.507059e+37
  %v2100 = vand.u32 %v2086, 2147483648
  %v2101 = vor.u32 1.1754944e-38, %v2100
  %v2102 = vsel %vm2099, %v2101, %v2097
  %v2103 = vmul.f32 1.0, %v2102
  %v2104 = vrcp.pop %v2087
  %v2105 = vmul.f32 %v2087, %v2104
  %v2106 = vsub.f32 1.0, %v2105
  %v2107 = vmul.f32 %v2104, %v2106
  %v2108 = vadd.f32 %v2104, %v2107
  %vm2109 = vweird.f32 %v2087
  %vm2110 = vweird.f32 %v2104
  %vm2111 = vmor %vm2109, %vm2110
  %v2112 = vsel %vm2111, %v2104, %v2108
  %v2113 = vand.u32 2147483647, %v2087
  %vm2114 = vcmp.eq.f32.partialorder %v2113, 8.507059e+37
  %v2115 = vand.u32 %v2087, 2147483648
  %v2116 = vor.u32 1.1754944e-38, %v2115
  %v2117 = vsel %vm2114, %v2116, %v2112
  %v2118 = vmul.f32 1.0, %v2117
  %v2119 = vrcp.pop %v2088
  %v2120 = vmul.f32 %v2088, %v2119
  %v2121 = vsub.f32 1.0, %v2120
  %v2122 = vmul.f32 %v2119, %v2121
  %v2123 = vadd.f32 %v2119, %v2122
  %vm2124 = vweird.f32 %v2088
  %vm2125 = vweird.f32 %v2119
  %vm2126 = vmor %vm2124, %vm2125
  %v2127 = vsel %vm2126, %v2119, %v2123
  %v2128 = vand.u32 2147483647, %v2088
  %vm2129 = vcmp.eq.f32.partialorder %v2128, 8.507059e+37
  %v2130 = vand.u32 %v2088, 2147483648
  %v2131 = vor.u32 1.1754944e-38, %v2130
  %v2132 = vsel %vm2129, %v2131, %v2127
  %v2133 = vmul.f32 1.0, %v2132
  %v2134 = vtanh.pop %v2074
  %v2135 = vmul.f32 %v2118, %v1831
  %v2136 = vmul.f32 %v2103, %v2134
  %v2137 = vadd.f32 %v2135, %v2136
  %v2138 = vtanh.pop %v2137
  %v2139 = vmul.f32 %v2133, %v2138
  %v2140 = vpack.c.bf16 %v2139, %v2139
  %2141 = vst [vmem:[#allocation2 + $0x4] sm:$0xf] %v2140
  %v2142 = vld [vmem:[#allocation2] sm:$0xf]
  %s2143 = scalar_lea.vmem %s0, 80
  %v2144 = vld [vmem:[%s2143] sm:$0xff]
  %v2145 = vld [vmem:[%s2143 + $0x8] sm:$0xff]
  %v2146 = vunpack.c.l.bf16 %v2144
  %v2147 = vunpack.c.h.bf16 %v2144
  %v2148 = vunpack.c.l.bf16 %v2145
  %v2149 = vunpack.c.h.bf16 %v2145
  %2150 = vmatpush.bf16.msra.mxu0 %v264
  %2151 = vmatpush.bf16.msra.mxu0 %v260
  %2152 = vmatpush.bf16.msra.mxu0 %v256
  %2153 = vmatpush.bf16.msra.mxu0 %v252
  %2154 = vmatpush.bf16.msra.mxu0 %v248
  %2155 = vmatpush.bf16.msra.mxu0 %v244
  %2156 = vmatpush.bf16.msra.mxu0 %v240
  %2157 = vmatpush.bf16.msra.mxu0 %v236
  %2158 = vmatmul.bf16.gmra.mxu0 %v2142
  %v2159 = vpop.f32.mrf.mxu0
  %v2160 = vadd.f32 0.0, %v2159
  %v2161 = vpop.f32.mrf.mxu0
  %2162 = vdwg.mxu0
  %2163 = vmatpush.bf16.msra.mxu0 %v265
  %2164 = vmatpush.bf16.msra.mxu0 %v261
  %2165 = vmatpush.bf16.msra.mxu0 %v257
  %2166 = vmatpush.bf16.msra.mxu0 %v253
  %2167 = vmatpush.bf16.msra.mxu0 %v249
  %2168 = vmatpush.bf16.msra.mxu0 %v245
  %2169 = vmatpush.bf16.msra.mxu0 %v241
  %2170 = vmatpush.bf16.msra.mxu0 %v237
  %2171 = vmatmul.bf16.gmra.mxu0 %v2142
  %v2172 = vpop.f32.mrf.mxu0
  %v2173 = vadd.f32 0.0, %v2172
  %v2174 = vpop.f32.mrf.mxu0
  %2175 = vdwg.mxu0
  %2176 = vmatpush.bf16.msra.mxu0 %v266
  %2177 = vmatpush.bf16.msra.mxu0 %v262
  %2178 = vmatpush.bf16.msra.mxu0 %v258
  %2179 = vmatpush.bf16.msra.mxu0 %v254
  %2180 = vmatpush.bf16.msra.mxu0 %v250
  %2181 = vmatpush.bf16.msra.mxu0 %v246
  %2182 = vmatpush.bf16.msra.mxu0 %v242
  %2183 = vmatpush.bf16.msra.mxu0 %v238
  %2184 = vmatmul.bf16.gmra.mxu0 %v2142
  %v2185 = vpop.f32.mrf.mxu0
  %v2186 = vadd.f32 0.0, %v2185
  %v2187 = vpop.f32.mrf.mxu0
  %2188 = vdwg.mxu0
  %2189 = vmatpush.bf16.msra.mxu0 %v267
  %2190 = vmatpush.bf16.msra.mxu0 %v263
  %2191 = vmatpush.bf16.msra.mxu0 %v259
  %2192 = vmatpush.bf16.msra.mxu0 %v255
  %2193 = vmatpush.bf16.msra.mxu0 %v251
  %2194 = vmatpush.bf16.msra.mxu0 %v247
  %2195 = vmatpush.bf16.msra.mxu0 %v243
  %2196 = vmatpush.bf16.msra.mxu0 %v239
  %2197 = vmatmul.bf16.gmra.mxu0 %v2142
  %v2198 = vpop.f32.mrf.mxu0
  %v2199 = vadd.f32 0.0, %v2198
  %v2200 = vpop.f32.mrf.mxu0
  %2201 = vdwg.mxu0
  %v2202 = vadd.f32 %v2146, %v2160
  %v2203 = vadd.f32 %v2147, %v2173
  %v2204 = vadd.f32 %v2148, %v2186
  %v2205 = vadd.f32 %v2149, %v2199
  %v2206 = vxor.u32 %v2202, 2147483648
  %v2207 = vxor.u32 %v2203, 2147483648
  %v2208 = vxor.u32 %v2204, 2147483648
  %v2209 = vmul.f32 %v2206, 1.442695
  %v2210 = vpow.pop %v2209
  %v2211 = vmul.f32 %v2207, 1.442695
  %v2212 = vpow.pop %v2211
  %v2213 = vmul.f32 %v2208, 1.442695
  %v2214 = vpow.pop %v2213
  %v2215 = vadd.f32 %v2210, 1.0
  %v2216 = vadd.f32 %v2212, 1.0
  %v2217 = vadd.f32 %v2214, 1.0
  %v2218 = vrcp.pop %v2215
  %v2219 = vmul.f32 %v2215, %v2218
  %v2220 = vsub.f32 1.0, %v2219
  %v2221 = vmul.f32 %v2218, %v2220
  %v2222 = vadd.f32 %v2218, %v2221
  %vm2223 = vweird.f32 %v2215
  %vm2224 = vweird.f32 %v2218
  %vm2225 = vmor %vm2223, %vm2224
  %v2226 = vsel %vm2225, %v2218, %v2222
  %v2227 = vand.u32 2147483647, %v2215
  %vm2228 = vcmp.eq.f32.partialorder %v2227, 8.507059e+37
  %v2229 = vand.u32 %v2215, 2147483648
  %v2230 = vor.u32 1.1754944e-38, %v2229
  %v2231 = vsel %vm2228, %v2230, %v2226
  %v2232 = vmul.f32 1.0, %v2231
  %v2233 = vrcp.pop %v2216
  %v2234 = vmul.f32 %v2216, %v2233
  %v2235 = vsub.f32 1.0, %v2234
  %v2236 = vmul.f32 %v2233, %v2235
  %v2237 = vadd.f32 %v2233, %v2236
  %vm2238 = vweird.f32 %v2216
  %vm2239 = vweird.f32 %v2233
  %vm2240 = vmor %vm2238, %vm2239
  %v2241 = vsel %vm2240, %v2233, %v2237
  %v2242 = vand.u32 2147483647, %v2216
  %vm2243 = vcmp.eq.f32.partialorder %v2242, 8.507059e+37
  %v2244 = vand.u32 %v2216, 2147483648
  %v2245 = vor.u32 1.1754944e-38, %v2244
  %v2246 = vsel %vm2243, %v2245, %v2241
  %v2247 = vmul.f32 1.0, %v2246
  %v2248 = vrcp.pop %v2217
  %v2249 = vmul.f32 %v2217, %v2248
  %v2250 = vsub.f32 1.0, %v2249
  %v2251 = vmul.f32 %v2248, %v2250
  %v2252 = vadd.f32 %v2248, %v2251
  %vm2253 = vweird.f32 %v2217
  %vm2254 = vweird.f32 %v2248
  %vm2255 = vmor %vm2253, %vm2254
  %v2256 = vsel %vm2255, %v2248, %v2252
  %v2257 = vand.u32 2147483647, %v2217
  %vm2258 = vcmp.eq.f32.partialorder %v2257, 8.507059e+37
  %v2259 = vand.u32 %v2217, 2147483648
  %v2260 = vor.u32 1.1754944e-38, %v2259
  %v2261 = vsel %vm2258, %v2260, %v2256
  %v2262 = vmul.f32 1.0, %v2261
  %v2263 = vtanh.pop %v2205
  %v2264 = vmul.f32 %v2247, %v1960
  %v2265 = vmul.f32 %v2232, %v2263
  %v2266 = vadd.f32 %v2264, %v2265
  %v2267 = vtanh.pop %v2266
  %v2268 = vmul.f32 %v2262, %v2267
  %v2269 = vpack.c.bf16 %v2268, %v2268
  %2270 = vst [vmem:[#allocation2] sm:$0xf] %v2269
  %v2271 = vld [vmem:[#allocation2] sm:$0xff]
  %v2273 = vunpack.c.l.b16 %v2271
  %v2274 = vunpack.c.h.b16 %v2271
  %v2275 = vpack.c.b16 %v2273, %v2273
  %v2276 = vpack.c.b16 %v2274, %v2274
  %2279 = vmatpush.bf16.msra.mxu0 %v649
  %2280 = vmatpush.bf16.msra.mxu0 %v645
  %2281 = vmatpush.bf16.msra.mxu0 %v641
  %2282 = vmatpush.bf16.msra.mxu0 %v637
  %2283 = vmatpush.bf16.msra.mxu0 %v633
  %2284 = vmatpush.bf16.msra.mxu0 %v629
  %2285 = vmatpush.bf16.msra.mxu0 %v625
  %2286 = vmatpush.bf16.msra.mxu0 %v621
  %2287 = vmatmul.bf16.gmra.mxu0 %v2275
  %v2288 = vpop.f32.mrf.mxu0
  %v2289 = vadd.f32 %v123, %v2288
  %v2290 = vpop.f32.mrf.mxu0
  %2291 = vdwg.mxu0
  %2292 = vmatpush.bf16.msra.mxu0 %v681
  %2293 = vmatpush.bf16.msra.mxu0 %v677
  %2294 = vmatpush.bf16.msra.mxu0 %v673
  %2295 = vmatpush.bf16.msra.mxu0 %v669
  %2296 = vmatpush.bf16.msra.mxu0 %v665
  %2297 = vmatpush.bf16.msra.mxu0 %v661
  %2298 = vmatpush.bf16.msra.mxu0 %v657
  %2299 = vmatpush.bf16.msra.mxu0 %v653
  %2300 = vmatmul.bf16.gmra.mxu0 %v2276
  %v2301 = vpop.f32.mrf.mxu0
  %v2302 = vadd.f32 %v2289, %v2301
  %v2303 = vpop.f32.mrf.mxu0
  %2304 = vdwg.mxu0
  %2305 = vmatpush.bf16.msra.mxu0 %v650
  %2306 = vmatpush.bf16.msra.mxu0 %v646
  %2307 = vmatpush.bf16.msra.mxu0 %v642
  %2308 = vmatpush.bf16.msra.mxu0 %v638
  %2309 = vmatpush.bf16.msra.mxu0 %v634
  %2310 = vmatpush.bf16.msra.mxu0 %v630
  %2311 = vmatpush.bf16.msra.mxu0 %v626
  %2312 = vmatpush.bf16.msra.mxu0 %v622
  %2313 = vmatmul.bf16.gmra.mxu0 %v2275
  %v2314 = vpop.f32.mrf.mxu0
  %v2315 = vadd.f32 %v124, %v2314
  %v2316 = vpop.f32.mrf.mxu0
  %2317 = vdwg.mxu0
  %2318 = vmatpush.bf16.msra.mxu0 %v682
  %2319 = vmatpush.bf16.msra.mxu0 %v678
  %2320 = vmatpush.bf16.msra.mxu0 %v674
  %2321 = vmatpush.bf16.msra.mxu0 %v670
  %2322 = vmatpush.bf16.msra.mxu0 %v666
  %2323 = vmatpush.bf16.msra.mxu0 %v662
  %2324 = vmatpush.bf16.msra.mxu0 %v658
  %2325 = vmatpush.bf16.msra.mxu0 %v654
  %2326 = vmatmul.bf16.gmra.mxu0 %v2276
  %v2327 = vpop.f32.mrf.mxu0
  %v2328 = vadd.f32 %v2315, %v2327
  %v2329 = vpop.f32.mrf.mxu0
  %2330 = vdwg.mxu0
  %2331 = vmatpush.bf16.msra.mxu0 %v651
  %2332 = vmatpush.bf16.msra.mxu0 %v647
  %2333 = vmatpush.bf16.msra.mxu0 %v643
  %2334 = vmatpush.bf16.msra.mxu0 %v639
  %2335 = vmatpush.bf16.msra.mxu0 %v635
  %2336 = vmatpush.bf16.msra.mxu0 %v631
  %2337 = vmatpush.bf16.msra.mxu0 %v627
  %2338 = vmatpush.bf16.msra.mxu0 %v623
  %2339 = vmatmul.bf16.gmra.mxu0 %v2275
  %v2340 = vpop.f32.mrf.mxu0
  %v2341 = vadd.f32 %v125, %v2340
  %v2342 = vpop.f32.mrf.mxu0
  %2343 = vdwg.mxu0
  %2344 = vmatpush.bf16.msra.mxu0 %v683
  %2345 = vmatpush.bf16.msra.mxu0 %v679
  %2346 = vmatpush.bf16.msra.mxu0 %v675
  %2347 = vmatpush.bf16.msra.mxu0 %v671
  %2348 = vmatpush.bf16.msra.mxu0 %v667
  %2349 = vmatpush.bf16.msra.mxu0 %v663
  %2350 = vmatpush.bf16.msra.mxu0 %v659
  %2351 = vmatpush.bf16.msra.mxu0 %v655
  %2352 = vmatmul.bf16.gmra.mxu0 %v2276
  %v2353 = vpop.f32.mrf.mxu0
  %v2354 = vadd.f32 %v2341, %v2353
  %v2355 = vpop.f32.mrf.mxu0
  %2356 = vdwg.mxu0
  %2357 = vmatpush.bf16.msra.mxu0 %v652
  %2358 = vmatpush.bf16.msra.mxu0 %v648
  %2359 = vmatpush.bf16.msra.mxu0 %v644
  %2360 = vmatpush.bf16.msra.mxu0 %v640
  %2361 = vmatpush.bf16.msra.mxu0 %v636
  %2362 = vmatpush.bf16.msra.mxu0 %v632
  %2363 = vmatpush.bf16.msra.mxu0 %v628
  %2364 = vmatpush.bf16.msra.mxu0 %v624
  %2365 = vmatmul.bf16.gmra.mxu0 %v2275
  %v2366 = vpop.f32.mrf.mxu0
  %v2367 = vadd.f32 %v126, %v2366
  %v2368 = vpop.f32.mrf.mxu0
  %2369 = vdwg.mxu0
  %2370 = vmatpush.bf16.msra.mxu0 %v684
  %2371 = vmatpush.bf16.msra.mxu0 %v680
  %2372 = vmatpush.bf16.msra.mxu0 %v676
  %2373 = vmatpush.bf16.msra.mxu0 %v672
  %2374 = vmatpush.bf16.msra.mxu0 %v668
  %2375 = vmatpush.bf16.msra.mxu0 %v664
  %2376 = vmatpush.bf16.msra.mxu0 %v660
  %2377 = vmatpush.bf16.msra.mxu0 %v656
  %2378 = vmatmul.bf16.gmra.mxu0 %v2276
  %v2379 = vpop.f32.mrf.mxu0
  %v2380 = vadd.f32 %v2367, %v2379
  %v2381 = vpop.f32.mrf.mxu0
  %2382 = vdwg.mxu0
  %v2383 = vxor.u32 %v2302, 2147483648
  %v2384 = vxor.u32 %v2328, 2147483648
  %v2385 = vxor.u32 %v2354, 2147483648
  %v2386 = vmul.f32 %v2383, 1.442695
  %v2387 = vpow.pop %v2386
  %v2388 = vmul.f32 %v2384, 1.442695
  %v2389 = vpow.pop %v2388
  %v2390 = vmul.f32 %v2385, 1.442695
  %v2391 = vpow.pop %v2390
  %v2392 = vadd.f32 %v2387, 1.0
  %v2393 = vadd.f32 %v2389, 1.0
  %v2394 = vadd.f32 %v2391, 1.0
  %v2395 = vrcp.pop %v2392
  %v2396 = vmul.f32 %v2392, %v2395
  %v2397 = vsub.f32 1.0, %v2396
  %v2398 = vmul.f32 %v2395, %v2397
  %v2399 = vadd.f32 %v2395, %v2398
  %vm2400 = vweird.f32 %v2392
  %vm2401 = vweird.f32 %v2395
  %vm2402 = vmor %vm2400, %vm2401
  %v2403 = vsel %vm2402, %v2395, %v2399
  %v2404 = vand.u32 2147483647, %v2392
  %vm2405 = vcmp.eq.f32.partialorder %v2404, 8.507059e+37
  %v2406 = vand.u32 %v2392, 2147483648
  %v2407 = vor.u32 1.1754944e-38, %v2406
  %v2408 = vsel %vm2405, %v2407, %v2403
  %v2409 = vmul.f32 1.0, %v2408
  %v2410 = vrcp.pop %v2393
  %v2411 = vmul.f32 %v2393, %v2410
  %v2412 = vsub.f32 1.0, %v2411
  %v2413 = vmul.f32 %v2410, %v2412
  %v2414 = vadd.f32 %v2410, %v2413
  %vm2415 = vweird.f32 %v2393
  %vm2416 = vweird.f32 %v2410
  %vm2417 = vmor %vm2415, %vm2416
  %v2418 = vsel %vm2417, %v2410, %v2414
  %v2419 = vand.u32 2147483647, %v2393
  %vm2420 = vcmp.eq.f32.partialorder %v2419, 8.507059e+37
  %v2421 = vand.u32 %v2393, 2147483648
  %v2422 = vor.u32 1.1754944e-38, %v2421
  %v2423 = vsel %vm2420, %v2422, %v2418
  %v2424 = vmul.f32 1.0, %v2423
  %v2425 = vrcp.pop %v2394
  %v2426 = vmul.f32 %v2394, %v2425
  %v2427 = vsub.f32 1.0, %v2426
  %v2428 = vmul.f32 %v2425, %v2427
  %v2429 = vadd.f32 %v2425, %v2428
  %vm2430 = vweird.f32 %v2394
  %vm2431 = vweird.f32 %v2425
  %vm2432 = vmor %vm2430, %vm2431
  %v2433 = vsel %vm2432, %v2425, %v2429
  %v2434 = vand.u32 2147483647, %v2394
  %vm2435 = vcmp.eq.f32.partialorder %v2434, 8.507059e+37
  %v2436 = vand.u32 %v2394, 2147483648
  %v2437 = vor.u32 1.1754944e-38, %v2436
  %v2438 = vsel %vm2435, %v2437, %v2433
  %v2439 = vmul.f32 1.0, %v2438
  %v2440 = vtanh.pop %v2380
  %v2441 = vmul.f32 %v2424, %v2137
  %v2442 = vmul.f32 %v2409, %v2440
  %v2443 = vadd.f32 %v2441, %v2442
  %v2444 = vtanh.pop %v2443
  %v2445 = vmul.f32 %v2439, %v2444
  %v2446 = vpack.c.bf16 %v2445, %v2445
  %2447 = vst [vmem:[#allocation2 + $0x4] sm:$0xf] %v2446
  %v2448 = vld [vmem:[#allocation2] sm:$0xf]
  %s2449 = scalar_lea.vmem %s0, 96
  %v2450 = vld [vmem:[%s2449] sm:$0xff]
  %v2451 = vld [vmem:[%s2449 + $0x8] sm:$0xff]
  %v2452 = vunpack.c.l.bf16 %v2450
  %v2453 = vunpack.c.h.bf16 %v2450
  %v2454 = vunpack.c.l.bf16 %v2451
  %v2455 = vunpack.c.h.bf16 %v2451
  %2456 = vmatpush.bf16.msra.mxu0 %v264
  %2457 = vmatpush.bf16.msra.mxu0 %v260
  %2458 = vmatpush.bf16.msra.mxu0 %v256
  %2459 = vmatpush.bf16.msra.mxu0 %v252
  %2460 = vmatpush.bf16.msra.mxu0 %v248
  %2461 = vmatpush.bf16.msra.mxu0 %v244
  %2462 = vmatpush.bf16.msra.mxu0 %v240
  %2463 = vmatpush.bf16.msra.mxu0 %v236
  %2464 = vmatmul.bf16.gmra.mxu0 %v2448
  %v2465 = vpop.f32.mrf.mxu0
  %v2466 = vadd.f32 0.0, %v2465
  %v2467 = vpop.f32.mrf.mxu0
  %2468 = vdwg.mxu0
  %2469 = vmatpush.bf16.msra.mxu0 %v265
  %2470 = vmatpush.bf16.msra.mxu0 %v261
  %2471 = vmatpush.bf16.msra.mxu0 %v257
  %2472 = vmatpush.bf16.msra.mxu0 %v253
  %2473 = vmatpush.bf16.msra.mxu0 %v249
  %2474 = vmatpush.bf16.msra.mxu0 %v245
  %2475 = vmatpush.bf16.msra.mxu0 %v241
  %2476 = vmatpush.bf16.msra.mxu0 %v237
  %2477 = vmatmul.bf16.gmra.mxu0 %v2448
  %v2478 = vpop.f32.mrf.mxu0
  %v2479 = vadd.f32 0.0, %v2478
  %v2480 = vpop.f32.mrf.mxu0
  %2481 = vdwg.mxu0
  %2482 = vmatpush.bf16.msra.mxu0 %v266
  %2483 = vmatpush.bf16.msra.mxu0 %v262
  %2484 = vmatpush.bf16.msra.mxu0 %v258
  %2485 = vmatpush.bf16.msra.mxu0 %v254
  %2486 = vmatpush.bf16.msra.mxu0 %v250
  %2487 = vmatpush.bf16.msra.mxu0 %v246
  %2488 = vmatpush.bf16.msra.mxu0 %v242
  %2489 = vmatpush.bf16.msra.mxu0 %v238
  %2490 = vmatmul.bf16.gmra.mxu0 %v2448
  %v2491 = vpop.f32.mrf.mxu0
  %v2492 = vadd.f32 0.0, %v2491
  %v2493 = vpop.f32.mrf.mxu0
  %2494 = vdwg.mxu0
  %2495 = vmatpush.bf16.msra.mxu0 %v267
  %2496 = vmatpush.bf16.msra.mxu0 %v263
  %2497 = vmatpush.bf16.msra.mxu0 %v259
  %2498 = vmatpush.bf16.msra.mxu0 %v255
  %2499 = vmatpush.bf16.msra.mxu0 %v251
  %2500 = vmatpush.bf16.msra.mxu0 %v247
  %2501 = vmatpush.bf16.msra.mxu0 %v243
  %2502 = vmatpush.bf16.msra.mxu0 %v239
  %2503 = vmatmul.bf16.gmra.mxu0 %v2448
  %v2504 = vpop.f32.mrf.mxu0
  %v2505 = vadd.f32 0.0, %v2504
  %v2506 = vpop.f32.mrf.mxu0
  %2507 = vdwg.mxu0
  %v2508 = vadd.f32 %v2452, %v2466
  %v2509 = vadd.f32 %v2453, %v2479
  %v2510 = vadd.f32 %v2454, %v2492
  %v2511 = vadd.f32 %v2455, %v2505
  %v2512 = vxor.u32 %v2508, 2147483648
  %v2513 = vxor.u32 %v2509, 2147483648
  %v2514 = vxor.u32 %v2510, 2147483648
  %v2515 = vmul.f32 %v2512, 1.442695
  %v2516 = vpow.pop %v2515
  %v2517 = vmul.f32 %v2513, 1.442695
  %v2518 = vpow.pop %v2517
  %v2519 = vmul.f32 %v2514, 1.442695
  %v2520 = vpow.pop %v2519
  %v2521 = vadd.f32 %v2516, 1.0
  %v2522 = vadd.f32 %v2518, 1.0
  %v2523 = vadd.f32 %v2520, 1.0
  %v2524 = vrcp.pop %v2521
  %v2525 = vmul.f32 %v2521, %v2524
  %v2526 = vsub.f32 1.0, %v2525
  %v2527 = vmul.f32 %v2524, %v2526
  %v2528 = vadd.f32 %v2524, %v2527
  %vm2529 = vweird.f32 %v2521
  %vm2530 = vweird.f32 %v2524
  %vm2531 = vmor %vm2529, %vm2530
  %v2532 = vsel %vm2531, %v2524, %v2528
  %v2533 = vand.u32 2147483647, %v2521
  %vm2534 = vcmp.eq.f32.partialorder %v2533, 8.507059e+37
  %v2535 = vand.u32 %v2521, 2147483648
  %v2536 = vor.u32 1.1754944e-38, %v2535
  %v2537 = vsel %vm2534, %v2536, %v2532
  %v2538 = vmul.f32 1.0, %v2537
  %v2539 = vrcp.pop %v2522
  %v2540 = vmul.f32 %v2522, %v2539
  %v2541 = vsub.f32 1.0, %v2540
  %v2542 = vmul.f32 %v2539, %v2541
  %v2543 = vadd.f32 %v2539, %v2542
  %vm2544 = vweird.f32 %v2522
  %vm2545 = vweird.f32 %v2539
  %vm2546 = vmor %vm2544, %vm2545
  %v2547 = vsel %vm2546, %v2539, %v2543
  %v2548 = vand.u32 2147483647, %v2522
  %vm2549 = vcmp.eq.f32.partialorder %v2548, 8.507059e+37
  %v2550 = vand.u32 %v2522, 2147483648
  %v2551 = vor.u32 1.1754944e-38, %v2550
  %v2552 = vsel %vm2549, %v2551, %v2547
  %v2553 = vmul.f32 1.0, %v2552
  %v2554 = vrcp.pop %v2523
  %v2555 = vmul.f32 %v2523, %v2554
  %v2556 = vsub.f32 1.0, %v2555
  %v2557 = vmul.f32 %v2554, %v2556
  %v2558 = vadd.f32 %v2554, %v2557
  %vm2559 = vweird.f32 %v2523
  %vm2560 = vweird.f32 %v2554
  %vm2561 = vmor %vm2559, %vm2560
  %v2562 = vsel %vm2561, %v2554, %v2558
  %v2563 = vand.u32 2147483647, %v2523
  %vm2564 = vcmp.eq.f32.partialorder %v2563, 8.507059e+37
  %v2565 = vand.u32 %v2523, 2147483648
  %v2566 = vor.u32 1.1754944e-38, %v2565
  %v2567 = vsel %vm2564, %v2566, %v2562
  %v2568 = vmul.f32 1.0, %v2567
  %v2569 = vtanh.pop %v2511
  %v2570 = vmul.f32 %v2553, %v2266
  %v2571 = vmul.f32 %v2538, %v2569
  %v2572 = vadd.f32 %v2570, %v2571
  %v2573 = vtanh.pop %v2572
  %v2574 = vmul.f32 %v2568, %v2573
  %v2575 = vpack.c.bf16 %v2574, %v2574
  %2576 = vst [vmem:[#allocation2] sm:$0xf] %v2575
  %v2577 = vld [vmem:[#allocation2] sm:$0xff]
  %v2579 = vunpack.c.l.b16 %v2577
  %v2580 = vunpack.c.h.b16 %v2577
  %v2581 = vpack.c.b16 %v2579, %v2579
  %v2582 = vpack.c.b16 %v2580, %v2580
  %2585 = vmatpush.bf16.msra.mxu0 %v649
  %2586 = vmatpush.bf16.msra.mxu0 %v645
  %2587 = vmatpush.bf16.msra.mxu0 %v641
  %2588 = vmatpush.bf16.msra.mxu0 %v637
  %2589 = vmatpush.bf16.msra.mxu0 %v633
  %2590 = vmatpush.bf16.msra.mxu0 %v629
  %2591 = vmatpush.bf16.msra.mxu0 %v625
  %2592 = vmatpush.bf16.msra.mxu0 %v621
  %2593 = vmatmul.bf16.gmra.mxu0 %v2581
  %v2594 = vpop.f32.mrf.mxu0
  %v2595 = vadd.f32 %v123, %v2594
  %v2596 = vpop.f32.mrf.mxu0
  %2597 = vdwg.mxu0
  %2598 = vmatpush.bf16.msra.mxu0 %v681
  %2599 = vmatpush.bf16.msra.mxu0 %v677
  %2600 = vmatpush.bf16.msra.mxu0 %v673
  %2601 = vmatpush.bf16.msra.mxu0 %v669
  %2602 = vmatpush.bf16.msra.mxu0 %v665
  %2603 = vmatpush.bf16.msra.mxu0 %v661
  %2604 = vmatpush.bf16.msra.mxu0 %v657
  %2605 = vmatpush.bf16.msra.mxu0 %v653
  %2606 = vmatmul.bf16.gmra.mxu0 %v2582
  %v2607 = vpop.f32.mrf.mxu0
  %v2608 = vadd.f32 %v2595, %v2607
  %v2609 = vpop.f32.mrf.mxu0
  %2610 = vdwg.mxu0
  %2611 = vmatpush.bf16.msra.mxu0 %v650
  %2612 = vmatpush.bf16.msra.mxu0 %v646
  %2613 = vmatpush.bf16.msra.mxu0 %v642
  %2614 = vmatpush.bf16.msra.mxu0 %v638
  %2615 = vmatpush.bf16.msra.mxu0 %v634
  %2616 = vmatpush.bf16.msra.mxu0 %v630
  %2617 = vmatpush.bf16.msra.mxu0 %v626
  %2618 = vmatpush.bf16.msra.mxu0 %v622
  %2619 = vmatmul.bf16.gmra.mxu0 %v2581
  %v2620 = vpop.f32.mrf.mxu0
  %v2621 = vadd.f32 %v124, %v2620
  %v2622 = vpop.f32.mrf.mxu0
  %2623 = vdwg.mxu0
  %2624 = vmatpush.bf16.msra.mxu0 %v682
  %2625 = vmatpush.bf16.msra.mxu0 %v678
  %2626 = vmatpush.bf16.msra.mxu0 %v674
  %2627 = vmatpush.bf16.msra.mxu0 %v670
  %2628 = vmatpush.bf16.msra.mxu0 %v666
  %2629 = vmatpush.bf16.msra.mxu0 %v662
  %2630 = vmatpush.bf16.msra.mxu0 %v658
  %2631 = vmatpush.bf16.msra.mxu0 %v654
  %2632 = vmatmul.bf16.gmra.mxu0 %v2582
  %v2633 = vpop.f32.mrf.mxu0
  %v2634 = vadd.f32 %v2621, %v2633
  %v2635 = vpop.f32.mrf.mxu0
  %2636 = vdwg.mxu0
  %2637 = vmatpush.bf16.msra.mxu0 %v651
  %2638 = vmatpush.bf16.msra.mxu0 %v647
  %2639 = vmatpush.bf16.msra.mxu0 %v643
  %2640 = vmatpush.bf16.msra.mxu0 %v639
  %2641 = vmatpush.bf16.msra.mxu0 %v635
  %2642 = vmatpush.bf16.msra.mxu0 %v631
  %2643 = vmatpush.bf16.msra.mxu0 %v627
  %2644 = vmatpush.bf16.msra.mxu0 %v623
  %2645 = vmatmul.bf16.gmra.mxu0 %v2581
  %v2646 = vpop.f32.mrf.mxu0
  %v2647 = vadd.f32 %v125, %v2646
  %v2648 = vpop.f32.mrf.mxu0
  %2649 = vdwg.mxu0
  %2650 = vmatpush.bf16.msra.mxu0 %v683
  %2651 = vmatpush.bf16.msra.mxu0 %v679
  %2652 = vmatpush.bf16.msra.mxu0 %v675
  %2653 = vmatpush.bf16.msra.mxu0 %v671
  %2654 = vmatpush.bf16.msra.mxu0 %v667
  %2655 = vmatpush.bf16.msra.mxu0 %v663
  %2656 = vmatpush.bf16.msra.mxu0 %v659
  %2657 = vmatpush.bf16.msra.mxu0 %v655
  %2658 = vmatmul.bf16.gmra.mxu0 %v2582
  %v2659 = vpop.f32.mrf.mxu0
  %v2660 = vadd.f32 %v2647, %v2659
  %v2661 = vpop.f32.mrf.mxu0
  %2662 = vdwg.mxu0
  %2663 = vmatpush.bf16.msra.mxu0 %v652
  %2664 = vmatpush.bf16.msra.mxu0 %v648
  %2665 = vmatpush.bf16.msra.mxu0 %v644
  %2666 = vmatpush.bf16.msra.mxu0 %v640
  %2667 = vmatpush.bf16.msra.mxu0 %v636
  %2668 = vmatpush.bf16.msra.mxu0 %v632
  %2669 = vmatpush.bf16.msra.mxu0 %v628
  %2670 = vmatpush.bf16.msra.mxu0 %v624
  %2671 = vmatmul.bf16.gmra.mxu0 %v2581
  %v2672 = vpop.f32.mrf.mxu0
  %v2673 = vadd.f32 %v126, %v2672
  %v2674 = vpop.f32.mrf.mxu0
  %2675 = vdwg.mxu0
  %2676 = vmatpush.bf16.msra.mxu0 %v684
  %2677 = vmatpush.bf16.msra.mxu0 %v680
  %2678 = vmatpush.bf16.msra.mxu0 %v676
  %2679 = vmatpush.bf16.msra.mxu0 %v672
  %2680 = vmatpush.bf16.msra.mxu0 %v668
  %2681 = vmatpush.bf16.msra.mxu0 %v664
  %2682 = vmatpush.bf16.msra.mxu0 %v660
  %2683 = vmatpush.bf16.msra.mxu0 %v656
  %2684 = vmatmul.bf16.gmra.mxu0 %v2582
  %v2685 = vpop.f32.mrf.mxu0
  %v2686 = vadd.f32 %v2673, %v2685
  %v2687 = vpop.f32.mrf.mxu0
  %2688 = vdwg.mxu0
  %v2689 = vxor.u32 %v2608, 2147483648
  %v2690 = vxor.u32 %v2634, 2147483648
  %v2691 = vxor.u32 %v2660, 2147483648
  %v2692 = vmul.f32 %v2689, 1.442695
  %v2693 = vpow.pop %v2692
  %v2694 = vmul.f32 %v2690, 1.442695
  %v2695 = vpow.pop %v2694
  %v2696 = vmul.f32 %v2691, 1.442695
  %v2697 = vpow.pop %v2696
  %v2698 = vadd.f32 %v2693, 1.0
  %v2699 = vadd.f32 %v2695, 1.0
  %v2700 = vadd.f32 %v2697, 1.0
  %v2701 = vrcp.pop %v2698
  %v2702 = vmul.f32 %v2698, %v2701
  %v2703 = vsub.f32 1.0, %v2702
  %v2704 = vmul.f32 %v2701, %v2703
  %v2705 = vadd.f32 %v2701, %v2704
  %vm2706 = vweird.f32 %v2698
  %vm2707 = vweird.f32 %v2701
  %vm2708 = vmor %vm2706, %vm2707
  %v2709 = vsel %vm2708, %v2701, %v2705
  %v2710 = vand.u32 2147483647, %v2698
  %vm2711 = vcmp.eq.f32.partialorder %v2710, 8.507059e+37
  %v2712 = vand.u32 %v2698, 2147483648
  %v2713 = vor.u32 1.1754944e-38, %v2712
  %v2714 = vsel %vm2711, %v2713, %v2709
  %v2715 = vmul.f32 1.0, %v2714
  %v2716 = vrcp.pop %v2699
  %v2717 = vmul.f32 %v2699, %v2716
  %v2718 = vsub.f32 1.0, %v2717
  %v2719 = vmul.f32 %v2716, %v2718
  %v2720 = vadd.f32 %v2716, %v2719
  %vm2721 = vweird.f32 %v2699
  %vm2722 = vweird.f32 %v2716
  %vm2723 = vmor %vm2721, %vm2722
  %v2724 = vsel %vm2723, %v2716, %v2720
  %v2725 = vand.u32 2147483647, %v2699
  %vm2726 = vcmp.eq.f32.partialorder %v2725, 8.507059e+37
  %v2727 = vand.u32 %v2699, 2147483648
  %v2728 = vor.u32 1.1754944e-38, %v2727
  %v2729 = vsel %vm2726, %v2728, %v2724
  %v2730 = vmul.f32 1.0, %v2729
  %v2731 = vrcp.pop %v2700
  %v2732 = vmul.f32 %v2700, %v2731
  %v2733 = vsub.f32 1.0, %v2732
  %v2734 = vmul.f32 %v2731, %v2733
  %v2735 = vadd.f32 %v2731, %v2734
  %vm2736 = vweird.f32 %v2700
  %vm2737 = vweird.f32 %v2731
  %vm2738 = vmor %vm2736, %vm2737
  %v2739 = vsel %vm2738, %v2731, %v2735
  %v2740 = vand.u32 2147483647, %v2700
  %vm2741 = vcmp.eq.f32.partialorder %v2740, 8.507059e+37
  %v2742 = vand.u32 %v2700, 2147483648
  %v2743 = vor.u32 1.1754944e-38, %v2742
  %v2744 = vsel %vm2741, %v2743, %v2739
  %v2745 = vmul.f32 1.0, %v2744
  %v2746 = vtanh.pop %v2686
  %v2747 = vmul.f32 %v2730, %v2443
  %v2748 = vmul.f32 %v2715, %v2746
  %v2749 = vadd.f32 %v2747, %v2748
  %v2750 = vtanh.pop %v2749
  %v2751 = vmul.f32 %v2745, %v2750
  %v2752 = vpack.c.bf16 %v2751, %v2751
  %2753 = vst [vmem:[#allocation2 + $0x4] sm:$0xf] %v2752
  %v2754 = vld [vmem:[#allocation2] sm:$0xf]
  %s2755 = scalar_lea.vmem %s0, 112
  %v2756 = vld [vmem:[%s2755] sm:$0xff]
  %v2757 = vld [vmem:[%s2755 + $0x8] sm:$0xff]
  %v2758 = vunpack.c.l.bf16 %v2756
  %v2759 = vunpack.c.h.bf16 %v2756
  %v2760 = vunpack.c.l.bf16 %v2757
  %v2761 = vunpack.c.h.bf16 %v2757
  %2762 = vmatpush.bf16.msra.mxu0 %v264
  %2763 = vmatpush.bf16.msra.mxu0 %v260
  %2764 = vmatpush.bf16.msra.mxu0 %v256
  %2765 = vmatpush.bf16.msra.mxu0 %v252
  %2766 = vmatpush.bf16.msra.mxu0 %v248
  %2767 = vmatpush.bf16.msra.mxu0 %v244
  %2768 = vmatpush.bf16.msra.mxu0 %v240
  %2769 = vmatpush.bf16.msra.mxu0 %v236
  %2770 = vmatmul.bf16.gmra.mxu0 %v2754
  %v2771 = vpop.f32.mrf.mxu0
  %v2772 = vadd.f32 0.0, %v2771
  %v2773 = vpop.f32.mrf.mxu0
  %2774 = vdwg.mxu0
  %2775 = vmatpush.bf16.msra.mxu0 %v265
  %2776 = vmatpush.bf16.msra.mxu0 %v261
  %2777 = vmatpush.bf16.msra.mxu0 %v257
  %2778 = vmatpush.bf16.msra.mxu0 %v253
  %2779 = vmatpush.bf16.msra.mxu0 %v249
  %2780 = vmatpush.bf16.msra.mxu0 %v245
  %2781 = vmatpush.bf16.msra.mxu0 %v241
  %2782 = vmatpush.bf16.msra.mxu0 %v237
  %2783 = vmatmul.bf16.gmra.mxu0 %v2754
  %v2784 = vpop.f32.mrf.mxu0
  %v2785 = vadd.f32 0.0, %v2784
  %v2786 = vpop.f32.mrf.mxu0
  %2787 = vdwg.mxu0
  %2788 = vmatpush.bf16.msra.mxu0 %v266
  %2789 = vmatpush.bf16.msra.mxu0 %v262
  %2790 = vmatpush.bf16.msra.mxu0 %v258
  %2791 = vmatpush.bf16.msra.mxu0 %v254
  %2792 = vmatpush.bf16.msra.mxu0 %v250
  %2793 = vmatpush.bf16.msra.mxu0 %v246
  %2794 = vmatpush.bf16.msra.mxu0 %v242
  %2795 = vmatpush.bf16.msra.mxu0 %v238
  %2796 = vmatmul.bf16.gmra.mxu0 %v2754
  %v2797 = vpop.f32.mrf.mxu0
  %v2798 = vadd.f32 0.0, %v2797
  %v2799 = vpop.f32.mrf.mxu0
  %2800 = vdwg.mxu0
  %2801 = vmatpush.bf16.msra.mxu0 %v267
  %2802 = vmatpush.bf16.msra.mxu0 %v263
  %2803 = vmatpush.bf16.msra.mxu0 %v259
  %2804 = vmatpush.bf16.msra.mxu0 %v255
  %2805 = vmatpush.bf16.msra.mxu0 %v251
  %2806 = vmatpush.bf16.msra.mxu0 %v247
  %2807 = vmatpush.bf16.msra.mxu0 %v243
  %2808 = vmatpush.bf16.msra.mxu0 %v239
  %2809 = vmatmul.bf16.gmra.mxu0 %v2754
  %v2810 = vpop.f32.mrf.mxu0
  %v2811 = vadd.f32 0.0, %v2810
  %v2812 = vpop.f32.mrf.mxu0
  %2813 = vdwg.mxu0
  %v2814 = vadd.f32 %v2758, %v2772
  %v2815 = vadd.f32 %v2759, %v2785
  %v2816 = vadd.f32 %v2760, %v2798
  %v2817 = vadd.f32 %v2761, %v2811
  %v2818 = vxor.u32 %v2814, 2147483648
  %v2819 = vxor.u32 %v2815, 2147483648
  %v2820 = vxor.u32 %v2816, 2147483648
  %v2821 = vmul.f32 %v2818, 1.442695
  %v2822 = vpow.pop %v2821
  %v2823 = vmul.f32 %v2819, 1.442695
  %v2824 = vpow.pop %v2823
  %v2825 = vmul.f32 %v2820, 1.442695
  %v2826 = vpow.pop %v2825
  %v2827 = vadd.f32 %v2822, 1.0
  %v2828 = vadd.f32 %v2824, 1.0
  %v2829 = vadd.f32 %v2826, 1.0
  %v2830 = vrcp.pop %v2827
  %v2831 = vmul.f32 %v2827, %v2830
  %v2832 = vsub.f32 1.0, %v2831
  %v2833 = vmul.f32 %v2830, %v2832
  %v2834 = vadd.f32 %v2830, %v2833
  %vm2835 = vweird.f32 %v2827
  %vm2836 = vweird.f32 %v2830
  %vm2837 = vmor %vm2835, %vm2836
  %v2838 = vsel %vm2837, %v2830, %v2834
  %v2839 = vand.u32 2147483647, %v2827
  %vm2840 = vcmp.eq.f32.partialorder %v2839, 8.507059e+37
  %v2841 = vand.u32 %v2827, 2147483648
  %v2842 = vor.u32 1.1754944e-38, %v2841
  %v2843 = vsel %vm2840, %v2842, %v2838
  %v2844 = vmul.f32 1.0, %v2843
  %v2845 = vrcp.pop %v2828
  %v2846 = vmul.f32 %v2828, %v2845
  %v2847 = vsub.f32 1.0, %v2846
  %v2848 = vmul.f32 %v2845, %v2847
  %v2849 = vadd.f32 %v2845, %v2848
  %vm2850 = vweird.f32 %v2828
  %vm2851 = vweird.f32 %v2845
  %vm2852 = vmor %vm2850, %vm2851
  %v2853 = vsel %vm2852, %v2845, %v2849
  %v2854 = vand.u32 2147483647, %v2828
  %vm2855 = vcmp.eq.f32.partialorder %v2854, 8.507059e+37
  %v2856 = vand.u32 %v2828, 2147483648
  %v2857 = vor.u32 1.1754944e-38, %v2856
  %v2858 = vsel %vm2855, %v2857, %v2853
  %v2859 = vmul.f32 1.0, %v2858
  %v2860 = vrcp.pop %v2829
  %v2861 = vmul.f32 %v2829, %v2860
  %v2862 = vsub.f32 1.0, %v2861
  %v2863 = vmul.f32 %v2860, %v2862
  %v2864 = vadd.f32 %v2860, %v2863
  %vm2865 = vweird.f32 %v2829
  %vm2866 = vweird.f32 %v2860
  %vm2867 = vmor %vm2865, %vm2866
  %v2868 = vsel %vm2867, %v2860, %v2864
  %v2869 = vand.u32 2147483647, %v2829
  %vm2870 = vcmp.eq.f32.partialorder %v2869, 8.507059e+37
  %v2871 = vand.u32 %v2829, 2147483648
  %v2872 = vor.u32 1.1754944e-38, %v2871
  %v2873 = vsel %vm2870, %v2872, %v2868
  %v2874 = vmul.f32 1.0, %v2873
  %v2875 = vtanh.pop %v2817
  %v2876 = vmul.f32 %v2859, %v2572
  %v2877 = vmul.f32 %v2844, %v2875
  %v2878 = vadd.f32 %v2876, %v2877
  %v2879 = vtanh.pop %v2878
  %v2880 = vmul.f32 %v2874, %v2879
  %v2881 = vpack.c.bf16 %v2880, %v2880
  %2882 = vst [vmem:[#allocation2] sm:$0xf] %v2881
  %v2883 = vld [vmem:[#allocation2] sm:$0xff]
  %v2885 = vunpack.c.l.b16 %v2883
  %v2886 = vunpack.c.h.b16 %v2883
  %v2887 = vpack.c.b16 %v2885, %v2885
  %v2888 = vpack.c.b16 %v2886, %v2886
  %2891 = vmatpush.bf16.msra.mxu0 %v649
  %2892 = vmatpush.bf16.msra.mxu0 %v645
  %2893 = vmatpush.bf16.msra.mxu0 %v641
  %2894 = vmatpush.bf16.msra.mxu0 %v637
  %2895 = vmatpush.bf16.msra.mxu0 %v633
  %2896 = vmatpush.bf16.msra.mxu0 %v629
  %2897 = vmatpush.bf16.msra.mxu0 %v625
  %2898 = vmatpush.bf16.msra.mxu0 %v621
  %2899 = vmatmul.bf16.gmra.mxu0 %v2887
  %v2900 = vpop.f32.mrf.mxu0
  %v2901 = vadd.f32 %v123, %v2900
  %v2902 = vpop.f32.mrf.mxu0
  %2903 = vdwg.mxu0
  %2904 = vmatpush.bf16.msra.mxu0 %v681
  %2905 = vmatpush.bf16.msra.mxu0 %v677
  %2906 = vmatpush.bf16.msra.mxu0 %v673
  %2907 = vmatpush.bf16.msra.mxu0 %v669
  %2908 = vmatpush.bf16.msra.mxu0 %v665
  %2909 = vmatpush.bf16.msra.mxu0 %v661
  %2910 = vmatpush.bf16.msra.mxu0 %v657
  %2911 = vmatpush.bf16.msra.mxu0 %v653
  %2912 = vmatmul.bf16.gmra.mxu0 %v2888
  %v2913 = vpop.f32.mrf.mxu0
  %v2914 = vadd.f32 %v2901, %v2913
  %v2915 = vpop.f32.mrf.mxu0
  %2916 = vdwg.mxu0
  %2917 = vmatpush.bf16.msra.mxu0 %v650
  %2918 = vmatpush.bf16.msra.mxu0 %v646
  %2919 = vmatpush.bf16.msra.mxu0 %v642
  %2920 = vmatpush.bf16.msra.mxu0 %v638
  %2921 = vmatpush.bf16.msra.mxu0 %v634
  %2922 = vmatpush.bf16.msra.mxu0 %v630
  %2923 = vmatpush.bf16.msra.mxu0 %v626
  %2924 = vmatpush.bf16.msra.mxu0 %v622
  %2925 = vmatmul.bf16.gmra.mxu0 %v2887
  %v2926 = vpop.f32.mrf.mxu0
  %v2927 = vadd.f32 %v124, %v2926
  %v2928 = vpop.f32.mrf.mxu0
  %2929 = vdwg.mxu0
  %2930 = vmatpush.bf16.msra.mxu0 %v682
  %2931 = vmatpush.bf16.msra.mxu0 %v678
  %2932 = vmatpush.bf16.msra.mxu0 %v674
  %2933 = vmatpush.bf16.msra.mxu0 %v670
  %2934 = vmatpush.bf16.msra.mxu0 %v666
  %2935 = vmatpush.bf16.msra.mxu0 %v662
  %2936 = vmatpush.bf16.msra.mxu0 %v658
  %2937 = vmatpush.bf16.msra.mxu0 %v654
  %2938 = vmatmul.bf16.gmra.mxu0 %v2888
  %v2939 = vpop.f32.mrf.mxu0
  %v2940 = vadd.f32 %v2927, %v2939
  %v2941 = vpop.f32.mrf.mxu0
  %2942 = vdwg.mxu0
  %2943 = vmatpush.bf16.msra.mxu0 %v651
  %2944 = vmatpush.bf16.msra.mxu0 %v647
  %2945 = vmatpush.bf16.msra.mxu0 %v643
  %2946 = vmatpush.bf16.msra.mxu0 %v639
  %2947 = vmatpush.bf16.msra.mxu0 %v635
  %2948 = vmatpush.bf16.msra.mxu0 %v631
  %2949 = vmatpush.bf16.msra.mxu0 %v627
  %2950 = vmatpush.bf16.msra.mxu0 %v623
  %2951 = vmatmul.bf16.gmra.mxu0 %v2887
  %v2952 = vpop.f32.mrf.mxu0
  %v2953 = vadd.f32 %v125, %v2952
  %v2954 = vpop.f32.mrf.mxu0
  %2955 = vdwg.mxu0
  %2956 = vmatpush.bf16.msra.mxu0 %v683
  %2957 = vmatpush.bf16.msra.mxu0 %v679
  %2958 = vmatpush.bf16.msra.mxu0 %v675
  %2959 = vmatpush.bf16.msra.mxu0 %v671
  %2960 = vmatpush.bf16.msra.mxu0 %v667
  %2961 = vmatpush.bf16.msra.mxu0 %v663
  %2962 = vmatpush.bf16.msra.mxu0 %v659
  %2963 = vmatpush.bf16.msra.mxu0 %v655
  %2964 = vmatmul.bf16.gmra.mxu0 %v2888
  %v2965 = vpop.f32.mrf.mxu0
  %v2966 = vadd.f32 %v2953, %v2965
  %v2967 = vpop.f32.mrf.mxu0
  %2968 = vdwg.mxu0
  %2969 = vmatpush.bf16.msra.mxu0 %v652
  %2970 = vmatpush.bf16.msra.mxu0 %v648
  %2971 = vmatpush.bf16.msra.mxu0 %v644
  %2972 = vmatpush.bf16.msra.mxu0 %v640
  %2973 = vmatpush.bf16.msra.mxu0 %v636
  %2974 = vmatpush.bf16.msra.mxu0 %v632
  %2975 = vmatpush.bf16.msra.mxu0 %v628
  %2976 = vmatpush.bf16.msra.mxu0 %v624
  %2977 = vmatmul.bf16.gmra.mxu0 %v2887
  %v2978 = vpop.f32.mrf.mxu0
  %v2979 = vadd.f32 %v126, %v2978
  %v2980 = vpop.f32.mrf.mxu0
  %2981 = vdwg.mxu0
  %2982 = vmatpush.bf16.msra.mxu0 %v684
  %2983 = vmatpush.bf16.msra.mxu0 %v680
  %2984 = vmatpush.bf16.msra.mxu0 %v676
  %2985 = vmatpush.bf16.msra.mxu0 %v672
  %2986 = vmatpush.bf16.msra.mxu0 %v668
  %2987 = vmatpush.bf16.msra.mxu0 %v664
  %2988 = vmatpush.bf16.msra.mxu0 %v660
  %2989 = vmatpush.bf16.msra.mxu0 %v656
  %2990 = vmatmul.bf16.gmra.mxu0 %v2888
  %v2991 = vpop.f32.mrf.mxu0
  %v2992 = vadd.f32 %v2979, %v2991
  %v2993 = vpop.f32.mrf.mxu0
  %2994 = vdwg.mxu0
  %v2995 = vxor.u32 %v2914, 2147483648
  %v2996 = vxor.u32 %v2940, 2147483648
  %v2997 = vxor.u32 %v2966, 2147483648
  %v2998 = vmul.f32 %v2995, 1.442695
  %v2999 = vpow.pop %v2998
  %v3000 = vmul.f32 %v2996, 1.442695
  %v3001 = vpow.pop %v3000
  %v3002 = vmul.f32 %v2997, 1.442695
  %v3003 = vpow.pop %v3002
  %v3004 = vadd.f32 %v2999, 1.0
  %v3005 = vadd.f32 %v3001, 1.0
  %v3006 = vadd.f32 %v3003, 1.0
  %v3007 = vrcp.pop %v3004
  %v3008 = vmul.f32 %v3004, %v3007
  %v3009 = vsub.f32 1.0, %v3008
  %v3010 = vmul.f32 %v3007, %v3009
  %v3011 = vadd.f32 %v3007, %v3010
  %vm3012 = vweird.f32 %v3004
  %vm3013 = vweird.f32 %v3007
  %vm3014 = vmor %vm3012, %vm3013
  %v3015 = vsel %vm3014, %v3007, %v3011
  %v3016 = vand.u32 2147483647, %v3004
  %vm3017 = vcmp.eq.f32.partialorder %v3016, 8.507059e+37
  %v3018 = vand.u32 %v3004, 2147483648
  %v3019 = vor.u32 1.1754944e-38, %v3018
  %v3020 = vsel %vm3017, %v3019, %v3015
  %v3021 = vmul.f32 1.0, %v3020
  %v3022 = vrcp.pop %v3005
  %v3023 = vmul.f32 %v3005, %v3022
  %v3024 = vsub.f32 1.0, %v3023
  %v3025 = vmul.f32 %v3022, %v3024
  %v3026 = vadd.f32 %v3022, %v3025
  %vm3027 = vweird.f32 %v3005
  %vm3028 = vweird.f32 %v3022
  %vm3029 = vmor %vm3027, %vm3028
  %v3030 = vsel %vm3029, %v3022, %v3026
  %v3031 = vand.u32 2147483647, %v3005
  %vm3032 = vcmp.eq.f32.partialorder %v3031, 8.507059e+37
  %v3033 = vand.u32 %v3005, 2147483648
  %v3034 = vor.u32 1.1754944e-38, %v3033
  %v3035 = vsel %vm3032, %v3034, %v3030
  %v3036 = vmul.f32 1.0, %v3035
  %v3037 = vrcp.pop %v3006
  %v3038 = vmul.f32 %v3006, %v3037
  %v3039 = vsub.f32 1.0, %v3038
  %v3040 = vmul.f32 %v3037, %v3039
  %v3041 = vadd.f32 %v3037, %v3040
  %vm3042 = vweird.f32 %v3006
  %vm3043 = vweird.f32 %v3037
  %vm3044 = vmor %vm3042, %vm3043
  %v3045 = vsel %vm3044, %v3037, %v3041
  %v3046 = vand.u32 2147483647, %v3006
  %vm3047 = vcmp.eq.f32.partialorder %v3046, 8.507059e+37
  %v3048 = vand.u32 %v3006, 2147483648
  %v3049 = vor.u32 1.1754944e-38, %v3048
  %v3050 = vsel %vm3047, %v3049, %v3045
  %v3051 = vmul.f32 1.0, %v3050
  %v3052 = vtanh.pop %v2992
  %v3053 = vmul.f32 %v3036, %v2749
  %v3054 = vmul.f32 %v3021, %v3052
  %v3055 = vadd.f32 %v3053, %v3054
  %v3056 = vtanh.pop %v3055
  %v3057 = vmul.f32 %v3051, %v3056
  %v3058 = vpack.c.bf16 %v3057, %v3057
  %3059 = vst [vmem:[#allocation2 + $0x4] sm:$0xf] %v3058
  %3060 = vst [vmem:[#allocation3] sm:$0xff] %v2878
  %3061 = vst [vmem:[#allocation4] sm:$0xff] %v3055
  // Predicated region
  $region22: #{rnn_forward.1} parent=0 // pred_check
    %p3062 = pneg %p18
  $region23: #{rnn_forward.1} parent=0 // pred_check_branch
    %3064 = sbr.rel (%p3062) target = $region25
  $region24: #{rnn_forward.1} parent=0 // pred_region
    %v3065 = vld [vmem:[#allocation2 + $0x4] sm:$0xf]
    %v3066 = vunpack.c.l.bf16 %v3065
    %3067 = vst [vmem:[%s4] sm:$0xff] %v3066
  $region25: #{rnn_forward.1} parent=0 // pred_fallthru
    _
  // Predicated region
  $region26: #{rnn_forward.1} parent=0 // pred_check
    _
  $region27: #{rnn_forward.1} parent=0 // pred_check_branch
    %3069 = sbr.rel (0) target = $region29
  $region28: #{rnn_forward.1} parent=0 // pred_region
    _
  $region29: #{rnn_forward.1} parent=0 // pred_fallthru
    _
  // Predicated region
  $region30: #{rnn_forward.1} parent=0 // pred_check
    _
  $region31: #{rnn_forward.1} parent=0 // pred_check_branch
    %3071 = sbr.rel (0) target = $region33
  $region32: #{rnn_forward.1} parent=0 // pred_region
    _
  $region33: #{rnn_forward.1} parent=0 // pred_fallthru
    _

</llo_original>
